<compile_context>
chip_gen: v6e
topology: v6e:2x2x1
jax: 0.10.0
libtpu: 0.0.40
codegen_flags: <defaults>
</compile_context>

<pallas_src>
import math
import functools

import jax
import jax.numpy as jnp
from jax.experimental import pallas as pl
from jax.experimental.pallas import tpu as pltpu

FUTURE_LENGTH = 8

# Ordered weight-argument names passed to the fused kernel (after ctx, x_flat).
PARAM_ORDER = (
    "pe", "ctxw", "ctxb",
    "c1w", "c1b",
    "mw1", "mb1", "mw2", "mb2",
    "inw", "inb", "ow", "ob", "ln1w", "ln1b",
    "fw1", "fb1", "fw2", "fb2", "ln2w", "ln2b",
    "c3w", "c3b", "c4w", "c4b", "c5w", "c5b",
)


def _ceil_to(x, m):
    return ((x + m - 1) // m) * m


# ----------------------------------------------------------------------------
# Single fused kernel (one grid step == one independent sample)
# ----------------------------------------------------------------------------

def fused_forward_kernel(
        ctx_ref, xf_ref,
        pe_ref, ctxw_ref, ctxb_ref,
        c1w_ref, c1b_ref,
        mw1_ref, mb1_ref, mw2_ref, mb2_ref,
        inw_ref, inb_ref, ow_ref, ob_ref, ln1w_ref, ln1b_ref,
        fw1_ref, fb1_ref, fw2_ref, fb2_ref, ln2w_ref, ln2b_ref,
        c3w_ref, c3b_ref, c4w_ref, c4b_ref, c5w_ref, c5b_ref,
        out_ref, *, nhead, tf_layers, gate_half, cs_slots):
    """Fused forward.  All activations are 2-D (B, width), f32, and stay in VMEM/vregs.

    ConcatSquashLinear stages use block-diagonalized (over time) main weights and
    lane-tiled gate/hyper-bias weights; every gate/hyper projection for every stage is
    produced by ONE ctx matmul (columns packed [gates | hypers], per-stage 128-aligned).
    """
    f32, bf16 = jnp.float32, jnp.bfloat16

    def bdot(a, w):                       # MXU bf16 matmul, f32 accumulate
        return jnp.dot(a.astype(bf16), w, preferred_element_type=f32)

    def layer_norm(x, w, b):              # f32 elementwise (v5e has no bf16 VPU/EUP)
        mu = jnp.mean(x, axis=-1, keepdims=True)
        xc = x - mu
        var = jnp.mean(xc * xc, axis=-1, keepdims=True)
        return xc * jax.lax.rsqrt(var + 1e-5) * w + b

    ctx = ctx_ref[...]                                    # (B, Pctx) f32, zero-padded cols

    # --- fused ctx projection: every gate / hyper-bias at once, one sigmoid --------
    ctx_all = bdot(ctx, ctxw_ref[...]) + ctxb_ref[...]    # (B, 2*gate_half)
    gates = jax.nn.sigmoid(ctx_all[:, :gate_half])
    hypers = ctx_all[:, gate_half:]

    def concat_squash(x, w, b, slot):
        off, width = slot
        main = bdot(x, w) + b
        return main * gates[:, off:off + width] + hypers[:, off:off + width]

    # --- concat1 (block-diag over T) + positional encoding (time-flattened row) ----
    h = concat_squash(xf_ref[...], c1w_ref[...], c1b_ref[...], cs_slots[0])
    h = h + pe_ref[...]                                   # (B, E)

    # --- mlp1 -----------------------------------------------------------------------
    # TODO(synk): MLP definition is not shown in the reference source; assumed
    # Linear(E, E) -> ReLU -> Linear(E, E) (dropout identity at eval).
    h = jnp.maximum(bdot(h, mw1_ref[...]) + mb1_ref[...], 0.0)
    h = bdot(h, mw2_ref[...]) + mb2_ref[...]

    # --- transformer encoder (post-norm, ReLU FFN, dropout identity) -----------------
    # PyTorch input is (seq=B, batch=1, E) since batch_first=False: attention runs
    # over the B agent tokens.  Q scale 1/sqrt(dh) folded into in_proj at prep time.
    E = h.shape[-1]
    dh = E // nhead
    for l in range(tf_layers):                            # static unroll
        qkv = bdot(h, inw_ref[l]) + inb_ref[l]            # (B, 3E)
        q, k, v = qkv[:, :E], qkv[:, E:2 * E], qkv[:, 2 * E:]
        heads = []
        for hd in range(nhead):                           # heads independent; no serial acc
            lo, hi = hd * dh, (hd + 1) * dh
            s = jax.lax.dot_general(q[:, lo:hi].astype(bf16), k[:, lo:hi].astype(bf16),
                                    (((1,), (1,)), ((), ())),
                                    preferred_element_type=f32)      # (B, B)
            m = jnp.max(s, axis=-1, keepdims=True)
            p = jnp.exp(s - m)
            inv = pl.reciprocal(jnp.sum(p, axis=-1, keepdims=True), approx=True)
            heads.append(jnp.dot((p * inv).astype(bf16), v[:, lo:hi].astype(bf16),
                                 preferred_element_type=f32))        # (B, dh)
        cat = jnp.concatenate(heads, axis=-1)             # (B, E): single K=E out-proj dot
        attn = bdot(cat, ow_ref[l]) + ob_ref[l]
        x1 = layer_norm(h + attn, ln1w_ref[l], ln1b_ref[l])
        ff = jnp.maximum(bdot(x1, fw1_ref[l]) + fb1_ref[l], 0.0)
        ff = bdot(ff, fw2_ref[l]) + fb2_ref[l]
        h = layer_norm(x1 + ff, ln2w_ref[l], ln2b_ref[l])

    # --- tail: concat3 -> concat4 -> linear (all block-diag over T) ------------------
    h = concat_squash(h, c3w_ref[...], c3b_ref[...], cs_slots[1])    # (B, T*C)
    h = concat_squash(h, c4w_ref[...], c4b_ref[...], cs_slots[2])    # (B, T*C/2)
    h = concat_squash(h, c5w_ref[...], c5b_ref[...], cs_slots[3])    # (B, T*2)
    out_ref[...] = h


# ----------------------------------------------------------------------------
# Parameter construction (deterministic, synthetic) — PyTorch-equivalent layout
# NOTE: all weights are stored as (in, out) for x @ W.  When loading a real
# checkpoint, nn.Linear / in_proj_weight / out_proj.weight must be transposed.
# ----------------------------------------------------------------------------

def init_concat_squash(key, din, dout, dctx, scale=0.1):
    ks = jax.random.split(key, 5)
    return dict(
        lw=jax.random.normal(ks[0], (din, dout), jnp.float32) * scale,
        lb=jax.random.normal(ks[1], (dout,), jnp.float32) * scale,
        gw=jax.random.normal(ks[2], (dctx, dout), jnp.float32) * scale,
        gb=jax.random.normal(ks[3], (dout,), jnp.float32) * scale,
        bw=jax.random.normal(ks[4], (dctx, dout), jnp.float32) * scale,  # hyper_bias: no bias term
    )


def init_tf_layer(key, e, f, scale=0.05):
    ks = jax.random.split(key, 8)
    return dict(
        inw=jax.random.normal(ks[0], (e, 3 * e), jnp.float32) * scale,
        inb=jax.random.normal(ks[1], (3 * e,), jnp.float32) * scale,
        ow=jax.random.normal(ks[2], (e, e), jnp.float32) * scale,
        ob=jax.random.normal(ks[3], (e,), jnp.float32) * scale,
        ln1w=jnp.ones((e,), jnp.float32), ln1b=jnp.zeros((e,), jnp.float32),
        fw1=jax.random.normal(ks[4], (e, f), jnp.float32) * scale,
        fb1=jax.random.normal(ks[5], (f,), jnp.float32) * scale,
        fw2=jax.random.normal(ks[6], (f, e), jnp.float32) * scale,
        fb2=jax.random.normal(ks[7], (e,), jnp.float32) * scale,
        ln2w=jnp.ones((e,), jnp.float32), ln2b=jnp.zeros((e,), jnp.float32),
    )


def make_positional_encoding(d_model, max_len=24):
    position = jnp.arange(max_len, dtype=jnp.float32)[:, None]
    div_term = jnp.exp(jnp.arange(0, d_model, 2, dtype=jnp.float32) *
                       (-math.log(10000.0) / d_model))
    ang = position * div_term
    pe = jnp.zeros((max_len, d_model), jnp.float32)
    pe = pe.at[:, 0::2].set(jnp.sin(ang))
    pe = pe.at[:, 1::2].set(jnp.cos(ang))
    return pe   # applied over the time axis (seq-first input), broadcast over batch


def init_model(key, point_dim, context_dim, tf_layer):
    assert point_dim == 2
    d2 = 2 * context_dim
    dctx = context_dim + 3
    e = d2 * FUTURE_LENGTH           # transformer d_model
    f = 4 * context_dim              # dim_feedforward
    ks = jax.random.split(key, 6 + tf_layer)
    return dict(
        pe=make_positional_encoding(d2, max_len=24),
        concat1=init_concat_squash(ks[0], 2, d2, dctx),
        mlp1=dict(
            w1=jax.random.normal(ks[1], (e, e), jnp.float32) * 0.05,
            b1=jax.random.normal(ks[2], (e,), jnp.float32) * 0.05,
            w2=jax.random.normal(ks[3], (e, e), jnp.float32) * 0.05,
            b2=jax.random.normal(ks[4], (e,), jnp.float32) * 0.05,
        ),
        tf_layers=[init_tf_layer(ks[6 + i], e, f) for i in range(tf_layer)],
        concat3=init_concat_squash(ks[5], d2, context_dim, dctx),
        concat4=init_concat_squash(jax.random.fold_in(key, 101),
                                   context_dim, context_dim // 2, dctx),
        linear=init_concat_squash(jax.random.fold_in(key, 202),
                                  context_dim // 2, 2, dctx),
    )


# ----------------------------------------------------------------------------
# One-time parameter prep: block-diagonalize / lane-tile the per-time-step
# ConcatSquash weights, fuse all gate/hyper ctx projections into one matrix,
# fold the query scale into in_proj, stack tf layers, cast matmul weights bf16.
# Pure parameter transformation — mathematically identical to the module.
# ----------------------------------------------------------------------------

def prepare_params(raw, *, nhead=4, T=FUTURE_LENGTH):
    f32, bf16 = jnp.float32, jnp.bfloat16
    d2 = raw["concat1"]["lw"].shape[1]            # 2 * context_dim
    E = d2 * T
    dctx = raw["concat1"]["gw"].shape[0]          # context_dim + 3
    Pctx = _ceil_to(dctx, 8)                      # pad ctx contraction to sublane multiple

    # ---- fused ctx projection: columns packed [gates | hypers], 128-aligned slots ----
    stages = ("c1", "c3", "c4", "c5")
    raw_cs = dict(c1=raw["concat1"], c3=raw["concat3"], c4=raw["concat4"], c5=raw["linear"])
    widths, offs, cur = {}, {}, 0
    for k in stages:
        widths[k] = raw_cs[k]["lw"].shape[1] * T  # gate/hyper tiled over time
        offs[k] = cur
        cur = _ceil_to(cur + widths[k], 128)
    gate_half = cur
    ctxw = jnp.zeros((Pctx, 2 * gate_half), f32)
    ctxb = jnp.zeros((1, 2 * gate_half), f32)
    for k in stages:
        cp, o, w = raw_cs[k], offs[k], widths[k]
        ctxw = ctxw.at[:dctx, o:o + w].set(jnp.tile(cp["gw"], (1, T)))
        ctxw = ctxw.at[:dctx, gate_half + o:gate_half + o + w].set(jnp.tile(cp["bw"], (1, T)))
        ctxb = ctxb.at[:, o:o + w].set(jnp.tile(cp["gb"], (T,))[None, :])

    def blockdiag(cp):      # kron(I_T, W) -> per-time linear in the flattened domain
        return jnp.kron(jnp.eye(T, dtype=f32), cp["lw"]).astype(bf16)

    def main_bias(cp):
        return jnp.tile(cp["lb"], (T,)).reshape(1, -1).astype(f32)

    dh = E // nhead
    qs = 1.0 / math.sqrt(dh)

    def prep_layer(lp):
        return dict(
            inw=lp["inw"].at[:, :E].multiply(qs).astype(bf16),   # fold 1/sqrt(dh) into Q
            inb=lp["inb"].at[:E].multiply(qs).reshape(1, -1).astype(f32),
            ow=lp["ow"].astype(bf16), ob=lp["ob"].reshape(1, -1).astype(f32),
            ln1w=lp["ln1w"].reshape(1, -1), ln1b=lp["ln1b"].reshape(1, -1),
            fw1=lp["fw1"].astype(bf16), fb1=lp["fb1"].reshape(1, -1),
            fw2=lp["fw2"].astype(bf16), fb2=lp["fb2"].reshape(1, -1),
            ln2w=lp["ln2w"].reshape(1, -1), ln2b=lp["ln2b"].reshape(1, -1),
        )

    per = [prep_layer(lp) for lp in raw["tf_layers"]]
    stacked = {k: jnp.stack([p[k] for p in per], axis=0) for k in per[0]}

    params = dict(
        pe=raw["pe"][:T, :].reshape(1, T * d2).astype(f32),
        ctxw=ctxw.astype(bf16), ctxb=ctxb,
        c1w=blockdiag(raw["concat1"]), c1b=main_bias(raw["concat1"]),
        mw1=raw["mlp1"]["w1"].astype(bf16), mb1=raw["mlp1"]["b1"].reshape(1, -1),
        mw2=raw["mlp1"]["w2"].astype(bf16), mb2=raw["mlp1"]["b2"].reshape(1, -1),
        c3w=blockdiag(raw["concat3"]), c3b=main_bias(raw["concat3"]),
        c4w=blockdiag(raw["concat4"]), c4b=main_bias(raw["concat4"]),
        c5w=blockdiag(raw["linear"]), c5b=main_bias(raw["linear"]),
    )
    params.update(stacked)

    meta = dict(
        nhead=nhead, tf_layers=len(per), gate_half=gate_half,
        cs_slots=tuple((offs[k], widths[k]) for k in stages),
        pctx=Pctx, dctx=dctx, E=E, d2=d2, T=T,
        ffn=raw["tf_layers"][0]["fw1"].shape[1],
    )
    return params, meta


# ----------------------------------------------------------------------------
# Forward: one pallas_call with a leading "parallel" samples grid axis.
# Weights use constant index_maps -> DMA'd once, VMEM-resident for all samples.
# ----------------------------------------------------------------------------

def forward(params, x, context, beta, *, meta):
    squeeze = (x.ndim == 3)
    if squeeze:                                           # module-equivalent single call
        x, context, beta = x[None], context[None], beta[None]
    S, B, T, pdim = x.shape
    Pctx, dctx = meta["pctx"], meta["dctx"]

    beta2 = beta.reshape(S, B, 1).astype(jnp.float32)
    ctx_emb = jnp.concatenate(
        [beta2, jnp.sin(beta2), jnp.cos(beta2),
         context.reshape(S, B, -1).astype(jnp.float32)], axis=-1)     # (S, B, dctx)
    ctx_emb = jnp.pad(ctx_emb, ((0, 0), (0, 0), (0, Pctx - dctx)))    # sublane-aligned K
    x_flat = x.reshape(S, B, T * pdim).astype(jnp.float32)

    args = [params[k] for k in PARAM_ORDER]

    def wspec(a):   # full-array block, constant index -> resident across the grid
        return pl.BlockSpec(a.shape, lambda s, _nd=a.ndim: (0,) * _nd)

    def act_spec(last):
        return pl.BlockSpec((None, B, last), lambda s: (s, 0, 0))

    # Advisory cost estimate so XLA overlaps this tiny call inside sampling loops.
    E, F_, L, nh = meta["E"], meta["ffn"], meta["tf_layers"], meta["nhead"]
    gate2 = 2 * meta["gate_half"]
    flops = 2 * S * B * (
        Pctx * gate2 + (T * pdim) * E + 2 * E * E
        + L * (3 * E * E + E * E + 2 * E * F_)
        + L * nh * 2 * B * (E // nh)
        + E * (E // 2) + (E // 2) * (E // 4) + (E // 4) * (T * pdim))
    weight_bytes = sum(int(a.size) * a.dtype.itemsize for a in args)
    act_bytes = int(ctx_emb.size + x_flat.size + S * B * T * pdim) * 4
    transc = S * B * (meta["gate_half"] + L * nh * B + 8 * L + 4)

    flat_out = pl.pallas_call(
        functools.partial(
            fused_forward_kernel, nhead=nh, tf_layers=L,
            gate_half=meta["gate_half"], cs_slots=meta["cs_slots"]),
        grid=(S,),
        out_shape=jax.ShapeDtypeStruct((S, B, T * pdim), jnp.float32),
        in_specs=[act_spec(Pctx), act_spec(T * pdim)] + [wspec(a) for a in args],
        out_specs=act_spec(T * pdim),
        compiler_params=pltpu.CompilerParams(dimension_semantics=("parallel",)),
        cost_estimate=pl.CostEstimate(flops=int(flops), transcendentals=int(transc),
                                      bytes_accessed=int(weight_bytes + act_bytes)),
    )(ctx_emb, x_flat, *args)

    out = flat_out.reshape(S, B, T, pdim)
    return out[0] if squeeze else out


# ----------------------------------------------------------------------------

if __name__ == "__main__":
    point_dim = 2
    context_dim = 16          # -> d_model = 2*16*8 = 256, ff = 64, ctx dim = 19 (pad 24)
    tf_layer = 2
    batch = 8                 # number of agents (= transformer sequence length)
    num_samples = 4           # independent diffusion samples -> "parallel" grid axis

    key = jax.random.PRNGKey(0)
    kp, kx, kc, kb = jax.random.split(key, 4)

    raw = init_model(kp, point_dim, context_dim, tf_layer)
    params, meta = prepare_params(raw, nhead=4)
    fwd = jax.jit(functools.partial(forward, meta=meta))

    # Module-equivalent single forward: x (B, T, 2), context (B, C), beta (B,)
    x = jax.random.normal(kx, (batch, FUTURE_LENGTH, point_dim), jnp.float32)
    context = jax.random.normal(kc, (batch, context_dim), jnp.float32)
    beta = jax.random.uniform(kb, (batch,), jnp.float32, 0.01, 0.99)
    out = jax.block_until_ready(fwd(params, x, context, beta))
    assert out.shape == (batch, FUTURE_LENGTH, point_dim) and out.dtype == jnp.float32

    # Batched independent samples: weights stay VMEM-resident across the grid.
    xs = jax.random.normal(kx, (num_samples, batch, FUTURE_LENGTH, point_dim), jnp.float32)
    cs = jax.random.normal(kc, (num_samples, batch, context_dim), jnp.float32)
    bs = jax.random.uniform(kb, (num_samples, batch), jnp.float32, 0.01, 0.99)
    outs = jax.block_until_ready(fwd(params, xs, cs, bs))
    assert outs.shape == (num_samples, batch, FUTURE_LENGTH, point_dim)

    print("KERNEL_OK")
</pallas_src>

<mosaic_0001>
module attributes {stable_mosaic.version = 11 : i64} {
  func.func @fused_forward_kernel(%arg0: i32, %arg1: memref<1x8x24xf32, #tpu.memory_space<vmem>>, %arg2: memref<1x8x16xf32, #tpu.memory_space<vmem>>, %arg3: memref<1x256xf32, #tpu.memory_space<vmem>>, %arg4: memref<24x1280xbf16, #tpu.memory_space<vmem>>, %arg5: memref<1x1280xf32, #tpu.memory_space<vmem>>, %arg6: memref<16x256xbf16, #tpu.memory_space<vmem>>, %arg7: memref<1x256xf32, #tpu.memory_space<vmem>>, %arg8: memref<256x256xbf16, #tpu.memory_space<vmem>>, %arg9: memref<1x256xf32, #tpu.memory_space<vmem>>, %arg10: memref<256x256xbf16, #tpu.memory_space<vmem>>, %arg11: memref<1x256xf32, #tpu.memory_space<vmem>>, %arg12: memref<2x256x768xbf16, #tpu.memory_space<vmem>>, %arg13: memref<2x1x768xf32, #tpu.memory_space<vmem>>, %arg14: memref<2x256x256xbf16, #tpu.memory_space<vmem>>, %arg15: memref<2x1x256xf32, #tpu.memory_space<vmem>>, %arg16: memref<2x1x256xf32, #tpu.memory_space<vmem>>, %arg17: memref<2x1x256xf32, #tpu.memory_space<vmem>>, %arg18: memref<2x256x64xbf16, #tpu.memory_space<vmem>>, %arg19: memref<2x1x64xf32, #tpu.memory_space<vmem>>, %arg20: memref<2x64x256xbf16, #tpu.memory_space<vmem>>, %arg21: memref<2x1x256xf32, #tpu.memory_space<vmem>>, %arg22: memref<2x1x256xf32, #tpu.memory_space<vmem>>, %arg23: memref<2x1x256xf32, #tpu.memory_space<vmem>>, %arg24: memref<256x128xbf16, #tpu.memory_space<vmem>>, %arg25: memref<1x128xf32, #tpu.memory_space<vmem>>, %arg26: memref<128x64xbf16, #tpu.memory_space<vmem>>, %arg27: memref<1x64xf32, #tpu.memory_space<vmem>>, %arg28: memref<64x16xbf16, #tpu.memory_space<vmem>>, %arg29: memref<1x16xf32, #tpu.memory_space<vmem>>, %arg30: memref<1x8x16xf32, #tpu.memory_space<vmem>>) attributes {dimension_semantics = [#tpu.dimension_semantics<parallel>], iteration_bounds = array<i64: 1>, scalar_prefetch = 0 : i64, scratch_operands = 0 : i64, tpu.core_type = #tpu.core_type<tc>, window_params = [{transform_indices = @transform_0, window_bounds = array<i64: 1, 8, 24>}, {transform_indices = @transform_1, window_bounds = array<i64: 1, 8, 16>}, {pipeline_mode = #tpu.pipeline_mode<synchronous>, transform_indices = @transform_2, window_bounds = array<i64: 1, 256>}, {pipeline_mode = #tpu.pipeline_mode<synchronous>, transform_indices = @transform_3, window_bounds = array<i64: 24, 1280>}, {pipeline_mode = #tpu.pipeline_mode<synchronous>, transform_indices = @transform_4, window_bounds = array<i64: 1, 1280>}, {pipeline_mode = #tpu.pipeline_mode<synchronous>, transform_indices = @transform_5, window_bounds = array<i64: 16, 256>}, {pipeline_mode = #tpu.pipeline_mode<synchronous>, transform_indices = @transform_6, window_bounds = array<i64: 1, 256>}, {pipeline_mode = #tpu.pipeline_mode<synchronous>, transform_indices = @transform_7, window_bounds = array<i64: 256, 256>}, {pipeline_mode = #tpu.pipeline_mode<synchronous>, transform_indices = @transform_8, window_bounds = array<i64: 1, 256>}, {pipeline_mode = #tpu.pipeline_mode<synchronous>, transform_indices = @transform_9, window_bounds = array<i64: 256, 256>}, {pipeline_mode = #tpu.pipeline_mode<synchronous>, transform_indices = @transform_10, window_bounds = array<i64: 1, 256>}, {pipeline_mode = #tpu.pipeline_mode<synchronous>, transform_indices = @transform_11, window_bounds = array<i64: 2, 256, 768>}, {pipeline_mode = #tpu.pipeline_mode<synchronous>, transform_indices = @transform_12, window_bounds = array<i64: 2, 1, 768>}, {pipeline_mode = #tpu.pipeline_mode<synchronous>, transform_indices = @transform_13, window_bounds = array<i64: 2, 256, 256>}, {pipeline_mode = #tpu.pipeline_mode<synchronous>, transform_indices = @transform_14, window_bounds = array<i64: 2, 1, 256>}, {pipeline_mode = #tpu.pipeline_mode<synchronous>, transform_indices = @transform_15, window_bounds = array<i64: 2, 1, 256>}, {pipeline_mode = #tpu.pipeline_mode<synchronous>, transform_indices = @transform_16, window_bounds = array<i64: 2, 1, 256>}, {pipeline_mode = #tpu.pipeline_mode<synchronous>, transform_indices = @transform_17, window_bounds = array<i64: 2, 256, 64>}, {pipeline_mode = #tpu.pipeline_mode<synchronous>, transform_indices = @transform_18, window_bounds = array<i64: 2, 1, 64>}, {pipeline_mode = #tpu.pipeline_mode<synchronous>, transform_indices = @transform_19, window_bounds = array<i64: 2, 64, 256>}, {pipeline_mode = #tpu.pipeline_mode<synchronous>, transform_indices = @transform_20, window_bounds = array<i64: 2, 1, 256>}, {pipeline_mode = #tpu.pipeline_mode<synchronous>, transform_indices = @transform_21, window_bounds = array<i64: 2, 1, 256>}, {pipeline_mode = #tpu.pipeline_mode<synchronous>, transform_indices = @transform_22, window_bounds = array<i64: 2, 1, 256>}, {pipeline_mode = #tpu.pipeline_mode<synchronous>, transform_indices = @transform_23, window_bounds = array<i64: 256, 128>}, {pipeline_mode = #tpu.pipeline_mode<synchronous>, transform_indices = @transform_24, window_bounds = array<i64: 1, 128>}, {pipeline_mode = #tpu.pipeline_mode<synchronous>, transform_indices = @transform_25, window_bounds = array<i64: 128, 64>}, {pipeline_mode = #tpu.pipeline_mode<synchronous>, transform_indices = @transform_26, window_bounds = array<i64: 1, 64>}, {pipeline_mode = #tpu.pipeline_mode<synchronous>, transform_indices = @transform_27, window_bounds = array<i64: 64, 16>}, {pipeline_mode = #tpu.pipeline_mode<synchronous>, transform_indices = @transform_28, window_bounds = array<i64: 1, 16>}, {transform_indices = @transform_29, window_bounds = array<i64: 1, 8, 16>}]} {
    %c0 = arith.constant 0 : index
    %c0_0 = arith.constant 0 : index
    %c0_1 = arith.constant 0 : index
    %0 = vector.load %arg1[%c0, %c0_0, %c0_1] : memref<1x8x24xf32, #tpu.memory_space<vmem>>, vector<1x8x24xf32>
    %1 = vector.shape_cast %0 : vector<1x8x24xf32> to vector<8x24xf32>
    %c0_2 = arith.constant 0 : index
    %c0_3 = arith.constant 0 : index
    %2 = vector.load %arg4[%c0_2, %c0_3] : memref<24x1280xbf16, #tpu.memory_space<vmem>>, vector<24x1280xbf16>
    %3 = arith.truncf %1 : vector<8x24xf32> to vector<8x24xbf16>
    %cst = arith.constant dense<0.000000e+00> : vector<8x1280xf32>
    %4 = tpu.matmul %3, %2, %cst {dimension_numbers = #tpu.dot_dimension_numbers<[1], [0], [0], [1], [0, 0, 1, 1], [], []>} : vector<8x24xbf16>, vector<24x1280xbf16>, vector<8x1280xf32> -> vector<8x1280xf32>
    %c0_4 = arith.constant 0 : index
    %c0_5 = arith.constant 0 : index
    %5 = vector.load %arg5[%c0_4, %c0_5] : memref<1x1280xf32, #tpu.memory_space<vmem>>, vector<1x1280xf32>
    %6 = vector.broadcast %5 : vector<1x1280xf32> to vector<8x1280xf32>
    %7 = arith.addf %4, %6 : vector<8x1280xf32>
    %8 = vector.extract_strided_slice %7 {offsets = [0, 0], sizes = [8, 640], strides = [1, 1]} : vector<8x1280xf32> to vector<8x640xf32>
    %9 = arith.negf %8 : vector<8x640xf32>
    %10 = math.exp %9 : vector<8x640xf32>
    %cst_6 = arith.constant 1.000000e+00 : f32
    %11 = vector.broadcast %cst_6 : f32 to vector<8x640xf32>
    %12 = arith.addf %11, %10 : vector<8x640xf32>
    %13 = arith.divf %11, %12 : vector<8x640xf32>
    %14 = vector.extract_strided_slice %7 {offsets = [0, 640], sizes = [8, 640], strides = [1, 1]} : vector<8x1280xf32> to vector<8x640xf32>
    %c0_7 = arith.constant 0 : index
    %c0_8 = arith.constant 0 : index
    %c0_9 = arith.constant 0 : index
    %15 = vector.load %arg2[%c0_7, %c0_8, %c0_9] : memref<1x8x16xf32, #tpu.memory_space<vmem>>, vector<1x8x16xf32>
    %16 = vector.shape_cast %15 : vector<1x8x16xf32> to vector<8x16xf32>
    %c0_10 = arith.constant 0 : index
    %c0_11 = arith.constant 0 : index
    %17 = vector.load %arg6[%c0_10, %c0_11] : memref<16x256xbf16, #tpu.memory_space<vmem>>, vector<16x256xbf16>
    %c0_12 = arith.constant 0 : index
    %c0_13 = arith.constant 0 : index
    %18 = vector.load %arg7[%c0_12, %c0_13] : memref<1x256xf32, #tpu.memory_space<vmem>>, vector<1x256xf32>
    %19 = arith.truncf %16 : vector<8x16xf32> to vector<8x16xbf16>
    %cst_14 = arith.constant dense<0.000000e+00> : vector<8x256xf32>
    %20 = tpu.matmul %19, %17, %cst_14 {dimension_numbers = #tpu.dot_dimension_numbers<[1], [0], [0], [1], [0, 0, 1, 1], [], []>} : vector<8x16xbf16>, vector<16x256xbf16>, vector<8x256xf32> -> vector<8x256xf32>
    %21 = vector.broadcast %18 : vector<1x256xf32> to vector<8x256xf32>
    %22 = arith.addf %20, %21 : vector<8x256xf32>
    %23 = vector.extract_strided_slice %13 {offsets = [0, 0], sizes = [8, 256], strides = [1, 1]} : vector<8x640xf32> to vector<8x256xf32>
    %24 = arith.mulf %22, %23 : vector<8x256xf32>
    %25 = vector.extract_strided_slice %14 {offsets = [0, 0], sizes = [8, 256], strides = [1, 1]} : vector<8x640xf32> to vector<8x256xf32>
    %26 = arith.addf %24, %25 : vector<8x256xf32>
    %c0_15 = arith.constant 0 : index
    %c0_16 = arith.constant 0 : index
    %27 = vector.load %arg3[%c0_15, %c0_16] : memref<1x256xf32, #tpu.memory_space<vmem>>, vector<1x256xf32>
    %28 = vector.broadcast %27 : vector<1x256xf32> to vector<8x256xf32>
    %29 = arith.addf %26, %28 : vector<8x256xf32>
    %c0_17 = arith.constant 0 : index
    %c0_18 = arith.constant 0 : index
    %30 = vector.load %arg8[%c0_17, %c0_18] : memref<256x256xbf16, #tpu.memory_space<vmem>>, vector<256x256xbf16>
    %31 = arith.truncf %29 : vector<8x256xf32> to vector<8x256xbf16>
    %cst_19 = arith.constant dense<0.000000e+00> : vector<8x256xf32>
    %32 = tpu.matmul %31, %30, %cst_19 {dimension_numbers = #tpu.dot_dimension_numbers<[1], [0], [0], [1], [0, 0, 1, 1], [], []>} : vector<8x256xbf16>, vector<256x256xbf16>, vector<8x256xf32> -> vector<8x256xf32>
    %c0_20 = arith.constant 0 : index
    %c0_21 = arith.constant 0 : index
    %33 = vector.load %arg9[%c0_20, %c0_21] : memref<1x256xf32, #tpu.memory_space<vmem>>, vector<1x256xf32>
    %34 = vector.broadcast %33 : vector<1x256xf32> to vector<8x256xf32>
    %35 = arith.addf %32, %34 : vector<8x256xf32>
    %cst_22 = arith.constant 0.000000e+00 : f32
    %36 = vector.broadcast %cst_22 : f32 to vector<8x256xf32>
    %37 = arith.maximumf %35, %36 : vector<8x256xf32>
    %c0_23 = arith.constant 0 : index
    %c0_24 = arith.constant 0 : index
    %38 = vector.load %arg10[%c0_23, %c0_24] : memref<256x256xbf16, #tpu.memory_space<vmem>>, vector<256x256xbf16>
    %39 = arith.truncf %37 : vector<8x256xf32> to vector<8x256xbf16>
    %cst_25 = arith.constant dense<0.000000e+00> : vector<8x256xf32>
    %40 = tpu.matmul %39, %38, %cst_25 {dimension_numbers = #tpu.dot_dimension_numbers<[1], [0], [0], [1], [0, 0, 1, 1], [], []>} : vector<8x256xbf16>, vector<256x256xbf16>, vector<8x256xf32> -> vector<8x256xf32>
    %c0_26 = arith.constant 0 : index
    %c0_27 = arith.constant 0 : index
    %41 = vector.load %arg11[%c0_26, %c0_27] : memref<1x256xf32, #tpu.memory_space<vmem>>, vector<1x256xf32>
    %42 = vector.broadcast %41 : vector<1x256xf32> to vector<8x256xf32>
    %43 = arith.addf %40, %42 : vector<8x256xf32>
    %c0_28 = arith.constant 0 : index
    %c0_29 = arith.constant 0 : index
    %c0_30 = arith.constant 0 : index
    %44 = vector.load %arg12[%c0_28, %c0_29, %c0_30] : memref<2x256x768xbf16, #tpu.memory_space<vmem>>, vector<1x256x768xbf16>
    %45 = vector.shape_cast %44 : vector<1x256x768xbf16> to vector<256x768xbf16>
    %46 = arith.truncf %43 : vector<8x256xf32> to vector<8x256xbf16>
    %cst_31 = arith.constant dense<0.000000e+00> : vector<8x768xf32>
    %47 = tpu.matmul %46, %45, %cst_31 {dimension_numbers = #tpu.dot_dimension_numbers<[1], [0], [0], [1], [0, 0, 1, 1], [], []>} : vector<8x256xbf16>, vector<256x768xbf16>, vector<8x768xf32> -> vector<8x768xf32>
    %c0_32 = arith.constant 0 : index
    %c0_33 = arith.constant 0 : index
    %c0_34 = arith.constant 0 : index
    %48 = vector.load %arg13[%c0_32, %c0_33, %c0_34] : memref<2x1x768xf32, #tpu.memory_space<vmem>>, vector<1x1x768xf32>
    %49 = vector.shape_cast %48 : vector<1x1x768xf32> to vector<1x768xf32>
    %50 = vector.broadcast %49 : vector<1x768xf32> to vector<8x768xf32>
    %51 = arith.addf %47, %50 : vector<8x768xf32>
    %52 = vector.extract_strided_slice %51 {offsets = [0, 0], sizes = [8, 256], strides = [1, 1]} : vector<8x768xf32> to vector<8x256xf32>
    %53 = vector.extract_strided_slice %51 {offsets = [0, 256], sizes = [8, 256], strides = [1, 1]} : vector<8x768xf32> to vector<8x256xf32>
    %54 = vector.extract_strided_slice %51 {offsets = [0, 512], sizes = [8, 256], strides = [1, 1]} : vector<8x768xf32> to vector<8x256xf32>
    %55 = vector.extract_strided_slice %52 {offsets = [0, 0], sizes = [8, 64], strides = [1, 1]} : vector<8x256xf32> to vector<8x64xf32>
    %56 = arith.truncf %55 : vector<8x64xf32> to vector<8x64xbf16>
    %57 = vector.extract_strided_slice %53 {offsets = [0, 0], sizes = [8, 64], strides = [1, 1]} : vector<8x256xf32> to vector<8x64xf32>
    %58 = arith.truncf %57 : vector<8x64xf32> to vector<8x64xbf16>
    %cst_35 = arith.constant dense<0.000000e+00> : vector<8x8xf32>
    %59 = tpu.matmul %56, %58, %cst_35 {dimension_numbers = #tpu.dot_dimension_numbers<[1], [1], [0], [0], [0, 0, 1, 0], [], []>} : vector<8x64xbf16>, vector<8x64xbf16>, vector<8x8xf32> -> vector<8x8xf32>
    %cst_36 = arith.constant dense<0xFF800000> : vector<8xf32>
    %60 = vector.multi_reduction <maximumf>, %59, %cst_36 [1] : vector<8x8xf32> to vector<8xf32>
    %61 = vector.shape_cast %60 : vector<8xf32> to vector<8x1xf32>
    %62 = vector.broadcast %61 : vector<8x1xf32> to vector<8x8xf32>
    %63 = arith.subf %59, %62 : vector<8x8xf32>
    %64 = math.exp %63 : vector<8x8xf32>
    %cst_37 = arith.constant dense<0.000000e+00> : vector<8xf32>
    %65 = vector.multi_reduction <add>, %64, %cst_37 [1] : vector<8x8xf32> to vector<8xf32>
    %66 = vector.shape_cast %65 : vector<8xf32> to vector<8x1xf32>
    %67 = tpu.reciprocal %66 {approx = true} : vector<8x1xf32> -> vector<8x1xf32>
    %68 = vector.broadcast %67 : vector<8x1xf32> to vector<8x8xf32>
    %69 = arith.mulf %64, %68 : vector<8x8xf32>
    %70 = arith.truncf %69 : vector<8x8xf32> to vector<8x8xbf16>
    %71 = vector.extract_strided_slice %54 {offsets = [0, 0], sizes = [8, 64], strides = [1, 1]} : vector<8x256xf32> to vector<8x64xf32>
    %72 = arith.truncf %71 : vector<8x64xf32> to vector<8x64xbf16>
    %cst_38 = arith.constant dense<0.000000e+00> : vector<8x64xf32>
    %73 = tpu.matmul %70, %72, %cst_38 {dimension_numbers = #tpu.dot_dimension_numbers<[1], [0], [0], [1], [0, 0, 1, 1], [], []>} : vector<8x8xbf16>, vector<8x64xbf16>, vector<8x64xf32> -> vector<8x64xf32>
    %74 = vector.extract_strided_slice %52 {offsets = [0, 64], sizes = [8, 64], strides = [1, 1]} : vector<8x256xf32> to vector<8x64xf32>
    %75 = arith.truncf %74 : vector<8x64xf32> to vector<8x64xbf16>
    %76 = vector.extract_strided_slice %53 {offsets = [0, 64], sizes = [8, 64], strides = [1, 1]} : vector<8x256xf32> to vector<8x64xf32>
    %77 = arith.truncf %76 : vector<8x64xf32> to vector<8x64xbf16>
    %cst_39 = arith.constant dense<0.000000e+00> : vector<8x8xf32>
    %78 = tpu.matmul %75, %77, %cst_39 {dimension_numbers = #tpu.dot_dimension_numbers<[1], [1], [0], [0], [0, 0, 1, 0], [], []>} : vector<8x64xbf16>, vector<8x64xbf16>, vector<8x8xf32> -> vector<8x8xf32>
    %cst_40 = arith.constant dense<0xFF800000> : vector<8xf32>
    %79 = vector.multi_reduction <maximumf>, %78, %cst_40 [1] : vector<8x8xf32> to vector<8xf32>
    %80 = vector.shape_cast %79 : vector<8xf32> to vector<8x1xf32>
    %81 = vector.broadcast %80 : vector<8x1xf32> to vector<8x8xf32>
    %82 = arith.subf %78, %81 : vector<8x8xf32>
    %83 = math.exp %82 : vector<8x8xf32>
    %cst_41 = arith.constant dense<0.000000e+00> : vector<8xf32>
    %84 = vector.multi_reduction <add>, %83, %cst_41 [1] : vector<8x8xf32> to vector<8xf32>
    %85 = vector.shape_cast %84 : vector<8xf32> to vector<8x1xf32>
    %86 = tpu.reciprocal %85 {approx = true} : vector<8x1xf32> -> vector<8x1xf32>
    %87 = vector.broadcast %86 : vector<8x1xf32> to vector<8x8xf32>
    %88 = arith.mulf %83, %87 : vector<8x8xf32>
    %89 = arith.truncf %88 : vector<8x8xf32> to vector<8x8xbf16>
    %90 = vector.extract_strided_slice %54 {offsets = [0, 64], sizes = [8, 64], strides = [1, 1]} : vector<8x256xf32> to vector<8x64xf32>
    %91 = arith.truncf %90 : vector<8x64xf32> to vector<8x64xbf16>
    %cst_42 = arith.constant dense<0.000000e+00> : vector<8x64xf32>
    %92 = tpu.matmul %89, %91, %cst_42 {dimension_numbers = #tpu.dot_dimension_numbers<[1], [0], [0], [1], [0, 0, 1, 1], [], []>} : vector<8x8xbf16>, vector<8x64xbf16>, vector<8x64xf32> -> vector<8x64xf32>
    %93 = vector.extract_strided_slice %52 {offsets = [0, 128], sizes = [8, 64], strides = [1, 1]} : vector<8x256xf32> to vector<8x64xf32>
    %94 = arith.truncf %93 : vector<8x64xf32> to vector<8x64xbf16>
    %95 = vector.extract_strided_slice %53 {offsets = [0, 128], sizes = [8, 64], strides = [1, 1]} : vector<8x256xf32> to vector<8x64xf32>
    %96 = arith.truncf %95 : vector<8x64xf32> to vector<8x64xbf16>
    %cst_43 = arith.constant dense<0.000000e+00> : vector<8x8xf32>
    %97 = tpu.matmul %94, %96, %cst_43 {dimension_numbers = #tpu.dot_dimension_numbers<[1], [1], [0], [0], [0, 0, 1, 0], [], []>} : vector<8x64xbf16>, vector<8x64xbf16>, vector<8x8xf32> -> vector<8x8xf32>
    %cst_44 = arith.constant dense<0xFF800000> : vector<8xf32>
    %98 = vector.multi_reduction <maximumf>, %97, %cst_44 [1] : vector<8x8xf32> to vector<8xf32>
    %99 = vector.shape_cast %98 : vector<8xf32> to vector<8x1xf32>
    %100 = vector.broadcast %99 : vector<8x1xf32> to vector<8x8xf32>
    %101 = arith.subf %97, %100 : vector<8x8xf32>
    %102 = math.exp %101 : vector<8x8xf32>
    %cst_45 = arith.constant dense<0.000000e+00> : vector<8xf32>
    %103 = vector.multi_reduction <add>, %102, %cst_45 [1] : vector<8x8xf32> to vector<8xf32>
    %104 = vector.shape_cast %103 : vector<8xf32> to vector<8x1xf32>
    %105 = tpu.reciprocal %104 {approx = true} : vector<8x1xf32> -> vector<8x1xf32>
    %106 = vector.broadcast %105 : vector<8x1xf32> to vector<8x8xf32>
    %107 = arith.mulf %102, %106 : vector<8x8xf32>
    %108 = arith.truncf %107 : vector<8x8xf32> to vector<8x8xbf16>
    %109 = vector.extract_strided_slice %54 {offsets = [0, 128], sizes = [8, 64], strides = [1, 1]} : vector<8x256xf32> to vector<8x64xf32>
    %110 = arith.truncf %109 : vector<8x64xf32> to vector<8x64xbf16>
    %cst_46 = arith.constant dense<0.000000e+00> : vector<8x64xf32>
    %111 = tpu.matmul %108, %110, %cst_46 {dimension_numbers = #tpu.dot_dimension_numbers<[1], [0], [0], [1], [0, 0, 1, 1], [], []>} : vector<8x8xbf16>, vector<8x64xbf16>, vector<8x64xf32> -> vector<8x64xf32>
    %112 = vector.extract_strided_slice %52 {offsets = [0, 192], sizes = [8, 64], strides = [1, 1]} : vector<8x256xf32> to vector<8x64xf32>
    %113 = arith.truncf %112 : vector<8x64xf32> to vector<8x64xbf16>
    %114 = vector.extract_strided_slice %53 {offsets = [0, 192], sizes = [8, 64], strides = [1, 1]} : vector<8x256xf32> to vector<8x64xf32>
    %115 = arith.truncf %114 : vector<8x64xf32> to vector<8x64xbf16>
    %cst_47 = arith.constant dense<0.000000e+00> : vector<8x8xf32>
    %116 = tpu.matmul %113, %115, %cst_47 {dimension_numbers = #tpu.dot_dimension_numbers<[1], [1], [0], [0], [0, 0, 1, 0], [], []>} : vector<8x64xbf16>, vector<8x64xbf16>, vector<8x8xf32> -> vector<8x8xf32>
    %cst_48 = arith.constant dense<0xFF800000> : vector<8xf32>
    %117 = vector.multi_reduction <maximumf>, %116, %cst_48 [1] : vector<8x8xf32> to vector<8xf32>
    %118 = vector.shape_cast %117 : vector<8xf32> to vector<8x1xf32>
    %119 = vector.broadcast %118 : vector<8x1xf32> to vector<8x8xf32>
    %120 = arith.subf %116, %119 : vector<8x8xf32>
    %121 = math.exp %120 : vector<8x8xf32>
    %cst_49 = arith.constant dense<0.000000e+00> : vector<8xf32>
    %122 = vector.multi_reduction <add>, %121, %cst_49 [1] : vector<8x8xf32> to vector<8xf32>
    %123 = vector.shape_cast %122 : vector<8xf32> to vector<8x1xf32>
    %124 = tpu.reciprocal %123 {approx = true} : vector<8x1xf32> -> vector<8x1xf32>
    %125 = vector.broadcast %124 : vector<8x1xf32> to vector<8x8xf32>
    %126 = arith.mulf %121, %125 : vector<8x8xf32>
    %127 = arith.truncf %126 : vector<8x8xf32> to vector<8x8xbf16>
    %128 = vector.extract_strided_slice %54 {offsets = [0, 192], sizes = [8, 64], strides = [1, 1]} : vector<8x256xf32> to vector<8x64xf32>
    %129 = arith.truncf %128 : vector<8x64xf32> to vector<8x64xbf16>
    %cst_50 = arith.constant dense<0.000000e+00> : vector<8x64xf32>
    %130 = tpu.matmul %127, %129, %cst_50 {dimension_numbers = #tpu.dot_dimension_numbers<[1], [0], [0], [1], [0, 0, 1, 1], [], []>} : vector<8x8xbf16>, vector<8x64xbf16>, vector<8x64xf32> -> vector<8x64xf32>
    %131 = tpu.concatenate %73, %92, %111, %130 in 1 : vector<8x64xf32>, vector<8x64xf32>, vector<8x64xf32>, vector<8x64xf32> -> vector<8x256xf32>
    %c0_51 = arith.constant 0 : index
    %c0_52 = arith.constant 0 : index
    %c0_53 = arith.constant 0 : index
    %132 = vector.load %arg14[%c0_51, %c0_52, %c0_53] : memref<2x256x256xbf16, #tpu.memory_space<vmem>>, vector<1x256x256xbf16>
    %133 = vector.shape_cast %132 : vector<1x256x256xbf16> to vector<256x256xbf16>
    %134 = arith.truncf %131 : vector<8x256xf32> to vector<8x256xbf16>
    %cst_54 = arith.constant dense<0.000000e+00> : vector<8x256xf32>
    %135 = tpu.matmul %134, %133, %cst_54 {dimension_numbers = #tpu.dot_dimension_numbers<[1], [0], [0], [1], [0, 0, 1, 1], [], []>} : vector<8x256xbf16>, vector<256x256xbf16>, vector<8x256xf32> -> vector<8x256xf32>
    %c0_55 = arith.constant 0 : index
    %c0_56 = arith.constant 0 : index
    %c0_57 = arith.constant 0 : index
    %136 = vector.load %arg15[%c0_55, %c0_56, %c0_57] : memref<2x1x256xf32, #tpu.memory_space<vmem>>, vector<1x1x256xf32>
    %137 = vector.shape_cast %136 : vector<1x1x256xf32> to vector<1x256xf32>
    %138 = vector.broadcast %137 : vector<1x256xf32> to vector<8x256xf32>
    %139 = arith.addf %135, %138 : vector<8x256xf32>
    %140 = arith.addf %43, %139 : vector<8x256xf32>
    %c0_58 = arith.constant 0 : index
    %c0_59 = arith.constant 0 : index
    %c0_60 = arith.constant 0 : index
    %141 = vector.load %arg16[%c0_58, %c0_59, %c0_60] : memref<2x1x256xf32, #tpu.memory_space<vmem>>, vector<1x1x256xf32>
    %142 = vector.shape_cast %141 : vector<1x1x256xf32> to vector<1x256xf32>
    %c0_61 = arith.constant 0 : index
    %c0_62 = arith.constant 0 : index
    %c0_63 = arith.constant 0 : index
    %143 = vector.load %arg17[%c0_61, %c0_62, %c0_63] : memref<2x1x256xf32, #tpu.memory_space<vmem>>, vector<1x1x256xf32>
    %144 = vector.shape_cast %143 : vector<1x1x256xf32> to vector<1x256xf32>
    %cst_64 = arith.constant dense<0.000000e+00> : vector<8xf32>
    %145 = vector.multi_reduction <add>, %140, %cst_64 [1] : vector<8x256xf32> to vector<8xf32>
    %146 = vector.shape_cast %145 : vector<8xf32> to vector<8x1xf32>
    %cst_65 = arith.constant 2.560000e+02 : f32
    %147 = vector.broadcast %cst_65 : f32 to vector<8x1xf32>
    %148 = arith.divf %146, %147 : vector<8x1xf32>
    %149 = vector.broadcast %148 : vector<8x1xf32> to vector<8x256xf32>
    %150 = arith.subf %140, %149 : vector<8x256xf32>
    %151 = arith.mulf %150, %150 : vector<8x256xf32>
    %cst_66 = arith.constant dense<0.000000e+00> : vector<8xf32>
    %152 = vector.multi_reduction <add>, %151, %cst_66 [1] : vector<8x256xf32> to vector<8xf32>
    %153 = vector.shape_cast %152 : vector<8xf32> to vector<8x1xf32>
    %cst_67 = arith.constant 2.560000e+02 : f32
    %154 = vector.broadcast %cst_67 : f32 to vector<8x1xf32>
    %155 = arith.divf %153, %154 : vector<8x1xf32>
    %cst_68 = arith.constant 9.99999974E-6 : f32
    %156 = vector.broadcast %cst_68 : f32 to vector<8x1xf32>
    %157 = arith.addf %155, %156 : vector<8x1xf32>
    %158 = math.rsqrt %157 : vector<8x1xf32>
    %159 = vector.broadcast %158 : vector<8x1xf32> to vector<8x256xf32>
    %160 = arith.mulf %150, %159 : vector<8x256xf32>
    %161 = vector.broadcast %142 : vector<1x256xf32> to vector<8x256xf32>
    %162 = arith.mulf %160, %161 : vector<8x256xf32>
    %163 = vector.broadcast %144 : vector<1x256xf32> to vector<8x256xf32>
    %164 = arith.addf %162, %163 : vector<8x256xf32>
    %c0_69 = arith.constant 0 : index
    %c0_70 = arith.constant 0 : index
    %c0_71 = arith.constant 0 : index
    %165 = vector.load %arg18[%c0_69, %c0_70, %c0_71] : memref<2x256x64xbf16, #tpu.memory_space<vmem>>, vector<1x256x64xbf16>
    %166 = vector.shape_cast %165 : vector<1x256x64xbf16> to vector<256x64xbf16>
    %167 = arith.truncf %164 : vector<8x256xf32> to vector<8x256xbf16>
    %cst_72 = arith.constant dense<0.000000e+00> : vector<8x64xf32>
    %168 = tpu.matmul %167, %166, %cst_72 {dimension_numbers = #tpu.dot_dimension_numbers<[1], [0], [0], [1], [0, 0, 1, 1], [], []>} : vector<8x256xbf16>, vector<256x64xbf16>, vector<8x64xf32> -> vector<8x64xf32>
    %c0_73 = arith.constant 0 : index
    %c0_74 = arith.constant 0 : index
    %c0_75 = arith.constant 0 : index
    %169 = vector.load %arg19[%c0_73, %c0_74, %c0_75] : memref<2x1x64xf32, #tpu.memory_space<vmem>>, vector<1x1x64xf32>
    %170 = vector.shape_cast %169 : vector<1x1x64xf32> to vector<1x64xf32>
    %171 = vector.broadcast %170 : vector<1x64xf32> to vector<8x64xf32>
    %172 = arith.addf %168, %171 : vector<8x64xf32>
    %cst_76 = arith.constant 0.000000e+00 : f32
    %173 = vector.broadcast %cst_76 : f32 to vector<8x64xf32>
    %174 = arith.maximumf %172, %173 : vector<8x64xf32>
    %c0_77 = arith.constant 0 : index
    %c0_78 = arith.constant 0 : index
    %c0_79 = arith.constant 0 : index
    %175 = vector.load %arg20[%c0_77, %c0_78, %c0_79] : memref<2x64x256xbf16, #tpu.memory_space<vmem>>, vector<1x64x256xbf16>
    %176 = vector.shape_cast %175 : vector<1x64x256xbf16> to vector<64x256xbf16>
    %177 = arith.truncf %174 : vector<8x64xf32> to vector<8x64xbf16>
    %cst_80 = arith.constant dense<0.000000e+00> : vector<8x256xf32>
    %178 = tpu.matmul %177, %176, %cst_80 {dimension_numbers = #tpu.dot_dimension_numbers<[1], [0], [0], [1], [0, 0, 1, 1], [], []>} : vector<8x64xbf16>, vector<64x256xbf16>, vector<8x256xf32> -> vector<8x256xf32>
    %c0_81 = arith.constant 0 : index
    %c0_82 = arith.constant 0 : index
    %c0_83 = arith.constant 0 : index
    %179 = vector.load %arg21[%c0_81, %c0_82, %c0_83] : memref<2x1x256xf32, #tpu.memory_space<vmem>>, vector<1x1x256xf32>
    %180 = vector.shape_cast %179 : vector<1x1x256xf32> to vector<1x256xf32>
    %181 = vector.broadcast %180 : vector<1x256xf32> to vector<8x256xf32>
    %182 = arith.addf %178, %181 : vector<8x256xf32>
    %183 = arith.addf %164, %182 : vector<8x256xf32>
    %c0_84 = arith.constant 0 : index
    %c0_85 = arith.constant 0 : index
    %c0_86 = arith.constant 0 : index
    %184 = vector.load %arg22[%c0_84, %c0_85, %c0_86] : memref<2x1x256xf32, #tpu.memory_space<vmem>>, vector<1x1x256xf32>
    %185 = vector.shape_cast %184 : vector<1x1x256xf32> to vector<1x256xf32>
    %c0_87 = arith.constant 0 : index
    %c0_88 = arith.constant 0 : index
    %c0_89 = arith.constant 0 : index
    %186 = vector.load %arg23[%c0_87, %c0_88, %c0_89] : memref<2x1x256xf32, #tpu.memory_space<vmem>>, vector<1x1x256xf32>
    %187 = vector.shape_cast %186 : vector<1x1x256xf32> to vector<1x256xf32>
    %cst_90 = arith.constant dense<0.000000e+00> : vector<8xf32>
    %188 = vector.multi_reduction <add>, %183, %cst_90 [1] : vector<8x256xf32> to vector<8xf32>
    %189 = vector.shape_cast %188 : vector<8xf32> to vector<8x1xf32>
    %cst_91 = arith.constant 2.560000e+02 : f32
    %190 = vector.broadcast %cst_91 : f32 to vector<8x1xf32>
    %191 = arith.divf %189, %190 : vector<8x1xf32>
    %192 = vector.broadcast %191 : vector<8x1xf32> to vector<8x256xf32>
    %193 = arith.subf %183, %192 : vector<8x256xf32>
    %194 = arith.mulf %193, %193 : vector<8x256xf32>
    %cst_92 = arith.constant dense<0.000000e+00> : vector<8xf32>
    %195 = vector.multi_reduction <add>, %194, %cst_92 [1] : vector<8x256xf32> to vector<8xf32>
    %196 = vector.shape_cast %195 : vector<8xf32> to vector<8x1xf32>
    %cst_93 = arith.constant 2.560000e+02 : f32
    %197 = vector.broadcast %cst_93 : f32 to vector<8x1xf32>
    %198 = arith.divf %196, %197 : vector<8x1xf32>
    %cst_94 = arith.constant 9.99999974E-6 : f32
    %199 = vector.broadcast %cst_94 : f32 to vector<8x1xf32>
    %200 = arith.addf %198, %199 : vector<8x1xf32>
    %201 = math.rsqrt %200 : vector<8x1xf32>
    %202 = vector.broadcast %201 : vector<8x1xf32> to vector<8x256xf32>
    %203 = arith.mulf %193, %202 : vector<8x256xf32>
    %204 = vector.broadcast %185 : vector<1x256xf32> to vector<8x256xf32>
    %205 = arith.mulf %203, %204 : vector<8x256xf32>
    %206 = vector.broadcast %187 : vector<1x256xf32> to vector<8x256xf32>
    %207 = arith.addf %205, %206 : vector<8x256xf32>
    %c1 = arith.constant 1 : index
    %c0_95 = arith.constant 0 : index
    %c0_96 = arith.constant 0 : index
    %208 = vector.load %arg12[%c1, %c0_95, %c0_96] : memref<2x256x768xbf16, #tpu.memory_space<vmem>>, vector<1x256x768xbf16>
    %209 = vector.shape_cast %208 : vector<1x256x768xbf16> to vector<256x768xbf16>
    %210 = arith.truncf %207 : vector<8x256xf32> to vector<8x256xbf16>
    %cst_97 = arith.constant dense<0.000000e+00> : vector<8x768xf32>
    %211 = tpu.matmul %210, %209, %cst_97 {dimension_numbers = #tpu.dot_dimension_numbers<[1], [0], [0], [1], [0, 0, 1, 1], [], []>} : vector<8x256xbf16>, vector<256x768xbf16>, vector<8x768xf32> -> vector<8x768xf32>
    %c1_98 = arith.constant 1 : index
    %c0_99 = arith.constant 0 : index
    %c0_100 = arith.constant 0 : index
    %212 = vector.load %arg13[%c1_98, %c0_99, %c0_100] : memref<2x1x768xf32, #tpu.memory_space<vmem>>, vector<1x1x768xf32>
    %213 = vector.shape_cast %212 : vector<1x1x768xf32> to vector<1x768xf32>
    %214 = vector.broadcast %213 : vector<1x768xf32> to vector<8x768xf32>
    %215 = arith.addf %211, %214 : vector<8x768xf32>
    %216 = vector.extract_strided_slice %215 {offsets = [0, 0], sizes = [8, 256], strides = [1, 1]} : vector<8x768xf32> to vector<8x256xf32>
    %217 = vector.extract_strided_slice %215 {offsets = [0, 256], sizes = [8, 256], strides = [1, 1]} : vector<8x768xf32> to vector<8x256xf32>
    %218 = vector.extract_strided_slice %215 {offsets = [0, 512], sizes = [8, 256], strides = [1, 1]} : vector<8x768xf32> to vector<8x256xf32>
    %219 = vector.extract_strided_slice %216 {offsets = [0, 0], sizes = [8, 64], strides = [1, 1]} : vector<8x256xf32> to vector<8x64xf32>
    %220 = arith.truncf %219 : vector<8x64xf32> to vector<8x64xbf16>
    %221 = vector.extract_strided_slice %217 {offsets = [0, 0], sizes = [8, 64], strides = [1, 1]} : vector<8x256xf32> to vector<8x64xf32>
    %222 = arith.truncf %221 : vector<8x64xf32> to vector<8x64xbf16>
    %cst_101 = arith.constant dense<0.000000e+00> : vector<8x8xf32>
    %223 = tpu.matmul %220, %222, %cst_101 {dimension_numbers = #tpu.dot_dimension_numbers<[1], [1], [0], [0], [0, 0, 1, 0], [], []>} : vector<8x64xbf16>, vector<8x64xbf16>, vector<8x8xf32> -> vector<8x8xf32>
    %cst_102 = arith.constant dense<0xFF800000> : vector<8xf32>
    %224 = vector.multi_reduction <maximumf>, %223, %cst_102 [1] : vector<8x8xf32> to vector<8xf32>
    %225 = vector.shape_cast %224 : vector<8xf32> to vector<8x1xf32>
    %226 = vector.broadcast %225 : vector<8x1xf32> to vector<8x8xf32>
    %227 = arith.subf %223, %226 : vector<8x8xf32>
    %228 = math.exp %227 : vector<8x8xf32>
    %cst_103 = arith.constant dense<0.000000e+00> : vector<8xf32>
    %229 = vector.multi_reduction <add>, %228, %cst_103 [1] : vector<8x8xf32> to vector<8xf32>
    %230 = vector.shape_cast %229 : vector<8xf32> to vector<8x1xf32>
    %231 = tpu.reciprocal %230 {approx = true} : vector<8x1xf32> -> vector<8x1xf32>
    %232 = vector.broadcast %231 : vector<8x1xf32> to vector<8x8xf32>
    %233 = arith.mulf %228, %232 : vector<8x8xf32>
    %234 = arith.truncf %233 : vector<8x8xf32> to vector<8x8xbf16>
    %235 = vector.extract_strided_slice %218 {offsets = [0, 0], sizes = [8, 64], strides = [1, 1]} : vector<8x256xf32> to vector<8x64xf32>
    %236 = arith.truncf %235 : vector<8x64xf32> to vector<8x64xbf16>
    %cst_104 = arith.constant dense<0.000000e+00> : vector<8x64xf32>
    %237 = tpu.matmul %234, %236, %cst_104 {dimension_numbers = #tpu.dot_dimension_numbers<[1], [0], [0], [1], [0, 0, 1, 1], [], []>} : vector<8x8xbf16>, vector<8x64xbf16>, vector<8x64xf32> -> vector<8x64xf32>
    %238 = vector.extract_strided_slice %216 {offsets = [0, 64], sizes = [8, 64], strides = [1, 1]} : vector<8x256xf32> to vector<8x64xf32>
    %239 = arith.truncf %238 : vector<8x64xf32> to vector<8x64xbf16>
    %240 = vector.extract_strided_slice %217 {offsets = [0, 64], sizes = [8, 64], strides = [1, 1]} : vector<8x256xf32> to vector<8x64xf32>
    %241 = arith.truncf %240 : vector<8x64xf32> to vector<8x64xbf16>
    %cst_105 = arith.constant dense<0.000000e+00> : vector<8x8xf32>
    %242 = tpu.matmul %239, %241, %cst_105 {dimension_numbers = #tpu.dot_dimension_numbers<[1], [1], [0], [0], [0, 0, 1, 0], [], []>} : vector<8x64xbf16>, vector<8x64xbf16>, vector<8x8xf32> -> vector<8x8xf32>
    %cst_106 = arith.constant dense<0xFF800000> : vector<8xf32>
    %243 = vector.multi_reduction <maximumf>, %242, %cst_106 [1] : vector<8x8xf32> to vector<8xf32>
    %244 = vector.shape_cast %243 : vector<8xf32> to vector<8x1xf32>
    %245 = vector.broadcast %244 : vector<8x1xf32> to vector<8x8xf32>
    %246 = arith.subf %242, %245 : vector<8x8xf32>
    %247 = math.exp %246 : vector<8x8xf32>
    %cst_107 = arith.constant dense<0.000000e+00> : vector<8xf32>
    %248 = vector.multi_reduction <add>, %247, %cst_107 [1] : vector<8x8xf32> to vector<8xf32>
    %249 = vector.shape_cast %248 : vector<8xf32> to vector<8x1xf32>
    %250 = tpu.reciprocal %249 {approx = true} : vector<8x1xf32> -> vector<8x1xf32>
    %251 = vector.broadcast %250 : vector<8x1xf32> to vector<8x8xf32>
    %252 = arith.mulf %247, %251 : vector<8x8xf32>
    %253 = arith.truncf %252 : vector<8x8xf32> to vector<8x8xbf16>
    %254 = vector.extract_strided_slice %218 {offsets = [0, 64], sizes = [8, 64], strides = [1, 1]} : vector<8x256xf32> to vector<8x64xf32>
    %255 = arith.truncf %254 : vector<8x64xf32> to vector<8x64xbf16>
    %cst_108 = arith.constant dense<0.000000e+00> : vector<8x64xf32>
    %256 = tpu.matmul %253, %255, %cst_108 {dimension_numbers = #tpu.dot_dimension_numbers<[1], [0], [0], [1], [0, 0, 1, 1], [], []>} : vector<8x8xbf16>, vector<8x64xbf16>, vector<8x64xf32> -> vector<8x64xf32>
    %257 = vector.extract_strided_slice %216 {offsets = [0, 128], sizes = [8, 64], strides = [1, 1]} : vector<8x256xf32> to vector<8x64xf32>
    %258 = arith.truncf %257 : vector<8x64xf32> to vector<8x64xbf16>
    %259 = vector.extract_strided_slice %217 {offsets = [0, 128], sizes = [8, 64], strides = [1, 1]} : vector<8x256xf32> to vector<8x64xf32>
    %260 = arith.truncf %259 : vector<8x64xf32> to vector<8x64xbf16>
    %cst_109 = arith.constant dense<0.000000e+00> : vector<8x8xf32>
    %261 = tpu.matmul %258, %260, %cst_109 {dimension_numbers = #tpu.dot_dimension_numbers<[1], [1], [0], [0], [0, 0, 1, 0], [], []>} : vector<8x64xbf16>, vector<8x64xbf16>, vector<8x8xf32> -> vector<8x8xf32>
    %cst_110 = arith.constant dense<0xFF800000> : vector<8xf32>
    %262 = vector.multi_reduction <maximumf>, %261, %cst_110 [1] : vector<8x8xf32> to vector<8xf32>
    %263 = vector.shape_cast %262 : vector<8xf32> to vector<8x1xf32>
    %264 = vector.broadcast %263 : vector<8x1xf32> to vector<8x8xf32>
    %265 = arith.subf %261, %264 : vector<8x8xf32>
    %266 = math.exp %265 : vector<8x8xf32>
    %cst_111 = arith.constant dense<0.000000e+00> : vector<8xf32>
    %267 = vector.multi_reduction <add>, %266, %cst_111 [1] : vector<8x8xf32> to vector<8xf32>
    %268 = vector.shape_cast %267 : vector<8xf32> to vector<8x1xf32>
    %269 = tpu.reciprocal %268 {approx = true} : vector<8x1xf32> -> vector<8x1xf32>
    %270 = vector.broadcast %269 : vector<8x1xf32> to vector<8x8xf32>
    %271 = arith.mulf %266, %270 : vector<8x8xf32>
    %272 = arith.truncf %271 : vector<8x8xf32> to vector<8x8xbf16>
    %273 = vector.extract_strided_slice %218 {offsets = [0, 128], sizes = [8, 64], strides = [1, 1]} : vector<8x256xf32> to vector<8x64xf32>
    %274 = arith.truncf %273 : vector<8x64xf32> to vector<8x64xbf16>
    %cst_112 = arith.constant dense<0.000000e+00> : vector<8x64xf32>
    %275 = tpu.matmul %272, %274, %cst_112 {dimension_numbers = #tpu.dot_dimension_numbers<[1], [0], [0], [1], [0, 0, 1, 1], [], []>} : vector<8x8xbf16>, vector<8x64xbf16>, vector<8x64xf32> -> vector<8x64xf32>
    %276 = vector.extract_strided_slice %216 {offsets = [0, 192], sizes = [8, 64], strides = [1, 1]} : vector<8x256xf32> to vector<8x64xf32>
    %277 = arith.truncf %276 : vector<8x64xf32> to vector<8x64xbf16>
    %278 = vector.extract_strided_slice %217 {offsets = [0, 192], sizes = [8, 64], strides = [1, 1]} : vector<8x256xf32> to vector<8x64xf32>
    %279 = arith.truncf %278 : vector<8x64xf32> to vector<8x64xbf16>
    %cst_113 = arith.constant dense<0.000000e+00> : vector<8x8xf32>
    %280 = tpu.matmul %277, %279, %cst_113 {dimension_numbers = #tpu.dot_dimension_numbers<[1], [1], [0], [0], [0, 0, 1, 0], [], []>} : vector<8x64xbf16>, vector<8x64xbf16>, vector<8x8xf32> -> vector<8x8xf32>
    %cst_114 = arith.constant dense<0xFF800000> : vector<8xf32>
    %281 = vector.multi_reduction <maximumf>, %280, %cst_114 [1] : vector<8x8xf32> to vector<8xf32>
    %282 = vector.shape_cast %281 : vector<8xf32> to vector<8x1xf32>
    %283 = vector.broadcast %282 : vector<8x1xf32> to vector<8x8xf32>
    %284 = arith.subf %280, %283 : vector<8x8xf32>
    %285 = math.exp %284 : vector<8x8xf32>
    %cst_115 = arith.constant dense<0.000000e+00> : vector<8xf32>
    %286 = vector.multi_reduction <add>, %285, %cst_115 [1] : vector<8x8xf32> to vector<8xf32>
    %287 = vector.shape_cast %286 : vector<8xf32> to vector<8x1xf32>
    %288 = tpu.reciprocal %287 {approx = true} : vector<8x1xf32> -> vector<8x1xf32>
    %289 = vector.broadcast %288 : vector<8x1xf32> to vector<8x8xf32>
    %290 = arith.mulf %285, %289 : vector<8x8xf32>
    %291 = arith.truncf %290 : vector<8x8xf32> to vector<8x8xbf16>
    %292 = vector.extract_strided_slice %218 {offsets = [0, 192], sizes = [8, 64], strides = [1, 1]} : vector<8x256xf32> to vector<8x64xf32>
    %293 = arith.truncf %292 : vector<8x64xf32> to vector<8x64xbf16>
    %cst_116 = arith.constant dense<0.000000e+00> : vector<8x64xf32>
    %294 = tpu.matmul %291, %293, %cst_116 {dimension_numbers = #tpu.dot_dimension_numbers<[1], [0], [0], [1], [0, 0, 1, 1], [], []>} : vector<8x8xbf16>, vector<8x64xbf16>, vector<8x64xf32> -> vector<8x64xf32>
    %295 = tpu.concatenate %237, %256, %275, %294 in 1 : vector<8x64xf32>, vector<8x64xf32>, vector<8x64xf32>, vector<8x64xf32> -> vector<8x256xf32>
    %c1_117 = arith.constant 1 : index
    %c0_118 = arith.constant 0 : index
    %c0_119 = arith.constant 0 : index
    %296 = vector.load %arg14[%c1_117, %c0_118, %c0_119] : memref<2x256x256xbf16, #tpu.memory_space<vmem>>, vector<1x256x256xbf16>
    %297 = vector.shape_cast %296 : vector<1x256x256xbf16> to vector<256x256xbf16>
    %298 = arith.truncf %295 : vector<8x256xf32> to vector<8x256xbf16>
    %cst_120 = arith.constant dense<0.000000e+00> : vector<8x256xf32>
    %299 = tpu.matmul %298, %297, %cst_120 {dimension_numbers = #tpu.dot_dimension_numbers<[1], [0], [0], [1], [0, 0, 1, 1], [], []>} : vector<8x256xbf16>, vector<256x256xbf16>, vector<8x256xf32> -> vector<8x256xf32>
    %c1_121 = arith.constant 1 : index
    %c0_122 = arith.constant 0 : index
    %c0_123 = arith.constant 0 : index
    %300 = vector.load %arg15[%c1_121, %c0_122, %c0_123] : memref<2x1x256xf32, #tpu.memory_space<vmem>>, vector<1x1x256xf32>
    %301 = vector.shape_cast %300 : vector<1x1x256xf32> to vector<1x256xf32>
    %302 = vector.broadcast %301 : vector<1x256xf32> to vector<8x256xf32>
    %303 = arith.addf %299, %302 : vector<8x256xf32>
    %304 = arith.addf %207, %303 : vector<8x256xf32>
    %c1_124 = arith.constant 1 : index
    %c0_125 = arith.constant 0 : index
    %c0_126 = arith.constant 0 : index
    %305 = vector.load %arg16[%c1_124, %c0_125, %c0_126] : memref<2x1x256xf32, #tpu.memory_space<vmem>>, vector<1x1x256xf32>
    %306 = vector.shape_cast %305 : vector<1x1x256xf32> to vector<1x256xf32>
    %c1_127 = arith.constant 1 : index
    %c0_128 = arith.constant 0 : index
    %c0_129 = arith.constant 0 : index
    %307 = vector.load %arg17[%c1_127, %c0_128, %c0_129] : memref<2x1x256xf32, #tpu.memory_space<vmem>>, vector<1x1x256xf32>
    %308 = vector.shape_cast %307 : vector<1x1x256xf32> to vector<1x256xf32>
    %cst_130 = arith.constant dense<0.000000e+00> : vector<8xf32>
    %309 = vector.multi_reduction <add>, %304, %cst_130 [1] : vector<8x256xf32> to vector<8xf32>
    %310 = vector.shape_cast %309 : vector<8xf32> to vector<8x1xf32>
    %cst_131 = arith.constant 2.560000e+02 : f32
    %311 = vector.broadcast %cst_131 : f32 to vector<8x1xf32>
    %312 = arith.divf %310, %311 : vector<8x1xf32>
    %313 = vector.broadcast %312 : vector<8x1xf32> to vector<8x256xf32>
    %314 = arith.subf %304, %313 : vector<8x256xf32>
    %315 = arith.mulf %314, %314 : vector<8x256xf32>
    %cst_132 = arith.constant dense<0.000000e+00> : vector<8xf32>
    %316 = vector.multi_reduction <add>, %315, %cst_132 [1] : vector<8x256xf32> to vector<8xf32>
    %317 = vector.shape_cast %316 : vector<8xf32> to vector<8x1xf32>
    %cst_133 = arith.constant 2.560000e+02 : f32
    %318 = vector.broadcast %cst_133 : f32 to vector<8x1xf32>
    %319 = arith.divf %317, %318 : vector<8x1xf32>
    %cst_134 = arith.constant 9.99999974E-6 : f32
    %320 = vector.broadcast %cst_134 : f32 to vector<8x1xf32>
    %321 = arith.addf %319, %320 : vector<8x1xf32>
    %322 = math.rsqrt %321 : vector<8x1xf32>
    %323 = vector.broadcast %322 : vector<8x1xf32> to vector<8x256xf32>
    %324 = arith.mulf %314, %323 : vector<8x256xf32>
    %325 = vector.broadcast %306 : vector<1x256xf32> to vector<8x256xf32>
    %326 = arith.mulf %324, %325 : vector<8x256xf32>
    %327 = vector.broadcast %308 : vector<1x256xf32> to vector<8x256xf32>
    %328 = arith.addf %326, %327 : vector<8x256xf32>
    %c1_135 = arith.constant 1 : index
    %c0_136 = arith.constant 0 : index
    %c0_137 = arith.constant 0 : index
    %329 = vector.load %arg18[%c1_135, %c0_136, %c0_137] : memref<2x256x64xbf16, #tpu.memory_space<vmem>>, vector<1x256x64xbf16>
    %330 = vector.shape_cast %329 : vector<1x256x64xbf16> to vector<256x64xbf16>
    %331 = arith.truncf %328 : vector<8x256xf32> to vector<8x256xbf16>
    %cst_138 = arith.constant dense<0.000000e+00> : vector<8x64xf32>
    %332 = tpu.matmul %331, %330, %cst_138 {dimension_numbers = #tpu.dot_dimension_numbers<[1], [0], [0], [1], [0, 0, 1, 1], [], []>} : vector<8x256xbf16>, vector<256x64xbf16>, vector<8x64xf32> -> vector<8x64xf32>
    %c1_139 = arith.constant 1 : index
    %c0_140 = arith.constant 0 : index
    %c0_141 = arith.constant 0 : index
    %333 = vector.load %arg19[%c1_139, %c0_140, %c0_141] : memref<2x1x64xf32, #tpu.memory_space<vmem>>, vector<1x1x64xf32>
    %334 = vector.shape_cast %333 : vector<1x1x64xf32> to vector<1x64xf32>
    %335 = vector.broadcast %334 : vector<1x64xf32> to vector<8x64xf32>
    %336 = arith.addf %332, %335 : vector<8x64xf32>
    %cst_142 = arith.constant 0.000000e+00 : f32
    %337 = vector.broadcast %cst_142 : f32 to vector<8x64xf32>
    %338 = arith.maximumf %336, %337 : vector<8x64xf32>
    %c1_143 = arith.constant 1 : index
    %c0_144 = arith.constant 0 : index
    %c0_145 = arith.constant 0 : index
    %339 = vector.load %arg20[%c1_143, %c0_144, %c0_145] : memref<2x64x256xbf16, #tpu.memory_space<vmem>>, vector<1x64x256xbf16>
    %340 = vector.shape_cast %339 : vector<1x64x256xbf16> to vector<64x256xbf16>
    %341 = arith.truncf %338 : vector<8x64xf32> to vector<8x64xbf16>
    %cst_146 = arith.constant dense<0.000000e+00> : vector<8x256xf32>
    %342 = tpu.matmul %341, %340, %cst_146 {dimension_numbers = #tpu.dot_dimension_numbers<[1], [0], [0], [1], [0, 0, 1, 1], [], []>} : vector<8x64xbf16>, vector<64x256xbf16>, vector<8x256xf32> -> vector<8x256xf32>
    %c1_147 = arith.constant 1 : index
    %c0_148 = arith.constant 0 : index
    %c0_149 = arith.constant 0 : index
    %343 = vector.load %arg21[%c1_147, %c0_148, %c0_149] : memref<2x1x256xf32, #tpu.memory_space<vmem>>, vector<1x1x256xf32>
    %344 = vector.shape_cast %343 : vector<1x1x256xf32> to vector<1x256xf32>
    %345 = vector.broadcast %344 : vector<1x256xf32> to vector<8x256xf32>
    %346 = arith.addf %342, %345 : vector<8x256xf32>
    %347 = arith.addf %328, %346 : vector<8x256xf32>
    %c1_150 = arith.constant 1 : index
    %c0_151 = arith.constant 0 : index
    %c0_152 = arith.constant 0 : index
    %348 = vector.load %arg22[%c1_150, %c0_151, %c0_152] : memref<2x1x256xf32, #tpu.memory_space<vmem>>, vector<1x1x256xf32>
    %349 = vector.shape_cast %348 : vector<1x1x256xf32> to vector<1x256xf32>
    %c1_153 = arith.constant 1 : index
    %c0_154 = arith.constant 0 : index
    %c0_155 = arith.constant 0 : index
    %350 = vector.load %arg23[%c1_153, %c0_154, %c0_155] : memref<2x1x256xf32, #tpu.memory_space<vmem>>, vector<1x1x256xf32>
    %351 = vector.shape_cast %350 : vector<1x1x256xf32> to vector<1x256xf32>
    %cst_156 = arith.constant dense<0.000000e+00> : vector<8xf32>
    %352 = vector.multi_reduction <add>, %347, %cst_156 [1] : vector<8x256xf32> to vector<8xf32>
    %353 = vector.shape_cast %352 : vector<8xf32> to vector<8x1xf32>
    %cst_157 = arith.constant 2.560000e+02 : f32
    %354 = vector.broadcast %cst_157 : f32 to vector<8x1xf32>
    %355 = arith.divf %353, %354 : vector<8x1xf32>
    %356 = vector.broadcast %355 : vector<8x1xf32> to vector<8x256xf32>
    %357 = arith.subf %347, %356 : vector<8x256xf32>
    %358 = arith.mulf %357, %357 : vector<8x256xf32>
    %cst_158 = arith.constant dense<0.000000e+00> : vector<8xf32>
    %359 = vector.multi_reduction <add>, %358, %cst_158 [1] : vector<8x256xf32> to vector<8xf32>
    %360 = vector.shape_cast %359 : vector<8xf32> to vector<8x1xf32>
    %cst_159 = arith.constant 2.560000e+02 : f32
    %361 = vector.broadcast %cst_159 : f32 to vector<8x1xf32>
    %362 = arith.divf %360, %361 : vector<8x1xf32>
    %cst_160 = arith.constant 9.99999974E-6 : f32
    %363 = vector.broadcast %cst_160 : f32 to vector<8x1xf32>
    %364 = arith.addf %362, %363 : vector<8x1xf32>
    %365 = math.rsqrt %364 : vector<8x1xf32>
    %366 = vector.broadcast %365 : vector<8x1xf32> to vector<8x256xf32>
    %367 = arith.mulf %357, %366 : vector<8x256xf32>
    %368 = vector.broadcast %349 : vector<1x256xf32> to vector<8x256xf32>
    %369 = arith.mulf %367, %368 : vector<8x256xf32>
    %370 = vector.broadcast %351 : vector<1x256xf32> to vector<8x256xf32>
    %371 = arith.addf %369, %370 : vector<8x256xf32>
    %c0_161 = arith.constant 0 : index
    %c0_162 = arith.constant 0 : index
    %372 = vector.load %arg24[%c0_161, %c0_162] : memref<256x128xbf16, #tpu.memory_space<vmem>>, vector<256x128xbf16>
    %c0_163 = arith.constant 0 : index
    %c0_164 = arith.constant 0 : index
    %373 = vector.load %arg25[%c0_163, %c0_164] : memref<1x128xf32, #tpu.memory_space<vmem>>, vector<1x128xf32>
    %374 = arith.truncf %371 : vector<8x256xf32> to vector<8x256xbf16>
    %cst_165 = arith.constant dense<0.000000e+00> : vector<8x128xf32>
    %375 = tpu.matmul %374, %372, %cst_165 {dimension_numbers = #tpu.dot_dimension_numbers<[1], [0], [0], [1], [0, 0, 1, 1], [], []>} : vector<8x256xbf16>, vector<256x128xbf16>, vector<8x128xf32> -> vector<8x128xf32>
    %376 = vector.broadcast %373 : vector<1x128xf32> to vector<8x128xf32>
    %377 = arith.addf %375, %376 : vector<8x128xf32>
    %378 = vector.extract_strided_slice %13 {offsets = [0, 256], sizes = [8, 128], strides = [1, 1]} : vector<8x640xf32> to vector<8x128xf32>
    %379 = arith.mulf %377, %378 : vector<8x128xf32>
    %380 = vector.extract_strided_slice %14 {offsets = [0, 256], sizes = [8, 128], strides = [1, 1]} : vector<8x640xf32> to vector<8x128xf32>
    %381 = arith.addf %379, %380 : vector<8x128xf32>
    %c0_166 = arith.constant 0 : index
    %c0_167 = arith.constant 0 : index
    %382 = vector.load %arg26[%c0_166, %c0_167] : memref<128x64xbf16, #tpu.memory_space<vmem>>, vector<128x64xbf16>
    %c0_168 = arith.constant 0 : index
    %c0_169 = arith.constant 0 : index
    %383 = vector.load %arg27[%c0_168, %c0_169] : memref<1x64xf32, #tpu.memory_space<vmem>>, vector<1x64xf32>
    %384 = arith.truncf %381 : vector<8x128xf32> to vector<8x128xbf16>
    %cst_170 = arith.constant dense<0.000000e+00> : vector<8x64xf32>
    %385 = tpu.matmul %384, %382, %cst_170 {dimension_numbers = #tpu.dot_dimension_numbers<[1], [0], [0], [1], [0, 0, 1, 1], [], []>} : vector<8x128xbf16>, vector<128x64xbf16>, vector<8x64xf32> -> vector<8x64xf32>
    %386 = vector.broadcast %383 : vector<1x64xf32> to vector<8x64xf32>
    %387 = arith.addf %385, %386 : vector<8x64xf32>
    %388 = vector.extract_strided_slice %13 {offsets = [0, 384], sizes = [8, 64], strides = [1, 1]} : vector<8x640xf32> to vector<8x64xf32>
    %389 = arith.mulf %387, %388 : vector<8x64xf32>
    %390 = vector.extract_strided_slice %14 {offsets = [0, 384], sizes = [8, 64], strides = [1, 1]} : vector<8x640xf32> to vector<8x64xf32>
    %391 = arith.addf %389, %390 : vector<8x64xf32>
    %c0_171 = arith.constant 0 : index
    %c0_172 = arith.constant 0 : index
    %392 = vector.load %arg28[%c0_171, %c0_172] : memref<64x16xbf16, #tpu.memory_space<vmem>>, vector<64x16xbf16>
    %c0_173 = arith.constant 0 : index
    %c0_174 = arith.constant 0 : index
    %393 = vector.load %arg29[%c0_173, %c0_174] : memref<1x16xf32, #tpu.memory_space<vmem>>, vector<1x16xf32>
    %394 = arith.truncf %391 : vector<8x64xf32> to vector<8x64xbf16>
    %cst_175 = arith.constant dense<0.000000e+00> : vector<8x16xf32>
    %395 = tpu.matmul %394, %392, %cst_175 {dimension_numbers = #tpu.dot_dimension_numbers<[1], [0], [0], [1], [0, 0, 1, 1], [], []>} : vector<8x64xbf16>, vector<64x16xbf16>, vector<8x16xf32> -> vector<8x16xf32>
    %396 = vector.broadcast %393 : vector<1x16xf32> to vector<8x16xf32>
    %397 = arith.addf %395, %396 : vector<8x16xf32>
    %398 = vector.extract_strided_slice %13 {offsets = [0, 512], sizes = [8, 16], strides = [1, 1]} : vector<8x640xf32> to vector<8x16xf32>
    %399 = arith.mulf %397, %398 : vector<8x16xf32>
    %400 = vector.extract_strided_slice %14 {offsets = [0, 512], sizes = [8, 16], strides = [1, 1]} : vector<8x640xf32> to vector<8x16xf32>
    %401 = arith.addf %399, %400 : vector<8x16xf32>
    %c0_176 = arith.constant 0 : index
    %c0_177 = arith.constant 0 : index
    %c0_178 = arith.constant 0 : index
    %402 = vector.load %arg30[%c0_176, %c0_177, %c0_178] : memref<1x8x16xf32, #tpu.memory_space<vmem>>, vector<1x8x16xf32>
    %403 = vector.shape_cast %402 : vector<1x8x16xf32> to vector<8x16xf32>
    %404 = vector.shape_cast %401 : vector<8x16xf32> to vector<1x8x16xf32>
    tpu.vector_store %arg30[%c0_176, %c0_177, %c0_178], %404 {strides = array<i32>} : memref<1x8x16xf32, #tpu.memory_space<vmem>>, vector<1x8x16xf32>,
    return
  }
  func.func @transform_0(%arg0: i32) -> (i32, i32, i32) {
    %c0_i32 = arith.constant 0 : i32
    %c0_i32_0 = arith.constant 0 : i32
    %c0_i32_1 = arith.constant 0 : i32
    return %arg0, %c0_i32, %c0_i32_0 : i32, i32, i32
  }
  func.func @transform_1(%arg0: i32) -> (i32, i32, i32) {
    %c0_i32 = arith.constant 0 : i32
    %c0_i32_0 = arith.constant 0 : i32
    %c0_i32_1 = arith.constant 0 : i32
    return %arg0, %c0_i32, %c0_i32_0 : i32, i32, i32
  }
  func.func @transform_2(%arg0: i32) -> (i32, i32) {
    %c0_i32 = arith.constant 0 : i32
    %c0_i32_0 = arith.constant 0 : i32
    %c0_i32_1 = arith.constant 0 : i32
    return %c0_i32, %c0_i32_0 : i32, i32
  }
  func.func @transform_3(%arg0: i32) -> (i32, i32) {
    %c0_i32 = arith.constant 0 : i32
    %c0_i32_0 = arith.constant 0 : i32
    %c0_i32_1 = arith.constant 0 : i32
    return %c0_i32, %c0_i32_0 : i32, i32
  }
  func.func @transform_4(%arg0: i32) -> (i32, i32) {
    %c0_i32 = arith.constant 0 : i32
    %c0_i32_0 = arith.constant 0 : i32
    %c0_i32_1 = arith.constant 0 : i32
    return %c0_i32, %c0_i32_0 : i32, i32
  }
  func.func @transform_5(%arg0: i32) -> (i32, i32) {
    %c0_i32 = arith.constant 0 : i32
    %c0_i32_0 = arith.constant 0 : i32
    %c0_i32_1 = arith.constant 0 : i32
    return %c0_i32, %c0_i32_0 : i32, i32
  }
  func.func @transform_6(%arg0: i32) -> (i32, i32) {
    %c0_i32 = arith.constant 0 : i32
    %c0_i32_0 = arith.constant 0 : i32
    %c0_i32_1 = arith.constant 0 : i32
    return %c0_i32, %c0_i32_0 : i32, i32
  }
  func.func @transform_7(%arg0: i32) -> (i32, i32) {
    %c0_i32 = arith.constant 0 : i32
    %c0_i32_0 = arith.constant 0 : i32
    %c0_i32_1 = arith.constant 0 : i32
    return %c0_i32, %c0_i32_0 : i32, i32
  }
  func.func @transform_8(%arg0: i32) -> (i32, i32) {
    %c0_i32 = arith.constant 0 : i32
    %c0_i32_0 = arith.constant 0 : i32
    %c0_i32_1 = arith.constant 0 : i32
    return %c0_i32, %c0_i32_0 : i32, i32
  }
  func.func @transform_9(%arg0: i32) -> (i32, i32) {
    %c0_i32 = arith.constant 0 : i32
    %c0_i32_0 = arith.constant 0 : i32
    %c0_i32_1 = arith.constant 0 : i32
    return %c0_i32, %c0_i32_0 : i32, i32
  }
  func.func @transform_10(%arg0: i32) -> (i32, i32) {
    %c0_i32 = arith.constant 0 : i32
    %c0_i32_0 = arith.constant 0 : i32
    %c0_i32_1 = arith.constant 0 : i32
    return %c0_i32, %c0_i32_0 : i32, i32
  }
  func.func @transform_11(%arg0: i32) -> (i32, i32, i32) {
    %c0_i32 = arith.constant 0 : i32
    %c0_i32_0 = arith.constant 0 : i32
    %c0_i32_1 = arith.constant 0 : i32
    %c0_i32_2 = arith.constant 0 : i32
    return %c0_i32, %c0_i32_0, %c0_i32_1 : i32, i32, i32
  }
  func.func @transform_12(%arg0: i32) -> (i32, i32, i32) {
    %c0_i32 = arith.constant 0 : i32
    %c0_i32_0 = arith.constant 0 : i32
    %c0_i32_1 = arith.constant 0 : i32
    %c0_i32_2 = arith.constant 0 : i32
    return %c0_i32, %c0_i32_0, %c0_i32_1 : i32, i32, i32
  }
  func.func @transform_13(%arg0: i32) -> (i32, i32, i32) {
    %c0_i32 = arith.constant 0 : i32
    %c0_i32_0 = arith.constant 0 : i32
    %c0_i32_1 = arith.constant 0 : i32
    %c0_i32_2 = arith.constant 0 : i32
    return %c0_i32, %c0_i32_0, %c0_i32_1 : i32, i32, i32
  }
  func.func @transform_14(%arg0: i32) -> (i32, i32, i32) {
    %c0_i32 = arith.constant 0 : i32
    %c0_i32_0 = arith.constant 0 : i32
    %c0_i32_1 = arith.constant 0 : i32
    %c0_i32_2 = arith.constant 0 : i32
    return %c0_i32, %c0_i32_0, %c0_i32_1 : i32, i32, i32
  }
  func.func @transform_15(%arg0: i32) -> (i32, i32, i32) {
    %c0_i32 = arith.constant 0 : i32
    %c0_i32_0 = arith.constant 0 : i32
    %c0_i32_1 = arith.constant 0 : i32
    %c0_i32_2 = arith.constant 0 : i32
    return %c0_i32, %c0_i32_0, %c0_i32_1 : i32, i32, i32
  }
  func.func @transform_16(%arg0: i32) -> (i32, i32, i32) {
    %c0_i32 = arith.constant 0 : i32
    %c0_i32_0 = arith.constant 0 : i32
    %c0_i32_1 = arith.constant 0 : i32
    %c0_i32_2 = arith.constant 0 : i32
    return %c0_i32, %c0_i32_0, %c0_i32_1 : i32, i32, i32
  }
  func.func @transform_17(%arg0: i32) -> (i32, i32, i32) {
    %c0_i32 = arith.constant 0 : i32
    %c0_i32_0 = arith.constant 0 : i32
    %c0_i32_1 = arith.constant 0 : i32
    %c0_i32_2 = arith.constant 0 : i32
    return %c0_i32, %c0_i32_0, %c0_i32_1 : i32, i32, i32
  }
  func.func @transform_18(%arg0: i32) -> (i32, i32, i32) {
    %c0_i32 = arith.constant 0 : i32
    %c0_i32_0 = arith.constant 0 : i32
    %c0_i32_1 = arith.constant 0 : i32
    %c0_i32_2 = arith.constant 0 : i32
    return %c0_i32, %c0_i32_0, %c0_i32_1 : i32, i32, i32
  }
  func.func @transform_19(%arg0: i32) -> (i32, i32, i32) {
    %c0_i32 = arith.constant 0 : i32
    %c0_i32_0 = arith.constant 0 : i32
    %c0_i32_1 = arith.constant 0 : i32
    %c0_i32_2 = arith.constant 0 : i32
    return %c0_i32, %c0_i32_0, %c0_i32_1 : i32, i32, i32
  }
  func.func @transform_20(%arg0: i32) -> (i32, i32, i32) {
    %c0_i32 = arith.constant 0 : i32
    %c0_i32_0 = arith.constant 0 : i32
    %c0_i32_1 = arith.constant 0 : i32
    %c0_i32_2 = arith.constant 0 : i32
    return %c0_i32, %c0_i32_0, %c0_i32_1 : i32, i32, i32
  }
  func.func @transform_21(%arg0: i32) -> (i32, i32, i32) {
    %c0_i32 = arith.constant 0 : i32
    %c0_i32_0 = arith.constant 0 : i32
    %c0_i32_1 = arith.constant 0 : i32
    %c0_i32_2 = arith.constant 0 : i32
    return %c0_i32, %c0_i32_0, %c0_i32_1 : i32, i32, i32
  }
  func.func @transform_22(%arg0: i32) -> (i32, i32, i32) {
    %c0_i32 = arith.constant 0 : i32
    %c0_i32_0 = arith.constant 0 : i32
    %c0_i32_1 = arith.constant 0 : i32
    %c0_i32_2 = arith.constant 0 : i32
    return %c0_i32, %c0_i32_0, %c0_i32_1 : i32, i32, i32
  }
  func.func @transform_23(%arg0: i32) -> (i32, i32) {
    %c0_i32 = arith.constant 0 : i32
    %c0_i32_0 = arith.constant 0 : i32
    %c0_i32_1 = arith.constant 0 : i32
    return %c0_i32, %c0_i32_0 : i32, i32
  }
  func.func @transform_24(%arg0: i32) -> (i32, i32) {
    %c0_i32 = arith.constant 0 : i32
    %c0_i32_0 = arith.constant 0 : i32
    %c0_i32_1 = arith.constant 0 : i32
    return %c0_i32, %c0_i32_0 : i32, i32
  }
  func.func @transform_25(%arg0: i32) -> (i32, i32) {
    %c0_i32 = arith.constant 0 : i32
    %c0_i32_0 = arith.constant 0 : i32
    %c0_i32_1 = arith.constant 0 : i32
    return %c0_i32, %c0_i32_0 : i32, i32
  }
  func.func @transform_26(%arg0: i32) -> (i32, i32) {
    %c0_i32 = arith.constant 0 : i32
    %c0_i32_0 = arith.constant 0 : i32
    %c0_i32_1 = arith.constant 0 : i32
    return %c0_i32, %c0_i32_0 : i32, i32
  }
  func.func @transform_27(%arg0: i32) -> (i32, i32) {
    %c0_i32 = arith.constant 0 : i32
    %c0_i32_0 = arith.constant 0 : i32
    %c0_i32_1 = arith.constant 0 : i32
    return %c0_i32, %c0_i32_0 : i32, i32
  }
  func.func @transform_28(%arg0: i32) -> (i32, i32) {
    %c0_i32 = arith.constant 0 : i32
    %c0_i32_0 = arith.constant 0 : i32
    %c0_i32_1 = arith.constant 0 : i32
    return %c0_i32, %c0_i32_0 : i32, i32
  }
  func.func @transform_29(%arg0: i32) -> (i32, i32, i32) {
    %c0_i32 = arith.constant 0 : i32
    %c0_i32_0 = arith.constant 0 : i32
    %c0_i32_1 = arith.constant 0 : i32
    return %arg0, %c0_i32, %c0_i32_0 : i32, i32, i32
  }
}

</mosaic_0001>

<llo_original>
// kernel: forward.1
$region0: #{forward.1}
  #allocation0 [shape = 'u32[]', space=smem, size = 0x4, offset = 0x4, fixed_abs, tag = 'smem constant byte address 0x4 - core index']
  #allocation1 [shape = 'u32[144,128]{1,0:T(1,128)}', space=vmem, size = 0x12000, scoped, tag = 'internal scratch']
  %s0 = inlined_call_operand.smem [shape: u32[30], index: -1, kind: input, shape index: {}]
  %s1 = sld [smem:[%s0]]
  %s2 = scalar_lea.smem %s0, 1
  %s3 = sld [smem:[%s2]]
  %s4 = scalar_lea.smem %s0, 2
  %s5 = sld [smem:[%s4]]
  %s6 = scalar_lea.smem %s0, 3
  %s7 = sld [smem:[%s6]]
  %s8 = scalar_lea.smem %s0, 4
  %s9 = sld [smem:[%s8]]
  %s10 = scalar_lea.smem %s0, 5
  %s11 = sld [smem:[%s10]]
  %s12 = scalar_lea.smem %s0, 6
  %s13 = sld [smem:[%s12]]
  %s14 = scalar_lea.smem %s0, 7
  %s15 = sld [smem:[%s14]]
  %s16 = scalar_lea.smem %s0, 8
  %s17 = sld [smem:[%s16]]
  %s18 = scalar_lea.smem %s0, 9
  %s19 = sld [smem:[%s18]]
  %s20 = scalar_lea.smem %s0, 10
  %s21 = sld [smem:[%s20]]
  %s22 = scalar_lea.smem %s0, 11
  %s23 = sld [smem:[%s22]]
  %s24 = scalar_lea.smem %s0, 12
  %s25 = sld [smem:[%s24]]
  %s26 = scalar_lea.smem %s0, 13
  %s27 = sld [smem:[%s26]]
  %s28 = scalar_lea.smem %s0, 14
  %s29 = sld [smem:[%s28]]
  %s30 = scalar_lea.smem %s0, 15
  %s31 = sld [smem:[%s30]]
  %s32 = scalar_lea.smem %s0, 16
  %s33 = sld [smem:[%s32]]
  %s34 = scalar_lea.smem %s0, 17
  %s35 = sld [smem:[%s34]]
  %s36 = scalar_lea.smem %s0, 18
  %s37 = sld [smem:[%s36]]
  %s38 = scalar_lea.smem %s0, 19
  %s39 = sld [smem:[%s38]]
  %s40 = scalar_lea.smem %s0, 20
  %s41 = sld [smem:[%s40]]
  %s42 = scalar_lea.smem %s0, 21
  %s43 = sld [smem:[%s42]]
  %s44 = scalar_lea.smem %s0, 22
  %s45 = sld [smem:[%s44]]
  %s46 = scalar_lea.smem %s0, 23
  %s47 = sld [smem:[%s46]]
  %s48 = scalar_lea.smem %s0, 24
  %s49 = sld [smem:[%s48]]
  %s50 = scalar_lea.smem %s0, 25
  %s51 = sld [smem:[%s50]]
  %s52 = scalar_lea.smem %s0, 26
  %s53 = sld [smem:[%s52]]
  %s54 = scalar_lea.smem %s0, 27
  %s55 = sld [smem:[%s54]]
  %s56 = scalar_lea.smem %s0, 28
  %s57 = sld [smem:[%s56]]
  %s58 = scalar_lea.smem %s0, 29
  %s59 = sld [smem:[%s58]]
  %s60 = sld [smem:[#allocation0]]
  $region202: #{forward.1} parent=0
    _
  %s62 = ssub.s32 1, %s60
  %s63 = scalar_select 0, %s62, %s60
  $region1: #{forward.1} parent=0
    #allocation2 [shape = 'u8[1024]{0}', space=vmem, size = 0x400, scoped, tag = 'input window, operand 2, single buffered']
    #allocation3 [shape = 's32[1]{0}', space=sflag, size = 0x4, scoped, tag = 'scoped memory for forward.1']
    #allocation4 [shape = 'u8[61440]{0}', space=vmem, size = 0xf000, scoped, tag = 'input window, operand 3, single buffered']
    #allocation5 [shape = 's32[1]{0}', space=sflag, size = 0x4, scoped, tag = 'scoped memory for forward.1']
    #allocation6 [shape = 'u8[1024]{0}', space=vmem, size = 0x400, scoped, tag = 'input window, operand 6, single buffered']
    #allocation7 [shape = 'u8[131072]{0}', space=vmem, size = 0x20000, scoped, tag = 'input window, operand 7, single buffered']
    #allocation8 [shape = 's32[1]{0}', space=sflag, size = 0x4, scoped, tag = 'scoped memory for forward.1']
    #allocation9 [shape = 'u8[1024]{0}', space=vmem, size = 0x400, scoped, tag = 'input window, operand 8, single buffered']
    #allocation10 [shape = 'u8[131072]{0}', space=vmem, size = 0x20000, scoped, tag = 'input window, operand 9, single buffered']
    #allocation11 [shape = 's32[1]{0}', space=sflag, size = 0x4, scoped, tag = 'scoped memory for forward.1']
    #allocation12 [shape = 'u8[1024]{0}', space=vmem, size = 0x400, scoped, tag = 'input window, operand 10, single buffered']
    #allocation13 [shape = 'u8[786432]{0}', space=vmem, size = 0xc0000, scoped, tag = 'input window, operand 11, single buffered']
    #allocation14 [shape = 's32[1]{0}', space=sflag, size = 0x4, scoped, tag = 'scoped memory for forward.1']
    #allocation15 [shape = 'u8[2048]{0}', space=vmem, size = 0x800, scoped, tag = 'input window, operand 14, single buffered']
    #allocation16 [shape = 'u8[2048]{0}', space=vmem, size = 0x800, scoped, tag = 'input window, operand 15, single buffered']
    #allocation17 [shape = 's32[1]{0}', space=sflag, size = 0x4, scoped, tag = 'scoped memory for forward.1']
    #allocation18 [shape = 'u8[2048]{0}', space=vmem, size = 0x800, scoped, tag = 'input window, operand 16, single buffered']
    #allocation19 [shape = 'u8[1024]{0}', space=vmem, size = 0x400, scoped, tag = 'input window, operand 18, single buffered']
    #allocation20 [shape = 's32[1]{0}', space=sflag, size = 0x4, scoped, tag = 'scoped memory for forward.1']
    #allocation21 [shape = 'u8[2048]{0}', space=vmem, size = 0x800, scoped, tag = 'input window, operand 20, single buffered']
    #allocation22 [shape = 'u8[2048]{0}', space=vmem, size = 0x800, scoped, tag = 'input window, operand 21, single buffered']
    #allocation23 [shape = 's32[1]{0}', space=sflag, size = 0x4, scoped, tag = 'scoped memory for forward.1']
    #allocation24 [shape = 'u8[2048]{0}', space=vmem, size = 0x800, scoped, tag = 'input window, operand 22, single buffered']
    #allocation25 [shape = 'u8[65536]{0}', space=vmem, size = 0x10000, scoped, tag = 'input window, operand 23, single buffered']
    #allocation26 [shape = 's32[1]{0}', space=sflag, size = 0x4, scoped, tag = 'scoped memory for forward.1']
    #allocation27 [shape = 'u8[512]{0}', space=vmem, size = 0x400, scoped, tag = 'input window, operand 24, single buffered']
    #allocation28 [shape = 'u8[512]{0}', space=vmem, size = 0x400, scoped, tag = 'input window, operand 26, single buffered']
    #allocation29 [shape = 's32[1]{0}', space=sflag, size = 0x4, scoped, tag = 'scoped memory for forward.1']
    #allocation30 [shape = 'u8[512]{0}', space=vmem, size = 0x400, scoped, tag = 'input window, operand 28, single buffered']
    %64 = vsyncpa [#allocation3], 0
    %65 = vsyncpa [#allocation5], 0
    %66 = vsyncpa [#allocation8], 0
    %67 = vsyncpa [#allocation11], 0
    %68 = vsyncpa [#allocation14], 0
    %69 = vsyncpa [#allocation17], 0
    %70 = vsyncpa [#allocation20], 0
    %71 = vsyncpa [#allocation23], 0
    %72 = vsyncpa [#allocation26], 0
    %73 = vsyncpa [#allocation29], 0
    // Predicated region
    $region2: #{forward.1} parent=1 // pred_check
      _
    $region3: #{forward.1} parent=1 // pred_check_branch
      %75 = sbr.rel (0) target = $region5
    $region4: #{forward.1} parent=1 // pred_region
      _
    $region5: #{forward.1} parent=1 // pred_fallthru
      _
    // Predicated region
    $region6: #{forward.1} parent=1 // pred_check
      _
    $region7: #{forward.1} parent=1 // pred_check_branch
      %77 = sbr.rel (0) target = $region9
    $region8: #{forward.1} parent=1 // pred_region
      _
    $region9: #{forward.1} parent=1 // pred_fallthru
      _
    // Predicated region
    $region10: #{forward.1} parent=1 // pred_check
      _
    $region11: #{forward.1} parent=1 // pred_check_branch
      %79 = sbr.rel (0) target = $region13
    $region12: #{forward.1} parent=1 // pred_region
      %s81 = ssub.s32 32, 32
      %82 = vsyncadd [#allocation3], %s81
      %s84 = sshll.u32 [#allocation2], 4
      %s85 = int_to_ptr.vmem [resolvable:$true] %s84
      %87 = dma.hbm_to_vmem [thread:$0]  %s5, 32, %s85, [#allocation3]
    $region13: #{forward.1} parent=1 // pred_fallthru
      _
    // Predicated region
    $region14: #{forward.1} parent=1 // pred_check
      _
    $region15: #{forward.1} parent=1 // pred_check_branch
      %89 = sbr.rel (0) target = $region17
    $region16: #{forward.1} parent=1 // pred_region
      %s91 = ssub.s32 1920, 1920
      %92 = vsyncadd [#allocation5], %s91
      %s93 = sshll.u32 [#allocation4], 4
      %s94 = int_to_ptr.vmem [resolvable:$true] %s93
      %99 = dma.hbm_to_vmem [thread:$0]  %s7, 1920, %s94, [#allocation5], 640, 640, 40
    $region17: #{forward.1} parent=1 // pred_fallthru
      _
    // Predicated region
    $region18: #{forward.1} parent=1 // pred_check
      _
    $region19: #{forward.1} parent=1 // pred_check_branch
      %101 = sbr.rel (0) target = $region21
    $region20: #{forward.1} parent=1 // pred_region
      _
    $region21: #{forward.1} parent=1 // pred_fallthru
      _
    // Predicated region
    $region22: #{forward.1} parent=1 // pred_check
      _
    $region23: #{forward.1} parent=1 // pred_check_branch
      %103 = sbr.rel (0) target = $region25
    $region24: #{forward.1} parent=1 // pred_region
      _
    $region25: #{forward.1} parent=1 // pred_fallthru
      _
    // Predicated region
    $region26: #{forward.1} parent=1 // pred_check
      _
    $region27: #{forward.1} parent=1 // pred_check_branch
      %105 = sbr.rel (0) target = $region29
    $region28: #{forward.1} parent=1 // pred_region
      %s107 = ssub.s32 32, 32
      %108 = vsyncadd [#allocation5], %s107
      %s110 = sshll.u32 [#allocation6], 4
      %s111 = int_to_ptr.vmem [resolvable:$true] %s110
      %113 = dma.hbm_to_vmem [thread:$0]  %s13, 32, %s111, [#allocation5]
    $region29: #{forward.1} parent=1 // pred_fallthru
      _
    // Predicated region
    $region30: #{forward.1} parent=1 // pred_check
      _
    $region31: #{forward.1} parent=1 // pred_check_branch
      %115 = sbr.rel (0) target = $region33
    $region32: #{forward.1} parent=1 // pred_region
      %s117 = ssub.s32 4096, 4096
      %118 = vsyncadd [#allocation8], %s117
      %s119 = sshll.u32 [#allocation7], 4
      %s120 = int_to_ptr.vmem [resolvable:$true] %s119
      %125 = dma.hbm_to_vmem [thread:$0]  %s15, 4096, %s120, [#allocation8], 128, 128, 8
    $region33: #{forward.1} parent=1 // pred_fallthru
      _
    // Predicated region
    $region34: #{forward.1} parent=1 // pred_check
      _
    $region35: #{forward.1} parent=1 // pred_check_branch
      %127 = sbr.rel (0) target = $region37
    $region36: #{forward.1} parent=1 // pred_region
      %s129 = ssub.s32 32, 32
      %130 = vsyncadd [#allocation8], %s129
      %s132 = sshll.u32 [#allocation9], 4
      %s133 = int_to_ptr.vmem [resolvable:$true] %s132
      %135 = dma.hbm_to_vmem [thread:$0]  %s17, 32, %s133, [#allocation8]
    $region37: #{forward.1} parent=1 // pred_fallthru
      _
    // Predicated region
    $region38: #{forward.1} parent=1 // pred_check
      _
    $region39: #{forward.1} parent=1 // pred_check_branch
      %137 = sbr.rel (0) target = $region41
    $region40: #{forward.1} parent=1 // pred_region
      %s139 = ssub.s32 4096, 4096
      %140 = vsyncadd [#allocation11], %s139
      %s141 = sshll.u32 [#allocation10], 4
      %s142 = int_to_ptr.vmem [resolvable:$true] %s141
      %147 = dma.hbm_to_vmem [thread:$0]  %s19, 4096, %s142, [#allocation11], 128, 128, 8
    $region41: #{forward.1} parent=1 // pred_fallthru
      _
    // Predicated region
    $region42: #{forward.1} parent=1 // pred_check
      _
    $region43: #{forward.1} parent=1 // pred_check_branch
      %149 = sbr.rel (0) target = $region45
    $region44: #{forward.1} parent=1 // pred_region
      %s151 = ssub.s32 32, 32
      %152 = vsyncadd [#allocation11], %s151
      %s154 = sshll.u32 [#allocation12], 4
      %s155 = int_to_ptr.vmem [resolvable:$true] %s154
      %157 = dma.hbm_to_vmem [thread:$0]  %s21, 32, %s155, [#allocation11]
    $region45: #{forward.1} parent=1 // pred_fallthru
      _
    // Predicated region
    $region46: #{forward.1} parent=1 // pred_check
      _
    $region47: #{forward.1} parent=1 // pred_check_branch
      %159 = sbr.rel (0) target = $region49
    $region48: #{forward.1} parent=1 // pred_region
      %s161 = ssub.s32 24576, 24576
      %162 = vsyncadd [#allocation14], %s161
      %s163 = sshll.u32 [#allocation13], 4
      %s164 = int_to_ptr.vmem [resolvable:$true] %s163
      %169 = dma.hbm_to_vmem [thread:$0]  %s23, 24576, %s164, [#allocation14], 384, 384, 24
    $region49: #{forward.1} parent=1 // pred_fallthru
      _
    // Predicated region
    $region50: #{forward.1} parent=1 // pred_check
      _
    $region51: #{forward.1} parent=1 // pred_check_branch
      %171 = sbr.rel (0) target = $region53
    $region52: #{forward.1} parent=1 // pred_region
      _
    $region53: #{forward.1} parent=1 // pred_fallthru
      _
    // Predicated region
    $region54: #{forward.1} parent=1 // pred_check
      _
    $region55: #{forward.1} parent=1 // pred_check_branch
      %173 = sbr.rel (0) target = $region57
    $region56: #{forward.1} parent=1 // pred_region
      _
    $region57: #{forward.1} parent=1 // pred_fallthru
      _
    // Predicated region
    $region58: #{forward.1} parent=1 // pred_check
      _
    $region59: #{forward.1} parent=1 // pred_check_branch
      %175 = sbr.rel (0) target = $region61
    $region60: #{forward.1} parent=1 // pred_region
      %s177 = ssub.s32 64, 64
      %178 = vsyncadd [#allocation14], %s177
      %s179 = sshll.u32 [#allocation15], 4
      %s180 = int_to_ptr.vmem [resolvable:$true] %s179
      %185 = dma.hbm_to_vmem [thread:$0]  %s29, 64, %s180, [#allocation14], 32, 32, 2
    $region61: #{forward.1} parent=1 // pred_fallthru
      _
    // Predicated region
    $region62: #{forward.1} parent=1 // pred_check
      _
    $region63: #{forward.1} parent=1 // pred_check_branch
      %187 = sbr.rel (0) target = $region65
    $region64: #{forward.1} parent=1 // pred_region
      %s189 = ssub.s32 64, 64
      %190 = vsyncadd [#allocation17], %s189
      %s191 = sshll.u32 [#allocation16], 4
      %s192 = int_to_ptr.vmem [resolvable:$true] %s191
      %197 = dma.hbm_to_vmem [thread:$0]  %s31, 64, %s192, [#allocation17], 32, 32, 2
    $region65: #{forward.1} parent=1 // pred_fallthru
      _
    // Predicated region
    $region66: #{forward.1} parent=1 // pred_check
      _
    $region67: #{forward.1} parent=1 // pred_check_branch
      %199 = sbr.rel (0) target = $region69
    $region68: #{forward.1} parent=1 // pred_region
      %s201 = ssub.s32 64, 64
      %202 = vsyncadd [#allocation17], %s201
      %s203 = sshll.u32 [#allocation18], 4
      %s204 = int_to_ptr.vmem [resolvable:$true] %s203
      %209 = dma.hbm_to_vmem [thread:$0]  %s33, 64, %s204, [#allocation17], 32, 32, 2
    $region69: #{forward.1} parent=1 // pred_fallthru
      _
    // Predicated region
    $region70: #{forward.1} parent=1 // pred_check
      _
    $region71: #{forward.1} parent=1 // pred_check_branch
      %211 = sbr.rel (0) target = $region73
    $region72: #{forward.1} parent=1 // pred_region
      _
    $region73: #{forward.1} parent=1 // pred_fallthru
      _
    // Predicated region
    $region74: #{forward.1} parent=1 // pred_check
      _
    $region75: #{forward.1} parent=1 // pred_check_branch
      %213 = sbr.rel (0) target = $region77
    $region76: #{forward.1} parent=1 // pred_region
      %s215 = ssub.s32 32, 32
      %216 = vsyncadd [#allocation20], %s215
      %s217 = sshll.u32 [#allocation19], 4
      %s218 = int_to_ptr.vmem [resolvable:$true] %s217
      %223 = dma.hbm_to_vmem [thread:$0]  %s37, 32, %s218, [#allocation20], 16, 16, 1
    $region77: #{forward.1} parent=1 // pred_fallthru
      _
    // Predicated region
    $region78: #{forward.1} parent=1 // pred_check
      _
    $region79: #{forward.1} parent=1 // pred_check_branch
      %225 = sbr.rel (0) target = $region81
    $region80: #{forward.1} parent=1 // pred_region
      _
    $region81: #{forward.1} parent=1 // pred_fallthru
      _
    // Predicated region
    $region82: #{forward.1} parent=1 // pred_check
      _
    $region83: #{forward.1} parent=1 // pred_check_branch
      %227 = sbr.rel (0) target = $region85
    $region84: #{forward.1} parent=1 // pred_region
      %s229 = ssub.s32 64, 64
      %230 = vsyncadd [#allocation20], %s229
      %s231 = sshll.u32 [#allocation21], 4
      %s232 = int_to_ptr.vmem [resolvable:$true] %s231
      %237 = dma.hbm_to_vmem [thread:$0]  %s41, 64, %s232, [#allocation20], 32, 32, 2
    $region85: #{forward.1} parent=1 // pred_fallthru
      _
    // Predicated region
    $region86: #{forward.1} parent=1 // pred_check
      _
    $region87: #{forward.1} parent=1 // pred_check_branch
      %239 = sbr.rel (0) target = $region89
    $region88: #{forward.1} parent=1 // pred_region
      %s241 = ssub.s32 64, 64
      %242 = vsyncadd [#allocation23], %s241
      %s243 = sshll.u32 [#allocation22], 4
      %s244 = int_to_ptr.vmem [resolvable:$true] %s243
      %249 = dma.hbm_to_vmem [thread:$0]  %s43, 64, %s244, [#allocation23], 32, 32, 2
    $region89: #{forward.1} parent=1 // pred_fallthru
      _
    // Predicated region
    $region90: #{forward.1} parent=1 // pred_check
      _
    $region91: #{forward.1} parent=1 // pred_check_branch
      %251 = sbr.rel (0) target = $region93
    $region92: #{forward.1} parent=1 // pred_region
      %s253 = ssub.s32 64, 64
      %254 = vsyncadd [#allocation23], %s253
      %s255 = sshll.u32 [#allocation24], 4
      %s256 = int_to_ptr.vmem [resolvable:$true] %s255
      %261 = dma.hbm_to_vmem [thread:$0]  %s45, 64, %s256, [#allocation23], 32, 32, 2
    $region93: #{forward.1} parent=1 // pred_fallthru
      _
    // Predicated region
    $region94: #{forward.1} parent=1 // pred_check
      _
    $region95: #{forward.1} parent=1 // pred_check_branch
      %263 = sbr.rel (0) target = $region97
    $region96: #{forward.1} parent=1 // pred_region
      %s265 = ssub.s32 2048, 2048
      %266 = vsyncadd [#allocation26], %s265
      %s267 = sshll.u32 [#allocation25], 4
      %s268 = int_to_ptr.vmem [resolvable:$true] %s267
      %273 = dma.hbm_to_vmem [thread:$0]  %s47, 2048, %s268, [#allocation26], 64, 64, 4
    $region97: #{forward.1} parent=1 // pred_fallthru
      _
    // Predicated region
    $region98: #{forward.1} parent=1 // pred_check
      _
    $region99: #{forward.1} parent=1 // pred_check_branch
      %275 = sbr.rel (0) target = $region101
    $region100: #{forward.1} parent=1 // pred_region
      %s277 = ssub.s32 16, 16
      %278 = vsyncadd [#allocation26], %s277
      %s280 = sshll.u32 [#allocation27], 4
      %s281 = int_to_ptr.vmem [resolvable:$true] %s280
      %283 = dma.hbm_to_vmem [thread:$0]  %s49, 16, %s281, [#allocation26]
    $region101: #{forward.1} parent=1 // pred_fallthru
      _
    // Predicated region
    $region102: #{forward.1} parent=1 // pred_check
      _
    $region103: #{forward.1} parent=1 // pred_check_branch
      %285 = sbr.rel (0) target = $region105
    $region104: #{forward.1} parent=1 // pred_region
      _
    $region105: #{forward.1} parent=1 // pred_fallthru
      _
    // Predicated region
    $region106: #{forward.1} parent=1 // pred_check
      _
    $region107: #{forward.1} parent=1 // pred_check_branch
      %287 = sbr.rel (0) target = $region109
    $region108: #{forward.1} parent=1 // pred_region
      %s289 = ssub.s32 16, 16
      %290 = vsyncadd [#allocation29], %s289
      %s292 = sshll.u32 [#allocation28], 4
      %s293 = int_to_ptr.vmem [resolvable:$true] %s292
      %295 = dma.hbm_to_vmem [thread:$0]  %s53, 16, %s293, [#allocation29]
    $region109: #{forward.1} parent=1 // pred_fallthru
      _
    // Predicated region
    $region110: #{forward.1} parent=1 // pred_check
      _
    $region111: #{forward.1} parent=1 // pred_check_branch
      %297 = sbr.rel (0) target = $region113
    $region112: #{forward.1} parent=1 // pred_region
      _
    $region113: #{forward.1} parent=1 // pred_fallthru
      _
    // Predicated region
    $region114: #{forward.1} parent=1 // pred_check
      _
    $region115: #{forward.1} parent=1 // pred_check_branch
      %299 = sbr.rel (0) target = $region117
    $region116: #{forward.1} parent=1 // pred_region
      %s301 = ssub.s32 16, 16
      %302 = vsyncadd [#allocation29], %s301
      %s304 = sshll.u32 [#allocation30], 4
      %s305 = int_to_ptr.vmem [resolvable:$true] %s304
      %307 = dma.hbm_to_vmem [thread:$0]  %s57, 16, %s305, [#allocation29]
    $region117: #{forward.1} parent=1 // pred_fallthru
      _
    // Predicated region
    $region118: #{forward.1} parent=1 // pred_check
      _
    $region119: #{forward.1} parent=1 // pred_check_branch
      %309 = sbr.rel (0) target = $region121
    $region120: #{forward.1} parent=1 // pred_region
      %310 = dma.done [#allocation3], 32
    $region121: #{forward.1} parent=1 // pred_fallthru
      _
    // Predicated region
    $region122: #{forward.1} parent=1 // pred_check
      _
    $region123: #{forward.1} parent=1 // pred_check_branch
      %312 = sbr.rel (0) target = $region125
    $region124: #{forward.1} parent=1 // pred_region
      %313 = dma.done [#allocation5], 1920
    $region125: #{forward.1} parent=1 // pred_fallthru
      _
    // Predicated region
    $region126: #{forward.1} parent=1 // pred_check
      _
    $region127: #{forward.1} parent=1 // pred_check_branch
      %315 = sbr.rel (0) target = $region129
    $region128: #{forward.1} parent=1 // pred_region
      %316 = dma.done [#allocation5], 32
    $region129: #{forward.1} parent=1 // pred_fallthru
      _
    // Predicated region
    $region130: #{forward.1} parent=1 // pred_check
      _
    $region131: #{forward.1} parent=1 // pred_check_branch
      %318 = sbr.rel (0) target = $region133
    $region132: #{forward.1} parent=1 // pred_region
      %319 = dma.done [#allocation8], 4096
    $region133: #{forward.1} parent=1 // pred_fallthru
      _
    // Predicated region
    $region134: #{forward.1} parent=1 // pred_check
      _
    $region135: #{forward.1} parent=1 // pred_check_branch
      %321 = sbr.rel (0) target = $region137
    $region136: #{forward.1} parent=1 // pred_region
      %322 = dma.done [#allocation8], 32
    $region137: #{forward.1} parent=1 // pred_fallthru
      _
    // Predicated region
    $region138: #{forward.1} parent=1 // pred_check
      _
    $region139: #{forward.1} parent=1 // pred_check_branch
      %324 = sbr.rel (0) target = $region141
    $region140: #{forward.1} parent=1 // pred_region
      %325 = dma.done [#allocation11], 4096
    $region141: #{forward.1} parent=1 // pred_fallthru
      _
    // Predicated region
    $region142: #{forward.1} parent=1 // pred_check
      _
    $region143: #{forward.1} parent=1 // pred_check_branch
      %327 = sbr.rel (0) target = $region145
    $region144: #{forward.1} parent=1 // pred_region
      %328 = dma.done [#allocation11], 32
    $region145: #{forward.1} parent=1 // pred_fallthru
      _
    // Predicated region
    $region146: #{forward.1} parent=1 // pred_check
      _
    $region147: #{forward.1} parent=1 // pred_check_branch
      %330 = sbr.rel (0) target = $region149
    $region148: #{forward.1} parent=1 // pred_region
      %331 = dma.done [#allocation14], 24576
    $region149: #{forward.1} parent=1 // pred_fallthru
      _
    // Predicated region
    $region150: #{forward.1} parent=1 // pred_check
      _
    $region151: #{forward.1} parent=1 // pred_check_branch
      %333 = sbr.rel (0) target = $region153
    $region152: #{forward.1} parent=1 // pred_region
      %334 = dma.done [#allocation14], 64
    $region153: #{forward.1} parent=1 // pred_fallthru
      _
    // Predicated region
    $region154: #{forward.1} parent=1 // pred_check
      _
    $region155: #{forward.1} parent=1 // pred_check_branch
      %336 = sbr.rel (0) target = $region157
    $region156: #{forward.1} parent=1 // pred_region
      %337 = dma.done [#allocation17], 64
    $region157: #{forward.1} parent=1 // pred_fallthru
      _
    // Predicated region
    $region158: #{forward.1} parent=1 // pred_check
      _
    $region159: #{forward.1} parent=1 // pred_check_branch
      %339 = sbr.rel (0) target = $region161
    $region160: #{forward.1} parent=1 // pred_region
      %340 = dma.done [#allocation17], 64
    $region161: #{forward.1} parent=1 // pred_fallthru
      _
    // Predicated region
    $region162: #{forward.1} parent=1 // pred_check
      _
    $region163: #{forward.1} parent=1 // pred_check_branch
      %342 = sbr.rel (0) target = $region165
    $region164: #{forward.1} parent=1 // pred_region
      %343 = dma.done [#allocation20], 32
    $region165: #{forward.1} parent=1 // pred_fallthru
      _
    // Predicated region
    $region166: #{forward.1} parent=1 // pred_check
      _
    $region167: #{forward.1} parent=1 // pred_check_branch
      %345 = sbr.rel (0) target = $region169
    $region168: #{forward.1} parent=1 // pred_region
      %346 = dma.done [#allocation20], 64
    $region169: #{forward.1} parent=1 // pred_fallthru
      _
    // Predicated region
    $region170: #{forward.1} parent=1 // pred_check
      _
    $region171: #{forward.1} parent=1 // pred_check_branch
      %348 = sbr.rel (0) target = $region173
    $region172: #{forward.1} parent=1 // pred_region
      %349 = dma.done [#allocation23], 64
    $region173: #{forward.1} parent=1 // pred_fallthru
      _
    // Predicated region
    $region174: #{forward.1} parent=1 // pred_check
      _
    $region175: #{forward.1} parent=1 // pred_check_branch
      %351 = sbr.rel (0) target = $region177
    $region176: #{forward.1} parent=1 // pred_region
      %352 = dma.done [#allocation23], 64
    $region177: #{forward.1} parent=1 // pred_fallthru
      _
    // Predicated region
    $region178: #{forward.1} parent=1 // pred_check
      _
    $region179: #{forward.1} parent=1 // pred_check_branch
      %354 = sbr.rel (0) target = $region181
    $region180: #{forward.1} parent=1 // pred_region
      %355 = dma.done [#allocation26], 2048
    $region181: #{forward.1} parent=1 // pred_fallthru
      _
    // Predicated region
    $region182: #{forward.1} parent=1 // pred_check
      _
    $region183: #{forward.1} parent=1 // pred_check_branch
      %357 = sbr.rel (0) target = $region185
    $region184: #{forward.1} parent=1 // pred_region
      %358 = dma.done [#allocation26], 16
    $region185: #{forward.1} parent=1 // pred_fallthru
      _
    // Predicated region
    $region186: #{forward.1} parent=1 // pred_check
      _
    $region187: #{forward.1} parent=1 // pred_check_branch
      %360 = sbr.rel (0) target = $region189
    $region188: #{forward.1} parent=1 // pred_region
      %361 = dma.done [#allocation29], 16
    $region189: #{forward.1} parent=1 // pred_fallthru
      _
    // Predicated region
    $region190: #{forward.1} parent=1 // pred_check
      _
    $region191: #{forward.1} parent=1 // pred_check_branch
      %363 = sbr.rel (0) target = $region193
    $region192: #{forward.1} parent=1 // pred_region
      %364 = dma.done [#allocation29], 16
    $region193: #{forward.1} parent=1 // pred_fallthru
      _
    %v366 = vld [vmem:[%s1] sm:$0xff]
    %v367 = vld [vmem:[#allocation4] sm:$0xff]
    %v368 = vld [vmem:[#allocation4 + $0x8] sm:$0xff]
    %v369 = vld [vmem:[#allocation4 + $0x10] sm:$0xff]
    %v370 = vld [vmem:[#allocation4 + $0x18] sm:$0xff]
    %v371 = vld [vmem:[#allocation4 + $0x20] sm:$0xff]
    %v372 = vld [vmem:[#allocation4 + $0x28] sm:$0xff]
    %v373 = vld [vmem:[#allocation4 + $0x30] sm:$0xff]
    %v374 = vld [vmem:[#allocation4 + $0x38] sm:$0xff]
    %v375 = vld [vmem:[#allocation4 + $0x40] sm:$0xff]
    %v376 = vld [vmem:[#allocation4 + $0x48] sm:$0xff]
    %v377 = vld [vmem:[#allocation4 + $0x50] sm:$0xff]
    %v378 = vld [vmem:[#allocation4 + $0x58] sm:$0xff]
    %v379 = vld [vmem:[#allocation4 + $0x60] sm:$0xff]
    %v380 = vld [vmem:[#allocation4 + $0x68] sm:$0xff]
    %v381 = vld [vmem:[#allocation4 + $0x70] sm:$0xff]
    %v382 = vpack.c.bf16 %v366, %v366
    %v383 = vld [vmem:[%s9] sm:$0xff]
    %v384 = vld [vmem:[%s9 + $0x8] sm:$0x3]
    %v387 = vlaneseq
    %v388 = vshrl.u32 %v387, 7
    %v389 = vsub.s32 0, %v388
    %v390 = vrot.slane %v383, %v389
    %v391 = vlaneseq
    %v392 = vshrl.u32 %v391, 7
    %v393 = vsub.s32 1, %v392
    %v394 = vrot.slane %v383, %v393
    %v395 = vlaneseq
    %v396 = vshrl.u32 %v395, 7
    %v397 = vsub.s32 2, %v396
    %v398 = vrot.slane %v383, %v397
    %v399 = vlaneseq
    %v400 = vshrl.u32 %v399, 7
    %v401 = vsub.s32 3, %v400
    %v402 = vrot.slane %v383, %v401
    %v403 = vlaneseq
    %v404 = vshrl.u32 %v403, 7
    %v405 = vsub.s32 4, %v404
    %v406 = vrot.slane %v383, %v405
    %v407 = vlaneseq
    %v408 = vshrl.u32 %v407, 7
    %v409 = vsub.s32 5, %v408
    %v410 = vrot.slane %v383, %v409
    %v411 = vlaneseq
    %v412 = vshrl.u32 %v411, 7
    %v413 = vsub.s32 6, %v412
    %v414 = vrot.slane %v383, %v413
    %v415 = vlaneseq
    %v416 = vshrl.u32 %v415, 7
    %v417 = vsub.s32 7, %v416
    %v418 = vrot.slane %v383, %v417
    %v419 = vlaneseq
    %v420 = vshrl.u32 %v419, 7
    %v421 = vsub.s32 0, %v420
    %v422 = vrot.slane %v384, %v421
    %v423 = vlaneseq
    %v424 = vshrl.u32 %v423, 7
    %v425 = vsub.s32 1, %v424
    %v426 = vrot.slane %v384, %v425
    %v452 = vunpack.c.l.b16 %v367
    %v453 = vunpack.c.h.b16 %v367
    %v454 = vunpack.c.l.b16 %v368
    %v455 = vunpack.c.h.b16 %v368
    %v456 = vunpack.c.l.b16 %v369
    %v457 = vunpack.c.h.b16 %v369
    %v458 = vunpack.c.l.b16 %v370
    %v459 = vunpack.c.h.b16 %v370
    %v460 = vunpack.c.l.b16 %v371
    %v461 = vunpack.c.h.b16 %v371
    %v462 = vunpack.c.l.b16 %v372
    %v463 = vunpack.c.h.b16 %v372
    %v464 = vunpack.c.l.b16 %v373
    %v465 = vunpack.c.h.b16 %v373
    %v466 = vunpack.c.l.b16 %v374
    %v467 = vunpack.c.h.b16 %v374
    %v468 = vunpack.c.l.b16 %v375
    %v469 = vunpack.c.h.b16 %v375
    %v470 = vunpack.c.l.b16 %v376
    %v471 = vunpack.c.h.b16 %v376
    %v472 = vunpack.c.l.b16 %v377
    %v473 = vunpack.c.h.b16 %v377
    %v474 = vunpack.c.l.b16 %v378
    %v475 = vunpack.c.h.b16 %v378
    %v476 = vunpack.c.l.b16 %v379
    %v477 = vunpack.c.h.b16 %v379
    %v478 = vunpack.c.l.b16 %v380
    %v479 = vunpack.c.h.b16 %v380
    %v480 = vunpack.c.l.b16 %v381
    %v481 = vunpack.c.h.b16 %v381
    %v482 = vpack.c.b16 %v462, %v452
    %v483 = vpack.c.b16 %v463, %v453
    %v484 = vpack.c.b16 %v464, %v454
    %v485 = vpack.c.b16 %v465, %v455
    %v486 = vpack.c.b16 %v466, %v456
    %v487 = vpack.c.b16 %v467, %v457
    %v488 = vpack.c.b16 %v468, %v458
    %v489 = vpack.c.b16 %v469, %v459
    %v490 = vpack.c.b16 %v470, %v460
    %v491 = vpack.c.b16 %v471, %v461
    %v492 = vpack.c.b16 %v472, %v472
    %v493 = vpack.c.b16 %v473, %v473
    %v494 = vpack.c.b16 %v474, %v474
    %v495 = vpack.c.b16 %v475, %v475
    %v496 = vpack.c.b16 %v476, %v476
    %v497 = vpack.c.b16 %v477, %v477
    %v498 = vpack.c.b16 %v478, %v478
    %v499 = vpack.c.b16 %v479, %v479
    %v500 = vpack.c.b16 %v480, %v480
    %v501 = vpack.c.b16 %v481, %v481
    %vm512 = vcmask 195584
    %v514 = vsel %vm512, %v382, 0
    %vm516 = vcmask 1043456
    %v518 = vsel %vm516, %v492, 0
    %v521 = vsel %vm516, %v493, 0
    %v524 = vsel %vm516, %v494, 0
    %v527 = vsel %vm516, %v495, 0
    %v530 = vsel %vm516, %v496, 0
    %v533 = vsel %vm516, %v497, 0
    %v536 = vsel %vm516, %v498, 0
    %v539 = vsel %vm516, %v499, 0
    %v542 = vsel %vm516, %v500, 0
    %v545 = vsel %vm516, %v501, 0
    %547 = vmatprep.subr.bf16.mxu0 0
    %548 = vmatpush1.bf16.msra.mxu0 0
    %549 = vmatprep.subr.bf16.mxu0 0
    %550 = vmatpush1.bf16.msra.mxu0 0
    %551 = vmatprep.subr.bf16.mxu0 0
    %552 = vmatpush1.bf16.msra.mxu0 0
    %553 = vmatprep.subr.bf16.mxu0 0
    %554 = vmatpush1.bf16.msra.mxu0 0
    %555 = vmatprep.subr.bf16.mxu0 0
    %556 = vmatpush1.bf16.msra.mxu0 0
    %557 = vmatprep.subr.bf16.mxu0 0
    %558 = vmatpush1.bf16.msra.mxu0 0
    %559 = vmatprep.subr.bf16.mxu0 %v521
    %560 = vmatpush1.bf16.msra.mxu0 %v518
    %561 = vmatprep.subr.bf16.mxu0 %v483
    %562 = vmatpush1.bf16.msra.mxu0 %v482
    %563 = vmatprep.subr.bf16.mxu0 0
    %564 = vmatpush2.bf16.msra.mxu0 0
    %565 = vmatprep.subr.bf16.mxu0 0
    %566 = vmatpush2.bf16.msra.mxu0 0
    %567 = vmatprep.subr.bf16.mxu0 0
    %568 = vmatpush2.bf16.msra.mxu0 0
    %569 = vmatprep.subr.bf16.mxu0 0
    %570 = vmatpush2.bf16.msra.mxu0 0
    %571 = vmatprep.subr.bf16.mxu0 0
    %572 = vmatpush2.bf16.msra.mxu0 0
    %573 = vmatprep.subr.bf16.mxu0 0
    %574 = vmatpush2.bf16.msra.mxu0 0
    %575 = vmatprep.subr.bf16.mxu0 0
    %576 = vmatpush2.bf16.msra.mxu0 0
    %577 = vmatprep.subr.bf16.mxu0 0
    %578 = vmatpush2.bf16.msra.mxu0 0
    %579 = vmatprep.mubr.bf16.mxu0 0
    %580 = vmatmul.mubr.bf16.gmra.mxu0 %v514
    %v581 = vpop.f32.mrf.mxu0
    %v582 = vadd.f32 %v390, %v581
    %v583 = vpop.f32.mrf.mxu0
    %v584 = vadd.f32 %v394, %v583
    %v585 = vpop.f32.mrf.mxu0
    %v586 = vpop.f32.mrf.mxu0
    %587 = vdwg.mxu0
    %588 = vmatprep.subr.bf16.mxu0 0
    %589 = vmatpush1.bf16.msra.mxu0 0
    %590 = vmatprep.subr.bf16.mxu0 0
    %591 = vmatpush1.bf16.msra.mxu0 0
    %592 = vmatprep.subr.bf16.mxu0 0
    %593 = vmatpush1.bf16.msra.mxu0 0
    %594 = vmatprep.subr.bf16.mxu0 0
    %595 = vmatpush1.bf16.msra.mxu0 0
    %596 = vmatprep.subr.bf16.mxu0 0
    %597 = vmatpush1.bf16.msra.mxu0 0
    %598 = vmatprep.subr.bf16.mxu0 0
    %599 = vmatpush1.bf16.msra.mxu0 0
    %600 = vmatprep.subr.bf16.mxu0 %v527
    %601 = vmatpush1.bf16.msra.mxu0 %v524
    %602 = vmatprep.subr.bf16.mxu0 %v485
    %603 = vmatpush1.bf16.msra.mxu0 %v484
    %604 = vmatprep.subr.bf16.mxu0 0
    %605 = vmatpush2.bf16.msra.mxu0 0
    %606 = vmatprep.subr.bf16.mxu0 0
    %607 = vmatpush2.bf16.msra.mxu0 0
    %608 = vmatprep.subr.bf16.mxu0 0
    %609 = vmatpush2.bf16.msra.mxu0 0
    %610 = vmatprep.subr.bf16.mxu0 0
    %611 = vmatpush2.bf16.msra.mxu0 0
    %612 = vmatprep.subr.bf16.mxu0 0
    %613 = vmatpush2.bf16.msra.mxu0 0
    %614 = vmatprep.subr.bf16.mxu0 0
    %615 = vmatpush2.bf16.msra.mxu0 0
    %616 = vmatprep.subr.bf16.mxu0 0
    %617 = vmatpush2.bf16.msra.mxu0 0
    %618 = vmatprep.subr.bf16.mxu0 0
    %619 = vmatpush2.bf16.msra.mxu0 0
    %620 = vmatprep.mubr.bf16.mxu0 0
    %621 = vmatmul.mubr.bf16.gmra.mxu0 %v514
    %v622 = vpop.f32.mrf.mxu0
    %v623 = vadd.f32 %v398, %v622
    %v624 = vpop.f32.mrf.mxu0
    %v625 = vadd.f32 %v402, %v624
    %v626 = vpop.f32.mrf.mxu0
    %v627 = vpop.f32.mrf.mxu0
    %628 = vdwg.mxu0
    %629 = vmatprep.subr.bf16.mxu0 0
    %630 = vmatpush1.bf16.msra.mxu0 0
    %631 = vmatprep.subr.bf16.mxu0 0
    %632 = vmatpush1.bf16.msra.mxu0 0
    %633 = vmatprep.subr.bf16.mxu0 0
    %634 = vmatpush1.bf16.msra.mxu0 0
    %635 = vmatprep.subr.bf16.mxu0 0
    %636 = vmatpush1.bf16.msra.mxu0 0
    %637 = vmatprep.subr.bf16.mxu0 0
    %638 = vmatpush1.bf16.msra.mxu0 0
    %639 = vmatprep.subr.bf16.mxu0 0
    %640 = vmatpush1.bf16.msra.mxu0 0
    %641 = vmatprep.subr.bf16.mxu0 %v533
    %642 = vmatpush1.bf16.msra.mxu0 %v530
    %643 = vmatprep.subr.bf16.mxu0 %v487
    %644 = vmatpush1.bf16.msra.mxu0 %v486
    %645 = vmatprep.subr.bf16.mxu0 0
    %646 = vmatpush2.bf16.msra.mxu0 0
    %647 = vmatprep.subr.bf16.mxu0 0
    %648 = vmatpush2.bf16.msra.mxu0 0
    %649 = vmatprep.subr.bf16.mxu0 0
    %650 = vmatpush2.bf16.msra.mxu0 0
    %651 = vmatprep.subr.bf16.mxu0 0
    %652 = vmatpush2.bf16.msra.mxu0 0
    %653 = vmatprep.subr.bf16.mxu0 0
    %654 = vmatpush2.bf16.msra.mxu0 0
    %655 = vmatprep.subr.bf16.mxu0 0
    %656 = vmatpush2.bf16.msra.mxu0 0
    %657 = vmatprep.subr.bf16.mxu0 0
    %658 = vmatpush2.bf16.msra.mxu0 0
    %659 = vmatprep.subr.bf16.mxu0 0
    %660 = vmatpush2.bf16.msra.mxu0 0
    %661 = vmatprep.mubr.bf16.mxu0 0
    %662 = vmatmul.mubr.bf16.gmra.mxu0 %v514
    %v663 = vpop.f32.mrf.mxu0
    %v664 = vadd.f32 %v406, %v663
    %v665 = vpop.f32.mrf.mxu0
    %v666 = vadd.f32 %v410, %v665
    %v667 = vpop.f32.mrf.mxu0
    %v668 = vpop.f32.mrf.mxu0
    %669 = vdwg.mxu0
    %670 = vmatprep.subr.bf16.mxu0 0
    %671 = vmatpush1.bf16.msra.mxu0 0
    %672 = vmatprep.subr.bf16.mxu0 0
    %673 = vmatpush1.bf16.msra.mxu0 0
    %674 = vmatprep.subr.bf16.mxu0 0
    %675 = vmatpush1.bf16.msra.mxu0 0
    %676 = vmatprep.subr.bf16.mxu0 0
    %677 = vmatpush1.bf16.msra.mxu0 0
    %678 = vmatprep.subr.bf16.mxu0 0
    %679 = vmatpush1.bf16.msra.mxu0 0
    %680 = vmatprep.subr.bf16.mxu0 0
    %681 = vmatpush1.bf16.msra.mxu0 0
    %682 = vmatprep.subr.bf16.mxu0 %v539
    %683 = vmatpush1.bf16.msra.mxu0 %v536
    %684 = vmatprep.subr.bf16.mxu0 %v489
    %685 = vmatpush1.bf16.msra.mxu0 %v488
    %686 = vmatprep.subr.bf16.mxu0 0
    %687 = vmatpush2.bf16.msra.mxu0 0
    %688 = vmatprep.subr.bf16.mxu0 0
    %689 = vmatpush2.bf16.msra.mxu0 0
    %690 = vmatprep.subr.bf16.mxu0 0
    %691 = vmatpush2.bf16.msra.mxu0 0
    %692 = vmatprep.subr.bf16.mxu0 0
    %693 = vmatpush2.bf16.msra.mxu0 0
    %694 = vmatprep.subr.bf16.mxu0 0
    %695 = vmatpush2.bf16.msra.mxu0 0
    %696 = vmatprep.subr.bf16.mxu0 0
    %697 = vmatpush2.bf16.msra.mxu0 0
    %698 = vmatprep.subr.bf16.mxu0 0
    %699 = vmatpush2.bf16.msra.mxu0 0
    %700 = vmatprep.subr.bf16.mxu0 0
    %701 = vmatpush2.bf16.msra.mxu0 0
    %702 = vmatprep.mubr.bf16.mxu0 0
    %703 = vmatmul.mubr.bf16.gmra.mxu0 %v514
    %v704 = vpop.f32.mrf.mxu0
    %v705 = vadd.f32 %v414, %v704
    %v706 = vpop.f32.mrf.mxu0
    %v707 = vadd.f32 %v418, %v706
    %v708 = vpop.f32.mrf.mxu0
    %v709 = vpop.f32.mrf.mxu0
    %710 = vdwg.mxu0
    %711 = vmatprep.subr.bf16.mxu0 0
    %712 = vmatpush1.bf16.msra.mxu0 0
    %713 = vmatprep.subr.bf16.mxu0 0
    %714 = vmatpush1.bf16.msra.mxu0 0
    %715 = vmatprep.subr.bf16.mxu0 0
    %716 = vmatpush1.bf16.msra.mxu0 0
    %717 = vmatprep.subr.bf16.mxu0 0
    %718 = vmatpush1.bf16.msra.mxu0 0
    %719 = vmatprep.subr.bf16.mxu0 0
    %720 = vmatpush1.bf16.msra.mxu0 0
    %721 = vmatprep.subr.bf16.mxu0 0
    %722 = vmatpush1.bf16.msra.mxu0 0
    %723 = vmatprep.subr.bf16.mxu0 %v545
    %724 = vmatpush1.bf16.msra.mxu0 %v542
    %725 = vmatprep.subr.bf16.mxu0 %v491
    %726 = vmatpush1.bf16.msra.mxu0 %v490
    %727 = vmatprep.subr.bf16.mxu0 0
    %728 = vmatpush2.bf16.msra.mxu0 0
    %729 = vmatprep.subr.bf16.mxu0 0
    %730 = vmatpush2.bf16.msra.mxu0 0
    %731 = vmatprep.subr.bf16.mxu0 0
    %732 = vmatpush2.bf16.msra.mxu0 0
    %733 = vmatprep.subr.bf16.mxu0 0
    %734 = vmatpush2.bf16.msra.mxu0 0
    %735 = vmatprep.subr.bf16.mxu0 0
    %736 = vmatpush2.bf16.msra.mxu0 0
    %737 = vmatprep.subr.bf16.mxu0 0
    %738 = vmatpush2.bf16.msra.mxu0 0
    %739 = vmatprep.subr.bf16.mxu0 0
    %740 = vmatpush2.bf16.msra.mxu0 0
    %741 = vmatprep.subr.bf16.mxu0 0
    %742 = vmatpush2.bf16.msra.mxu0 0
    %743 = vmatprep.mubr.bf16.mxu0 0
    %744 = vmatmul.mubr.bf16.gmra.mxu0 %v514
    %v745 = vpop.f32.mrf.mxu0
    %v746 = vadd.f32 %v422, %v745
    %v747 = vpop.f32.mrf.mxu0
    %v748 = vadd.f32 %v426, %v747
    %v749 = vpop.f32.mrf.mxu0
    %v750 = vpop.f32.mrf.mxu0
    %751 = vdwg.mxu0
    %v752 = vxor.u32 %v582, 2147483648
    %v753 = vxor.u32 %v584, 2147483648
    %v754 = vxor.u32 %v623, 2147483648
    %v755 = vxor.u32 %v625, 2147483648
    %v756 = vxor.u32 %v664, 2147483648
    %v757 = vmul.f32 %v752, 1.442695
    %v758 = vpow.pop %v757
    %v759 = vmul.f32 %v753, 1.442695
    %v760 = vpow.pop %v759
    %v761 = vmul.f32 %v754, 1.442695
    %v762 = vpow.pop %v761
    %v763 = vmul.f32 %v755, 1.442695
    %v764 = vpow.pop %v763
    %v765 = vmul.f32 %v756, 1.442695
    %v766 = vpow.pop %v765
    %v767 = vadd.f32 %v758, 1.0
    %v768 = vadd.f32 %v760, 1.0
    %v769 = vadd.f32 %v762, 1.0
    %v770 = vadd.f32 %v764, 1.0
    %v771 = vadd.f32 %v766, 1.0
    %v772 = vrcp.pop %v767
    %v773 = vmul.f32 1.0, %v772
    %v774 = vrcp.pop %v768
    %v775 = vmul.f32 1.0, %v774
    %v776 = vrcp.pop %v769
    %v777 = vmul.f32 1.0, %v776
    %v778 = vrcp.pop %v770
    %v779 = vmul.f32 1.0, %v778
    %v780 = vrcp.pop %v771
    %v781 = vmul.f32 1.0, %v780
    %v782 = vld [vmem:[%s3] sm:$0xff]
    %v783 = vld [vmem:[%s11] sm:$0xff]
    %v784 = vld [vmem:[%s11 + $0x8] sm:$0xff]
    %v785 = vld [vmem:[#allocation6] sm:$0x3]
    %v786 = vpack.c.bf16 %v782, %v782
    %v788 = vlaneseq
    %v789 = vshrl.u32 %v788, 7
    %v790 = vsub.s32 0, %v789
    %v791 = vrot.slane %v785, %v790
    %v792 = vlaneseq
    %v793 = vshrl.u32 %v792, 7
    %v794 = vsub.s32 1, %v793
    %v795 = vrot.slane %v785, %v794
    %v800 = vunpack.c.l.b16 %v783
    %v801 = vunpack.c.h.b16 %v783
    %v802 = vunpack.c.l.b16 %v784
    %v803 = vunpack.c.h.b16 %v784
    %v804 = vpack.c.b16 %v802, %v800
    %v805 = vpack.c.b16 %v803, %v801
    %vm808 = vcmask 130048
    %v810 = vsel %vm808, %v786, 0
    %812 = vmatprep.subr.bf16.mxu0 0
    %813 = vmatpush1.bf16.msra.mxu0 0
    %814 = vmatprep.subr.bf16.mxu0 0
    %815 = vmatpush1.bf16.msra.mxu0 0
    %816 = vmatprep.subr.bf16.mxu0 0
    %817 = vmatpush1.bf16.msra.mxu0 0
    %818 = vmatprep.subr.bf16.mxu0 0
    %819 = vmatpush1.bf16.msra.mxu0 0
    %820 = vmatprep.subr.bf16.mxu0 0
    %821 = vmatpush1.bf16.msra.mxu0 0
    %822 = vmatprep.subr.bf16.mxu0 0
    %823 = vmatpush1.bf16.msra.mxu0 0
    %824 = vmatprep.subr.bf16.mxu0 0
    %825 = vmatpush1.bf16.msra.mxu0 0
    %826 = vmatprep.subr.bf16.mxu0 %v805
    %827 = vmatpush1.bf16.msra.mxu0 %v804
    %828 = vmatprep.subr.bf16.mxu0 0
    %829 = vmatpush2.bf16.msra.mxu0 0
    %830 = vmatprep.subr.bf16.mxu0 0
    %831 = vmatpush2.bf16.msra.mxu0 0
    %832 = vmatprep.subr.bf16.mxu0 0
    %833 = vmatpush2.bf16.msra.mxu0 0
    %834 = vmatprep.subr.bf16.mxu0 0
    %835 = vmatpush2.bf16.msra.mxu0 0
    %836 = vmatprep.subr.bf16.mxu0 0
    %837 = vmatpush2.bf16.msra.mxu0 0
    %838 = vmatprep.subr.bf16.mxu0 0
    %839 = vmatpush2.bf16.msra.mxu0 0
    %840 = vmatprep.subr.bf16.mxu0 0
    %841 = vmatpush2.bf16.msra.mxu0 0
    %842 = vmatprep.subr.bf16.mxu0 0
    %843 = vmatpush2.bf16.msra.mxu0 0
    %844 = vmatprep.mubr.bf16.mxu0 0
    %845 = vmatmul.mubr.bf16.gmra.mxu0 %v810
    %v846 = vpop.f32.mrf.mxu0
    %v847 = vadd.f32 %v791, %v846
    %v848 = vpop.f32.mrf.mxu0
    %v849 = vadd.f32 %v795, %v848
    %v850 = vpop.f32.mrf.mxu0
    %v851 = vpop.f32.mrf.mxu0
    %852 = vdwg.mxu0
    %v853 = vmul.f32 %v847, %v773
    %v854 = vmul.f32 %v849, %v775
    %v855 = vadd.f32 %v853, %v666
    %v856 = vadd.f32 %v854, %v705
    %v857 = vld [vmem:[#allocation2] sm:$0x3]
    %v859 = vlaneseq
    %v860 = vshrl.u32 %v859, 7
    %v861 = vsub.s32 0, %v860
    %v862 = vrot.slane %v857, %v861
    %v863 = vlaneseq
    %v864 = vshrl.u32 %v863, 7
    %v865 = vsub.s32 1, %v864
    %v866 = vrot.slane %v857, %v865
    %v869 = vadd.f32 %v855, %v862
    %v870 = vadd.f32 %v856, %v866
    %v871 = vld [vmem:[#allocation7] sm:$0xff]
    %v872 = vld [vmem:[#allocation7 + $0x8] sm:$0xff]
    %v873 = vld [vmem:[#allocation7 + $0x10] sm:$0xff]
    %v874 = vld [vmem:[#allocation7 + $0x18] sm:$0xff]
    %v875 = vld [vmem:[#allocation7 + $0x20] sm:$0xff]
    %v876 = vld [vmem:[#allocation7 + $0x28] sm:$0xff]
    %v877 = vld [vmem:[#allocation7 + $0x30] sm:$0xff]
    %v878 = vld [vmem:[#allocation7 + $0x38] sm:$0xff]
    %v879 = vld [vmem:[#allocation7 + $0x40] sm:$0xff]
    %v880 = vld [vmem:[#allocation7 + $0x48] sm:$0xff]
    %v881 = vld [vmem:[#allocation7 + $0x50] sm:$0xff]
    %v882 = vld [vmem:[#allocation7 + $0x58] sm:$0xff]
    %v883 = vld [vmem:[#allocation7 + $0x60] sm:$0xff]
    %v884 = vld [vmem:[#allocation7 + $0x68] sm:$0xff]
    %v885 = vld [vmem:[#allocation7 + $0x70] sm:$0xff]
    %v886 = vld [vmem:[#allocation7 + $0x78] sm:$0xff]
    %v887 = vld [vmem:[#allocation7 + $0x80] sm:$0xff]
    %v888 = vld [vmem:[#allocation7 + $0x88] sm:$0xff]
    %v889 = vld [vmem:[#allocation7 + $0x90] sm:$0xff]
    %v890 = vld [vmem:[#allocation7 + $0x98] sm:$0xff]
    %v891 = vld [vmem:[#allocation7 + $0xa0] sm:$0xff]
    %v892 = vld [vmem:[#allocation7 + $0xa8] sm:$0xff]
    %v893 = vld [vmem:[#allocation7 + $0xb0] sm:$0xff]
    %v894 = vld [vmem:[#allocation7 + $0xb8] sm:$0xff]
    %v895 = vld [vmem:[#allocation7 + $0xc0] sm:$0xff]
    %v896 = vld [vmem:[#allocation7 + $0xc8] sm:$0xff]
    %v897 = vld [vmem:[#allocation7 + $0xd0] sm:$0xff]
    %v898 = vld [vmem:[#allocation7 + $0xd8] sm:$0xff]
    %v899 = vld [vmem:[#allocation7 + $0xe0] sm:$0xff]
    %v900 = vld [vmem:[#allocation7 + $0xe8] sm:$0xff]
    %v901 = vld [vmem:[#allocation7 + $0xf0] sm:$0xff]
    %v902 = vld [vmem:[#allocation7 + $0xf8] sm:$0xff]
    %v903 = vpack.c.bf16 %v869, %v869
    %v904 = vpack.c.bf16 %v870, %v870
    %v905 = vld [vmem:[#allocation9] sm:$0x3]
    %v907 = vlaneseq
    %v908 = vshrl.u32 %v907, 7
    %v909 = vsub.s32 0, %v908
    %v910 = vrot.slane %v905, %v909
    %v911 = vlaneseq
    %v912 = vshrl.u32 %v911, 7
    %v913 = vsub.s32 1, %v912
    %v914 = vrot.slane %v905, %v913
    %v949 = vunpack.c.l.b16 %v871
    %v950 = vunpack.c.h.b16 %v871
    %v951 = vunpack.c.l.b16 %v872
    %v952 = vunpack.c.h.b16 %v872
    %v953 = vunpack.c.l.b16 %v873
    %v954 = vunpack.c.h.b16 %v873
    %v955 = vunpack.c.l.b16 %v874
    %v956 = vunpack.c.h.b16 %v874
    %v957 = vunpack.c.l.b16 %v875
    %v958 = vunpack.c.h.b16 %v875
    %v959 = vunpack.c.l.b16 %v876
    %v960 = vunpack.c.h.b16 %v876
    %v961 = vunpack.c.l.b16 %v877
    %v962 = vunpack.c.h.b16 %v877
    %v963 = vunpack.c.l.b16 %v878
    %v964 = vunpack.c.h.b16 %v878
    %v965 = vunpack.c.l.b16 %v879
    %v966 = vunpack.c.h.b16 %v879
    %v967 = vunpack.c.l.b16 %v880
    %v968 = vunpack.c.h.b16 %v880
    %v969 = vunpack.c.l.b16 %v881
    %v970 = vunpack.c.h.b16 %v881
    %v971 = vunpack.c.l.b16 %v882
    %v972 = vunpack.c.h.b16 %v882
    %v973 = vunpack.c.l.b16 %v883
    %v974 = vunpack.c.h.b16 %v883
    %v975 = vunpack.c.l.b16 %v884
    %v976 = vunpack.c.h.b16 %v884
    %v977 = vunpack.c.l.b16 %v885
    %v978 = vunpack.c.h.b16 %v885
    %v979 = vunpack.c.l.b16 %v886
    %v980 = vunpack.c.h.b16 %v886
    %v981 = vunpack.c.l.b16 %v887
    %v982 = vunpack.c.h.b16 %v887
    %v983 = vunpack.c.l.b16 %v888
    %v984 = vunpack.c.h.b16 %v888
    %v985 = vunpack.c.l.b16 %v889
    %v986 = vunpack.c.h.b16 %v889
    %v987 = vunpack.c.l.b16 %v890
    %v988 = vunpack.c.h.b16 %v890
    %v989 = vunpack.c.l.b16 %v891
    %v990 = vunpack.c.h.b16 %v891
    %v991 = vunpack.c.l.b16 %v892
    %v992 = vunpack.c.h.b16 %v892
    %v993 = vunpack.c.l.b16 %v893
    %v994 = vunpack.c.h.b16 %v893
    %v995 = vunpack.c.l.b16 %v894
    %v996 = vunpack.c.h.b16 %v894
    %v997 = vunpack.c.l.b16 %v895
    %v998 = vunpack.c.h.b16 %v895
    %v999 = vunpack.c.l.b16 %v896
    %v1000 = vunpack.c.h.b16 %v896
    %v1001 = vunpack.c.l.b16 %v897
    %v1002 = vunpack.c.h.b16 %v897
    %v1003 = vunpack.c.l.b16 %v898
    %v1004 = vunpack.c.h.b16 %v898
    %v1005 = vunpack.c.l.b16 %v899
    %v1006 = vunpack.c.h.b16 %v899
    %v1007 = vunpack.c.l.b16 %v900
    %v1008 = vunpack.c.h.b16 %v900
    %v1009 = vunpack.c.l.b16 %v901
    %v1010 = vunpack.c.h.b16 %v901
    %v1011 = vunpack.c.l.b16 %v902
    %v1012 = vunpack.c.h.b16 %v902
    %v1013 = vpack.c.b16 %v951, %v949
    %v1014 = vpack.c.b16 %v952, %v950
    %v1015 = vpack.c.b16 %v955, %v953
    %v1016 = vpack.c.b16 %v956, %v954
    %v1017 = vpack.c.b16 %v959, %v957
    %v1018 = vpack.c.b16 %v960, %v958
    %v1019 = vpack.c.b16 %v963, %v961
    %v1020 = vpack.c.b16 %v964, %v962
    %v1021 = vpack.c.b16 %v967, %v965
    %v1022 = vpack.c.b16 %v968, %v966
    %v1023 = vpack.c.b16 %v971, %v969
    %v1024 = vpack.c.b16 %v972, %v970
    %v1025 = vpack.c.b16 %v975, %v973
    %v1026 = vpack.c.b16 %v976, %v974
    %v1027 = vpack.c.b16 %v979, %v977
    %v1028 = vpack.c.b16 %v980, %v978
    %v1029 = vpack.c.b16 %v983, %v981
    %v1030 = vpack.c.b16 %v984, %v982
    %v1031 = vpack.c.b16 %v987, %v985
    %v1032 = vpack.c.b16 %v988, %v986
    %v1033 = vpack.c.b16 %v991, %v989
    %v1034 = vpack.c.b16 %v992, %v990
    %v1035 = vpack.c.b16 %v995, %v993
    %v1036 = vpack.c.b16 %v996, %v994
    %v1037 = vpack.c.b16 %v999, %v997
    %v1038 = vpack.c.b16 %v1000, %v998
    %v1039 = vpack.c.b16 %v1003, %v1001
    %v1040 = vpack.c.b16 %v1004, %v1002
    %v1041 = vpack.c.b16 %v1007, %v1005
    %v1042 = vpack.c.b16 %v1008, %v1006
    %v1043 = vpack.c.b16 %v1011, %v1009
    %v1044 = vpack.c.b16 %v1012, %v1010
    %1077 = vmatprep.subr.bf16.mxu0 %v1028
    %1078 = vmatpush1.bf16.msra.mxu0 %v1027
    %1079 = vmatprep.subr.bf16.mxu0 %v1026
    %1080 = vmatpush1.bf16.msra.mxu0 %v1025
    %1081 = vmatprep.subr.bf16.mxu0 %v1024
    %1082 = vmatpush1.bf16.msra.mxu0 %v1023
    %1083 = vmatprep.subr.bf16.mxu0 %v1022
    %1084 = vmatpush1.bf16.msra.mxu0 %v1021
    %1085 = vmatprep.subr.bf16.mxu0 %v1020
    %1086 = vmatpush1.bf16.msra.mxu0 %v1019
    %1087 = vmatprep.subr.bf16.mxu0 %v1018
    %1088 = vmatpush1.bf16.msra.mxu0 %v1017
    %1089 = vmatprep.subr.bf16.mxu0 %v1016
    %1090 = vmatpush1.bf16.msra.mxu0 %v1015
    %1091 = vmatprep.subr.bf16.mxu0 %v1014
    %1092 = vmatpush1.bf16.msra.mxu0 %v1013
    %1093 = vmatprep.subr.bf16.mxu0 %v1044
    %1094 = vmatpush2.bf16.msra.mxu0 %v1043
    %1095 = vmatprep.subr.bf16.mxu0 %v1042
    %1096 = vmatpush2.bf16.msra.mxu0 %v1041
    %1097 = vmatprep.subr.bf16.mxu0 %v1040
    %1098 = vmatpush2.bf16.msra.mxu0 %v1039
    %1099 = vmatprep.subr.bf16.mxu0 %v1038
    %1100 = vmatpush2.bf16.msra.mxu0 %v1037
    %1101 = vmatprep.subr.bf16.mxu0 %v1036
    %1102 = vmatpush2.bf16.msra.mxu0 %v1035
    %1103 = vmatprep.subr.bf16.mxu0 %v1034
    %1104 = vmatpush2.bf16.msra.mxu0 %v1033
    %1105 = vmatprep.subr.bf16.mxu0 %v1032
    %1106 = vmatpush2.bf16.msra.mxu0 %v1031
    %1107 = vmatprep.subr.bf16.mxu0 %v1030
    %1108 = vmatpush2.bf16.msra.mxu0 %v1029
    %1109 = vmatprep.mubr.bf16.mxu0 %v904
    %1110 = vmatmul.mubr.bf16.gmra.mxu0 %v903
    %v1111 = vpop.f32.mrf.mxu0
    %v1112 = vadd.f32 %v910, %v1111
    %v1113 = vpop.f32.mrf.mxu0
    %v1114 = vadd.f32 %v914, %v1113
    %v1115 = vpop.f32.mrf.mxu0
    %v1116 = vpop.f32.mrf.mxu0
    %1117 = vdwg.mxu0
    %v1118 = vmax.f32 %v1112, 0.0
    %v1119 = vmax.f32 %v1114, 0.0
    %v1120 = vld [vmem:[#allocation10] sm:$0xff]
    %v1121 = vld [vmem:[#allocation10 + $0x8] sm:$0xff]
    %v1122 = vld [vmem:[#allocation10 + $0x10] sm:$0xff]
    %v1123 = vld [vmem:[#allocation10 + $0x18] sm:$0xff]
    %v1124 = vld [vmem:[#allocation10 + $0x20] sm:$0xff]
    %v1125 = vld [vmem:[#allocation10 + $0x28] sm:$0xff]
    %v1126 = vld [vmem:[#allocation10 + $0x30] sm:$0xff]
    %v1127 = vld [vmem:[#allocation10 + $0x38] sm:$0xff]
    %v1128 = vld [vmem:[#allocation10 + $0x40] sm:$0xff]
    %v1129 = vld [vmem:[#allocation10 + $0x48] sm:$0xff]
    %v1130 = vld [vmem:[#allocation10 + $0x50] sm:$0xff]
    %v1131 = vld [vmem:[#allocation10 + $0x58] sm:$0xff]
    %v1132 = vld [vmem:[#allocation10 + $0x60] sm:$0xff]
    %v1133 = vld [vmem:[#allocation10 + $0x68] sm:$0xff]
    %v1134 = vld [vmem:[#allocation10 + $0x70] sm:$0xff]
    %v1135 = vld [vmem:[#allocation10 + $0x78] sm:$0xff]
    %v1136 = vld [vmem:[#allocation10 + $0x80] sm:$0xff]
    %v1137 = vld [vmem:[#allocation10 + $0x88] sm:$0xff]
    %v1138 = vld [vmem:[#allocation10 + $0x90] sm:$0xff]
    %v1139 = vld [vmem:[#allocation10 + $0x98] sm:$0xff]
    %v1140 = vld [vmem:[#allocation10 + $0xa0] sm:$0xff]
    %v1141 = vld [vmem:[#allocation10 + $0xa8] sm:$0xff]
    %v1142 = vld [vmem:[#allocation10 + $0xb0] sm:$0xff]
    %v1143 = vld [vmem:[#allocation10 + $0xb8] sm:$0xff]
    %v1144 = vld [vmem:[#allocation10 + $0xc0] sm:$0xff]
    %v1145 = vld [vmem:[#allocation10 + $0xc8] sm:$0xff]
    %v1146 = vld [vmem:[#allocation10 + $0xd0] sm:$0xff]
    %v1147 = vld [vmem:[#allocation10 + $0xd8] sm:$0xff]
    %v1148 = vld [vmem:[#allocation10 + $0xe0] sm:$0xff]
    %v1149 = vld [vmem:[#allocation10 + $0xe8] sm:$0xff]
    %v1150 = vld [vmem:[#allocation10 + $0xf0] sm:$0xff]
    %v1151 = vld [vmem:[#allocation10 + $0xf8] sm:$0xff]
    %v1152 = vpack.c.bf16 %v1118, %v1118
    %v1153 = vpack.c.bf16 %v1119, %v1119
    %v1154 = vld [vmem:[#allocation12] sm:$0x3]
    %v1156 = vlaneseq
    %v1157 = vshrl.u32 %v1156, 7
    %v1158 = vsub.s32 0, %v1157
    %v1159 = vrot.slane %v1154, %v1158
    %v1160 = vlaneseq
    %v1161 = vshrl.u32 %v1160, 7
    %v1162 = vsub.s32 1, %v1161
    %v1163 = vrot.slane %v1154, %v1162
    %v1198 = vunpack.c.l.b16 %v1120
    %v1199 = vunpack.c.h.b16 %v1120
    %v1200 = vunpack.c.l.b16 %v1121
    %v1201 = vunpack.c.h.b16 %v1121
    %v1202 = vunpack.c.l.b16 %v1122
    %v1203 = vunpack.c.h.b16 %v1122
    %v1204 = vunpack.c.l.b16 %v1123
    %v1205 = vunpack.c.h.b16 %v1123
    %v1206 = vunpack.c.l.b16 %v1124
    %v1207 = vunpack.c.h.b16 %v1124
    %v1208 = vunpack.c.l.b16 %v1125
    %v1209 = vunpack.c.h.b16 %v1125
    %v1210 = vunpack.c.l.b16 %v1126
    %v1211 = vunpack.c.h.b16 %v1126
    %v1212 = vunpack.c.l.b16 %v1127
    %v1213 = vunpack.c.h.b16 %v1127
    %v1214 = vunpack.c.l.b16 %v1128
    %v1215 = vunpack.c.h.b16 %v1128
    %v1216 = vunpack.c.l.b16 %v1129
    %v1217 = vunpack.c.h.b16 %v1129
    %v1218 = vunpack.c.l.b16 %v1130
    %v1219 = vunpack.c.h.b16 %v1130
    %v1220 = vunpack.c.l.b16 %v1131
    %v1221 = vunpack.c.h.b16 %v1131
    %v1222 = vunpack.c.l.b16 %v1132
    %v1223 = vunpack.c.h.b16 %v1132
    %v1224 = vunpack.c.l.b16 %v1133
    %v1225 = vunpack.c.h.b16 %v1133
    %v1226 = vunpack.c.l.b16 %v1134
    %v1227 = vunpack.c.h.b16 %v1134
    %v1228 = vunpack.c.l.b16 %v1135
    %v1229 = vunpack.c.h.b16 %v1135
    %v1230 = vunpack.c.l.b16 %v1136
    %v1231 = vunpack.c.h.b16 %v1136
    %v1232 = vunpack.c.l.b16 %v1137
    %v1233 = vunpack.c.h.b16 %v1137
    %v1234 = vunpack.c.l.b16 %v1138
    %v1235 = vunpack.c.h.b16 %v1138
    %v1236 = vunpack.c.l.b16 %v1139
    %v1237 = vunpack.c.h.b16 %v1139
    %v1238 = vunpack.c.l.b16 %v1140
    %v1239 = vunpack.c.h.b16 %v1140
    %v1240 = vunpack.c.l.b16 %v1141
    %v1241 = vunpack.c.h.b16 %v1141
    %v1242 = vunpack.c.l.b16 %v1142
    %v1243 = vunpack.c.h.b16 %v1142
    %v1244 = vunpack.c.l.b16 %v1143
    %v1245 = vunpack.c.h.b16 %v1143
    %v1246 = vunpack.c.l.b16 %v1144
    %v1247 = vunpack.c.h.b16 %v1144
    %v1248 = vunpack.c.l.b16 %v1145
    %v1249 = vunpack.c.h.b16 %v1145
    %v1250 = vunpack.c.l.b16 %v1146
    %v1251 = vunpack.c.h.b16 %v1146
    %v1252 = vunpack.c.l.b16 %v1147
    %v1253 = vunpack.c.h.b16 %v1147
    %v1254 = vunpack.c.l.b16 %v1148
    %v1255 = vunpack.c.h.b16 %v1148
    %v1256 = vunpack.c.l.b16 %v1149
    %v1257 = vunpack.c.h.b16 %v1149
    %v1258 = vunpack.c.l.b16 %v1150
    %v1259 = vunpack.c.h.b16 %v1150
    %v1260 = vunpack.c.l.b16 %v1151
    %v1261 = vunpack.c.h.b16 %v1151
    %v1262 = vpack.c.b16 %v1200, %v1198
    %v1263 = vpack.c.b16 %v1201, %v1199
    %v1264 = vpack.c.b16 %v1204, %v1202
    %v1265 = vpack.c.b16 %v1205, %v1203
    %v1266 = vpack.c.b16 %v1208, %v1206
    %v1267 = vpack.c.b16 %v1209, %v1207
    %v1268 = vpack.c.b16 %v1212, %v1210
    %v1269 = vpack.c.b16 %v1213, %v1211
    %v1270 = vpack.c.b16 %v1216, %v1214
    %v1271 = vpack.c.b16 %v1217, %v1215
    %v1272 = vpack.c.b16 %v1220, %v1218
    %v1273 = vpack.c.b16 %v1221, %v1219
    %v1274 = vpack.c.b16 %v1224, %v1222
    %v1275 = vpack.c.b16 %v1225, %v1223
    %v1276 = vpack.c.b16 %v1228, %v1226
    %v1277 = vpack.c.b16 %v1229, %v1227
    %v1278 = vpack.c.b16 %v1232, %v1230
    %v1279 = vpack.c.b16 %v1233, %v1231
    %v1280 = vpack.c.b16 %v1236, %v1234
    %v1281 = vpack.c.b16 %v1237, %v1235
    %v1282 = vpack.c.b16 %v1240, %v1238
    %v1283 = vpack.c.b16 %v1241, %v1239
    %v1284 = vpack.c.b16 %v1244, %v1242
    %v1285 = vpack.c.b16 %v1245, %v1243
    %v1286 = vpack.c.b16 %v1248, %v1246
    %v1287 = vpack.c.b16 %v1249, %v1247
    %v1288 = vpack.c.b16 %v1252, %v1250
    %v1289 = vpack.c.b16 %v1253, %v1251
    %v1290 = vpack.c.b16 %v1256, %v1254
    %v1291 = vpack.c.b16 %v1257, %v1255
    %v1292 = vpack.c.b16 %v1260, %v1258
    %v1293 = vpack.c.b16 %v1261, %v1259
    %1326 = vmatprep.subr.bf16.mxu0 %v1277
    %1327 = vmatpush1.bf16.msra.mxu0 %v1276
    %1328 = vmatprep.subr.bf16.mxu0 %v1275
    %1329 = vmatpush1.bf16.msra.mxu0 %v1274
    %1330 = vmatprep.subr.bf16.mxu0 %v1273
    %1331 = vmatpush1.bf16.msra.mxu0 %v1272
    %1332 = vmatprep.subr.bf16.mxu0 %v1271
    %1333 = vmatpush1.bf16.msra.mxu0 %v1270
    %1334 = vmatprep.subr.bf16.mxu0 %v1269
    %1335 = vmatpush1.bf16.msra.mxu0 %v1268
    %1336 = vmatprep.subr.bf16.mxu0 %v1267
    %1337 = vmatpush1.bf16.msra.mxu0 %v1266
    %1338 = vmatprep.subr.bf16.mxu0 %v1265
    %1339 = vmatpush1.bf16.msra.mxu0 %v1264
    %1340 = vmatprep.subr.bf16.mxu0 %v1263
    %1341 = vmatpush1.bf16.msra.mxu0 %v1262
    %1342 = vmatprep.subr.bf16.mxu0 %v1293
    %1343 = vmatpush2.bf16.msra.mxu0 %v1292
    %1344 = vmatprep.subr.bf16.mxu0 %v1291
    %1345 = vmatpush2.bf16.msra.mxu0 %v1290
    %1346 = vmatprep.subr.bf16.mxu0 %v1289
    %1347 = vmatpush2.bf16.msra.mxu0 %v1288
    %1348 = vmatprep.subr.bf16.mxu0 %v1287
    %1349 = vmatpush2.bf16.msra.mxu0 %v1286
    %1350 = vmatprep.subr.bf16.mxu0 %v1285
    %1351 = vmatpush2.bf16.msra.mxu0 %v1284
    %1352 = vmatprep.subr.bf16.mxu0 %v1283
    %1353 = vmatpush2.bf16.msra.mxu0 %v1282
    %1354 = vmatprep.subr.bf16.mxu0 %v1281
    %1355 = vmatpush2.bf16.msra.mxu0 %v1280
    %1356 = vmatprep.subr.bf16.mxu0 %v1279
    %1357 = vmatpush2.bf16.msra.mxu0 %v1278
    %1358 = vmatprep.mubr.bf16.mxu0 %v1153
    %1359 = vmatmul.mubr.bf16.gmra.mxu0 %v1152
    %v1360 = vpop.f32.mrf.mxu0
    %v1361 = vadd.f32 %v1159, %v1360
    %v1362 = vpop.f32.mrf.mxu0
    %v1363 = vadd.f32 %v1163, %v1362
    %v1364 = vpop.f32.mrf.mxu0
    %v1365 = vpop.f32.mrf.mxu0
    %1366 = vdwg.mxu0
    %v1367 = vld [vmem:[#allocation13] sm:$0xff]
    %v1368 = vld [vmem:[#allocation13 + $0x8] sm:$0xff]
    %v1369 = vld [vmem:[#allocation13 + $0x10] sm:$0xff]
    %v1370 = vld [vmem:[#allocation13 + $0x18] sm:$0xff]
    %v1371 = vld [vmem:[#allocation13 + $0x20] sm:$0xff]
    %v1372 = vld [vmem:[#allocation13 + $0x28] sm:$0xff]
    %v1373 = vld [vmem:[#allocation13 + $0x30] sm:$0xff]
    %v1374 = vld [vmem:[#allocation13 + $0x38] sm:$0xff]
    %v1375 = vld [vmem:[#allocation13 + $0x40] sm:$0xff]
    %v1376 = vld [vmem:[#allocation13 + $0x48] sm:$0xff]
    %v1377 = vld [vmem:[#allocation13 + $0x50] sm:$0xff]
    %v1378 = vld [vmem:[#allocation13 + $0x58] sm:$0xff]
    %v1379 = vld [vmem:[#allocation13 + $0x60] sm:$0xff]
    %v1380 = vld [vmem:[#allocation13 + $0x68] sm:$0xff]
    %v1381 = vld [vmem:[#allocation13 + $0x70] sm:$0xff]
    %v1382 = vld [vmem:[#allocation13 + $0x78] sm:$0xff]
    %v1383 = vld [vmem:[#allocation13 + $0x80] sm:$0xff]
    %v1384 = vld [vmem:[#allocation13 + $0x88] sm:$0xff]
    %v1385 = vld [vmem:[#allocation13 + $0x90] sm:$0xff]
    %v1386 = vld [vmem:[#allocation13 + $0x98] sm:$0xff]
    %v1387 = vld [vmem:[#allocation13 + $0xa0] sm:$0xff]
    %v1388 = vld [vmem:[#allocation13 + $0xa8] sm:$0xff]
    %v1389 = vld [vmem:[#allocation13 + $0xb0] sm:$0xff]
    %v1390 = vld [vmem:[#allocation13 + $0xb8] sm:$0xff]
    %v1391 = vld [vmem:[#allocation13 + $0xc0] sm:$0xff]
    %v1392 = vld [vmem:[#allocation13 + $0xc8] sm:$0xff]
    %v1393 = vld [vmem:[#allocation13 + $0xd0] sm:$0xff]
    %v1394 = vld [vmem:[#allocation13 + $0xd8] sm:$0xff]
    %v1395 = vld [vmem:[#allocation13 + $0xe0] sm:$0xff]
    %v1396 = vld [vmem:[#allocation13 + $0xe8] sm:$0xff]
    %v1397 = vld [vmem:[#allocation13 + $0xf0] sm:$0xff]
    %v1398 = vld [vmem:[#allocation13 + $0xf8] sm:$0xff]
    %v1399 = vld [vmem:[#allocation13 + $0x100] sm:$0xff]
    %v1400 = vld [vmem:[#allocation13 + $0x108] sm:$0xff]
    %v1401 = vld [vmem:[#allocation13 + $0x110] sm:$0xff]
    %v1402 = vld [vmem:[#allocation13 + $0x118] sm:$0xff]
    %v1403 = vld [vmem:[#allocation13 + $0x120] sm:$0xff]
    %v1404 = vld [vmem:[#allocation13 + $0x128] sm:$0xff]
    %v1405 = vld [vmem:[#allocation13 + $0x130] sm:$0xff]
    %v1406 = vld [vmem:[#allocation13 + $0x138] sm:$0xff]
    %v1407 = vld [vmem:[#allocation13 + $0x140] sm:$0xff]
    %v1408 = vld [vmem:[#allocation13 + $0x148] sm:$0xff]
    %v1409 = vld [vmem:[#allocation13 + $0x150] sm:$0xff]
    %v1410 = vld [vmem:[#allocation13 + $0x158] sm:$0xff]
    %v1411 = vld [vmem:[#allocation13 + $0x160] sm:$0xff]
    %v1412 = vld [vmem:[#allocation13 + $0x168] sm:$0xff]
    %v1413 = vld [vmem:[#allocation13 + $0x170] sm:$0xff]
    %v1414 = vld [vmem:[#allocation13 + $0x178] sm:$0xff]
    %v1415 = vld [vmem:[#allocation13 + $0x180] sm:$0xff]
    %v1416 = vld [vmem:[#allocation13 + $0x188] sm:$0xff]
    %v1417 = vld [vmem:[#allocation13 + $0x190] sm:$0xff]
    %v1418 = vld [vmem:[#allocation13 + $0x198] sm:$0xff]
    %v1419 = vld [vmem:[#allocation13 + $0x1a0] sm:$0xff]
    %v1420 = vld [vmem:[#allocation13 + $0x1a8] sm:$0xff]
    %v1421 = vld [vmem:[#allocation13 + $0x1b0] sm:$0xff]
    %v1422 = vld [vmem:[#allocation13 + $0x1b8] sm:$0xff]
    %v1423 = vld [vmem:[#allocation13 + $0x1c0] sm:$0xff]
    %v1424 = vld [vmem:[#allocation13 + $0x1c8] sm:$0xff]
    %v1425 = vld [vmem:[#allocation13 + $0x1d0] sm:$0xff]
    %v1426 = vld [vmem:[#allocation13 + $0x1d8] sm:$0xff]
    %v1427 = vld [vmem:[#allocation13 + $0x1e0] sm:$0xff]
    %v1428 = vld [vmem:[#allocation13 + $0x1e8] sm:$0xff]
    %v1429 = vld [vmem:[#allocation13 + $0x1f0] sm:$0xff]
    %v1430 = vld [vmem:[#allocation13 + $0x1f8] sm:$0xff]
    %v1431 = vld [vmem:[#allocation13 + $0x200] sm:$0xff]
    %v1432 = vld [vmem:[#allocation13 + $0x208] sm:$0xff]
    %v1433 = vld [vmem:[#allocation13 + $0x210] sm:$0xff]
    %v1434 = vld [vmem:[#allocation13 + $0x218] sm:$0xff]
    %v1435 = vld [vmem:[#allocation13 + $0x220] sm:$0xff]
    %v1436 = vld [vmem:[#allocation13 + $0x228] sm:$0xff]
    %v1437 = vld [vmem:[#allocation13 + $0x230] sm:$0xff]
    %v1438 = vld [vmem:[#allocation13 + $0x238] sm:$0xff]
    %v1439 = vld [vmem:[#allocation13 + $0x240] sm:$0xff]
    %v1440 = vld [vmem:[#allocation13 + $0x248] sm:$0xff]
    %v1441 = vld [vmem:[#allocation13 + $0x250] sm:$0xff]
    %v1442 = vld [vmem:[#allocation13 + $0x258] sm:$0xff]
    %v1443 = vld [vmem:[#allocation13 + $0x260] sm:$0xff]
    %v1444 = vld [vmem:[#allocation13 + $0x268] sm:$0xff]
    %v1445 = vld [vmem:[#allocation13 + $0x270] sm:$0xff]
    %v1446 = vld [vmem:[#allocation13 + $0x278] sm:$0xff]
    %v1447 = vld [vmem:[#allocation13 + $0x280] sm:$0xff]
    %v1448 = vld [vmem:[#allocation13 + $0x288] sm:$0xff]
    %v1449 = vld [vmem:[#allocation13 + $0x290] sm:$0xff]
    %v1450 = vld [vmem:[#allocation13 + $0x298] sm:$0xff]
    %v1451 = vld [vmem:[#allocation13 + $0x2a0] sm:$0xff]
    %v1452 = vld [vmem:[#allocation13 + $0x2a8] sm:$0xff]
    %v1453 = vld [vmem:[#allocation13 + $0x2b0] sm:$0xff]
    %v1454 = vld [vmem:[#allocation13 + $0x2b8] sm:$0xff]
    %v1455 = vld [vmem:[#allocation13 + $0x2c0] sm:$0xff]
    %v1456 = vld [vmem:[#allocation13 + $0x2c8] sm:$0xff]
    %v1457 = vld [vmem:[#allocation13 + $0x2d0] sm:$0xff]
    %v1458 = vld [vmem:[#allocation13 + $0x2d8] sm:$0xff]
    %v1459 = vld [vmem:[#allocation13 + $0x2e0] sm:$0xff]
    %v1460 = vld [vmem:[#allocation13 + $0x2e8] sm:$0xff]
    %v1461 = vld [vmem:[#allocation13 + $0x2f0] sm:$0xff]
    %v1462 = vld [vmem:[#allocation13 + $0x2f8] sm:$0xff]
    %v1463 = vpack.c.bf16 %v1361, %v1361
    %v1464 = vpack.c.bf16 %v1363, %v1363
    %v1465 = vld [vmem:[%s25] sm:$0x3f]
    %v1467 = vlaneseq
    %v1468 = vshrl.u32 %v1467, 7
    %v1469 = vsub.s32 0, %v1468
    %v1470 = vrot.slane %v1465, %v1469
    %v1471 = vlaneseq
    %v1472 = vshrl.u32 %v1471, 7
    %v1473 = vsub.s32 1, %v1472
    %v1474 = vrot.slane %v1465, %v1473
    %v1475 = vlaneseq
    %v1476 = vshrl.u32 %v1475, 7
    %v1477 = vsub.s32 2, %v1476
    %v1478 = vrot.slane %v1465, %v1477
    %v1479 = vlaneseq
    %v1480 = vshrl.u32 %v1479, 7
    %v1481 = vsub.s32 3, %v1480
    %v1482 = vrot.slane %v1465, %v1481
    %v1483 = vlaneseq
    %v1484 = vshrl.u32 %v1483, 7
    %v1485 = vsub.s32 4, %v1484
    %v1486 = vrot.slane %v1465, %v1485
    %v1487 = vlaneseq
    %v1488 = vshrl.u32 %v1487, 7
    %v1489 = vsub.s32 5, %v1488
    %v1490 = vrot.slane %v1465, %v1489
    %v1593 = vunpack.c.l.b16 %v1367
    %v1594 = vunpack.c.h.b16 %v1367
    %v1595 = vunpack.c.l.b16 %v1368
    %v1596 = vunpack.c.h.b16 %v1368
    %v1597 = vunpack.c.l.b16 %v1369
    %v1598 = vunpack.c.h.b16 %v1369
    %v1599 = vunpack.c.l.b16 %v1370
    %v1600 = vunpack.c.h.b16 %v1370
    %v1601 = vunpack.c.l.b16 %v1371
    %v1602 = vunpack.c.h.b16 %v1371
    %v1603 = vunpack.c.l.b16 %v1372
    %v1604 = vunpack.c.h.b16 %v1372
    %v1605 = vunpack.c.l.b16 %v1373
    %v1606 = vunpack.c.h.b16 %v1373
    %v1607 = vunpack.c.l.b16 %v1374
    %v1608 = vunpack.c.h.b16 %v1374
    %v1609 = vunpack.c.l.b16 %v1375
    %v1610 = vunpack.c.h.b16 %v1375
    %v1611 = vunpack.c.l.b16 %v1376
    %v1612 = vunpack.c.h.b16 %v1376
    %v1613 = vunpack.c.l.b16 %v1377
    %v1614 = vunpack.c.h.b16 %v1377
    %v1615 = vunpack.c.l.b16 %v1378
    %v1616 = vunpack.c.h.b16 %v1378
    %v1617 = vunpack.c.l.b16 %v1379
    %v1618 = vunpack.c.h.b16 %v1379
    %v1619 = vunpack.c.l.b16 %v1380
    %v1620 = vunpack.c.h.b16 %v1380
    %v1621 = vunpack.c.l.b16 %v1381
    %v1622 = vunpack.c.h.b16 %v1381
    %v1623 = vunpack.c.l.b16 %v1382
    %v1624 = vunpack.c.h.b16 %v1382
    %v1625 = vunpack.c.l.b16 %v1383
    %v1626 = vunpack.c.h.b16 %v1383
    %v1627 = vunpack.c.l.b16 %v1384
    %v1628 = vunpack.c.h.b16 %v1384
    %v1629 = vunpack.c.l.b16 %v1385
    %v1630 = vunpack.c.h.b16 %v1385
    %v1631 = vunpack.c.l.b16 %v1386
    %v1632 = vunpack.c.h.b16 %v1386
    %v1633 = vunpack.c.l.b16 %v1387
    %v1634 = vunpack.c.h.b16 %v1387
    %v1635 = vunpack.c.l.b16 %v1388
    %v1636 = vunpack.c.h.b16 %v1388
    %v1637 = vunpack.c.l.b16 %v1389
    %v1638 = vunpack.c.h.b16 %v1389
    %v1639 = vunpack.c.l.b16 %v1390
    %v1640 = vunpack.c.h.b16 %v1390
    %v1641 = vunpack.c.l.b16 %v1391
    %v1642 = vunpack.c.h.b16 %v1391
    %v1643 = vunpack.c.l.b16 %v1392
    %v1644 = vunpack.c.h.b16 %v1392
    %v1645 = vunpack.c.l.b16 %v1393
    %v1646 = vunpack.c.h.b16 %v1393
    %v1647 = vunpack.c.l.b16 %v1394
    %v1648 = vunpack.c.h.b16 %v1394
    %v1649 = vunpack.c.l.b16 %v1395
    %v1650 = vunpack.c.h.b16 %v1395
    %v1651 = vunpack.c.l.b16 %v1396
    %v1652 = vunpack.c.h.b16 %v1396
    %v1653 = vunpack.c.l.b16 %v1397
    %v1654 = vunpack.c.h.b16 %v1397
    %v1655 = vunpack.c.l.b16 %v1398
    %v1656 = vunpack.c.h.b16 %v1398
    %v1657 = vunpack.c.l.b16 %v1399
    %v1658 = vunpack.c.h.b16 %v1399
    %v1659 = vunpack.c.l.b16 %v1400
    %v1660 = vunpack.c.h.b16 %v1400
    %v1661 = vunpack.c.l.b16 %v1401
    %v1662 = vunpack.c.h.b16 %v1401
    %v1663 = vunpack.c.l.b16 %v1402
    %v1664 = vunpack.c.h.b16 %v1402
    %v1665 = vunpack.c.l.b16 %v1403
    %v1666 = vunpack.c.h.b16 %v1403
    %v1667 = vunpack.c.l.b16 %v1404
    %v1668 = vunpack.c.h.b16 %v1404
    %v1669 = vunpack.c.l.b16 %v1405
    %v1670 = vunpack.c.h.b16 %v1405
    %v1671 = vunpack.c.l.b16 %v1406
    %v1672 = vunpack.c.h.b16 %v1406
    %v1673 = vunpack.c.l.b16 %v1407
    %v1674 = vunpack.c.h.b16 %v1407
    %v1675 = vunpack.c.l.b16 %v1408
    %v1676 = vunpack.c.h.b16 %v1408
    %v1677 = vunpack.c.l.b16 %v1409
    %v1678 = vunpack.c.h.b16 %v1409
    %v1679 = vunpack.c.l.b16 %v1410
    %v1680 = vunpack.c.h.b16 %v1410
    %v1681 = vunpack.c.l.b16 %v1411
    %v1682 = vunpack.c.h.b16 %v1411
    %v1683 = vunpack.c.l.b16 %v1412
    %v1684 = vunpack.c.h.b16 %v1412
    %v1685 = vunpack.c.l.b16 %v1413
    %v1686 = vunpack.c.h.b16 %v1413
    %v1687 = vunpack.c.l.b16 %v1414
    %v1688 = vunpack.c.h.b16 %v1414
    %v1689 = vunpack.c.l.b16 %v1415
    %v1690 = vunpack.c.h.b16 %v1415
    %v1691 = vunpack.c.l.b16 %v1416
    %v1692 = vunpack.c.h.b16 %v1416
    %v1693 = vunpack.c.l.b16 %v1417
    %v1694 = vunpack.c.h.b16 %v1417
    %v1695 = vunpack.c.l.b16 %v1418
    %v1696 = vunpack.c.h.b16 %v1418
    %v1697 = vunpack.c.l.b16 %v1419
    %v1698 = vunpack.c.h.b16 %v1419
    %v1699 = vunpack.c.l.b16 %v1420
    %v1700 = vunpack.c.h.b16 %v1420
    %v1701 = vunpack.c.l.b16 %v1421
    %v1702 = vunpack.c.h.b16 %v1421
    %v1703 = vunpack.c.l.b16 %v1422
    %v1704 = vunpack.c.h.b16 %v1422
    %v1705 = vunpack.c.l.b16 %v1423
    %v1706 = vunpack.c.h.b16 %v1423
    %v1707 = vunpack.c.l.b16 %v1424
    %v1708 = vunpack.c.h.b16 %v1424
    %v1709 = vunpack.c.l.b16 %v1425
    %v1710 = vunpack.c.h.b16 %v1425
    %v1711 = vunpack.c.l.b16 %v1426
    %v1712 = vunpack.c.h.b16 %v1426
    %v1713 = vunpack.c.l.b16 %v1427
    %v1714 = vunpack.c.h.b16 %v1427
    %v1715 = vunpack.c.l.b16 %v1428
    %v1716 = vunpack.c.h.b16 %v1428
    %v1717 = vunpack.c.l.b16 %v1429
    %v1718 = vunpack.c.h.b16 %v1429
    %v1719 = vunpack.c.l.b16 %v1430
    %v1720 = vunpack.c.h.b16 %v1430
    %v1721 = vunpack.c.l.b16 %v1431
    %v1722 = vunpack.c.h.b16 %v1431
    %v1723 = vunpack.c.l.b16 %v1432
    %v1724 = vunpack.c.h.b16 %v1432
    %v1725 = vunpack.c.l.b16 %v1433
    %v1726 = vunpack.c.h.b16 %v1433
    %v1727 = vunpack.c.l.b16 %v1434
    %v1728 = vunpack.c.h.b16 %v1434
    %v1729 = vunpack.c.l.b16 %v1435
    %v1730 = vunpack.c.h.b16 %v1435
    %v1731 = vunpack.c.l.b16 %v1436
    %v1732 = vunpack.c.h.b16 %v1436
    %v1733 = vunpack.c.l.b16 %v1437
    %v1734 = vunpack.c.h.b16 %v1437
    %v1735 = vunpack.c.l.b16 %v1438
    %v1736 = vunpack.c.h.b16 %v1438
    %v1737 = vunpack.c.l.b16 %v1439
    %v1738 = vunpack.c.h.b16 %v1439
    %v1739 = vunpack.c.l.b16 %v1440
    %v1740 = vunpack.c.h.b16 %v1440
    %v1741 = vunpack.c.l.b16 %v1441
    %v1742 = vunpack.c.h.b16 %v1441
    %v1743 = vunpack.c.l.b16 %v1442
    %v1744 = vunpack.c.h.b16 %v1442
    %v1745 = vunpack.c.l.b16 %v1443
    %v1746 = vunpack.c.h.b16 %v1443
    %v1747 = vunpack.c.l.b16 %v1444
    %v1748 = vunpack.c.h.b16 %v1444
    %v1749 = vunpack.c.l.b16 %v1445
    %v1750 = vunpack.c.h.b16 %v1445
    %v1751 = vunpack.c.l.b16 %v1446
    %v1752 = vunpack.c.h.b16 %v1446
    %v1753 = vunpack.c.l.b16 %v1447
    %v1754 = vunpack.c.h.b16 %v1447
    %v1755 = vunpack.c.l.b16 %v1448
    %v1756 = vunpack.c.h.b16 %v1448
    %v1757 = vunpack.c.l.b16 %v1449
    %v1758 = vunpack.c.h.b16 %v1449
    %v1759 = vunpack.c.l.b16 %v1450
    %v1760 = vunpack.c.h.b16 %v1450
    %v1761 = vunpack.c.l.b16 %v1451
    %v1762 = vunpack.c.h.b16 %v1451
    %v1763 = vunpack.c.l.b16 %v1452
    %v1764 = vunpack.c.h.b16 %v1452
    %v1765 = vunpack.c.l.b16 %v1453
    %v1766 = vunpack.c.h.b16 %v1453
    %v1767 = vunpack.c.l.b16 %v1454
    %v1768 = vunpack.c.h.b16 %v1454
    %v1769 = vunpack.c.l.b16 %v1455
    %v1770 = vunpack.c.h.b16 %v1455
    %v1771 = vunpack.c.l.b16 %v1456
    %v1772 = vunpack.c.h.b16 %v1456
    %v1773 = vunpack.c.l.b16 %v1457
    %v1774 = vunpack.c.h.b16 %v1457
    %v1775 = vunpack.c.l.b16 %v1458
    %v1776 = vunpack.c.h.b16 %v1458
    %v1777 = vunpack.c.l.b16 %v1459
    %v1778 = vunpack.c.h.b16 %v1459
    %v1779 = vunpack.c.l.b16 %v1460
    %v1780 = vunpack.c.h.b16 %v1460
    %v1781 = vunpack.c.l.b16 %v1461
    %v1782 = vunpack.c.h.b16 %v1461
    %v1783 = vunpack.c.l.b16 %v1462
    %v1784 = vunpack.c.h.b16 %v1462
    %v1785 = vpack.c.b16 %v1599, %v1593
    %v1786 = vpack.c.b16 %v1600, %v1594
    %v1787 = vpack.c.b16 %v1601, %v1595
    %v1788 = vpack.c.b16 %v1602, %v1596
    %v1789 = vpack.c.b16 %v1603, %v1597
    %v1790 = vpack.c.b16 %v1604, %v1598
    %v1791 = vpack.c.b16 %v1611, %v1605
    %v1792 = vpack.c.b16 %v1612, %v1606
    %v1793 = vpack.c.b16 %v1613, %v1607
    %v1794 = vpack.c.b16 %v1614, %v1608
    %v1795 = vpack.c.b16 %v1615, %v1609
    %v1796 = vpack.c.b16 %v1616, %v1610
    %v1797 = vpack.c.b16 %v1623, %v1617
    %v1798 = vpack.c.b16 %v1624, %v1618
    %v1799 = vpack.c.b16 %v1625, %v1619
    %v1800 = vpack.c.b16 %v1626, %v1620
    %v1801 = vpack.c.b16 %v1627, %v1621
    %v1802 = vpack.c.b16 %v1628, %v1622
    %v1803 = vpack.c.b16 %v1635, %v1629
    %v1804 = vpack.c.b16 %v1636, %v1630
    %v1805 = vpack.c.b16 %v1637, %v1631
    %v1806 = vpack.c.b16 %v1638, %v1632
    %v1807 = vpack.c.b16 %v1639, %v1633
    %v1808 = vpack.c.b16 %v1640, %v1634
    %v1809 = vpack.c.b16 %v1647, %v1641
    %v1810 = vpack.c.b16 %v1648, %v1642
    %v1811 = vpack.c.b16 %v1649, %v1643
    %v1812 = vpack.c.b16 %v1650, %v1644
    %v1813 = vpack.c.b16 %v1651, %v1645
    %v1814 = vpack.c.b16 %v1652, %v1646
    %v1815 = vpack.c.b16 %v1659, %v1653
    %v1816 = vpack.c.b16 %v1660, %v1654
    %v1817 = vpack.c.b16 %v1661, %v1655
    %v1818 = vpack.c.b16 %v1662, %v1656
    %v1819 = vpack.c.b16 %v1663, %v1657
    %v1820 = vpack.c.b16 %v1664, %v1658
    %v1821 = vpack.c.b16 %v1671, %v1665
    %v1822 = vpack.c.b16 %v1672, %v1666
    %v1823 = vpack.c.b16 %v1673, %v1667
    %v1824 = vpack.c.b16 %v1674, %v1668
    %v1825 = vpack.c.b16 %v1675, %v1669
    %v1826 = vpack.c.b16 %v1676, %v1670
    %v1827 = vpack.c.b16 %v1683, %v1677
    %v1828 = vpack.c.b16 %v1684, %v1678
    %v1829 = vpack.c.b16 %v1685, %v1679
    %v1830 = vpack.c.b16 %v1686, %v1680
    %v1831 = vpack.c.b16 %v1687, %v1681
    %v1832 = vpack.c.b16 %v1688, %v1682
    %v1833 = vpack.c.b16 %v1695, %v1689
    %v1834 = vpack.c.b16 %v1696, %v1690
    %v1835 = vpack.c.b16 %v1697, %v1691
    %v1836 = vpack.c.b16 %v1698, %v1692
    %v1837 = vpack.c.b16 %v1699, %v1693
    %v1838 = vpack.c.b16 %v1700, %v1694
    %v1839 = vpack.c.b16 %v1707, %v1701
    %v1840 = vpack.c.b16 %v1708, %v1702
    %v1841 = vpack.c.b16 %v1709, %v1703
    %v1842 = vpack.c.b16 %v1710, %v1704
    %v1843 = vpack.c.b16 %v1711, %v1705
    %v1844 = vpack.c.b16 %v1712, %v1706
    %v1845 = vpack.c.b16 %v1719, %v1713
    %v1846 = vpack.c.b16 %v1720, %v1714
    %v1847 = vpack.c.b16 %v1721, %v1715
    %v1848 = vpack.c.b16 %v1722, %v1716
    %v1849 = vpack.c.b16 %v1723, %v1717
    %v1850 = vpack.c.b16 %v1724, %v1718
    %v1851 = vpack.c.b16 %v1731, %v1725
    %v1852 = vpack.c.b16 %v1732, %v1726
    %v1853 = vpack.c.b16 %v1733, %v1727
    %v1854 = vpack.c.b16 %v1734, %v1728
    %v1855 = vpack.c.b16 %v1735, %v1729
    %v1856 = vpack.c.b16 %v1736, %v1730
    %v1857 = vpack.c.b16 %v1743, %v1737
    %v1858 = vpack.c.b16 %v1744, %v1738
    %v1859 = vpack.c.b16 %v1745, %v1739
    %v1860 = vpack.c.b16 %v1746, %v1740
    %v1861 = vpack.c.b16 %v1747, %v1741
    %v1862 = vpack.c.b16 %v1748, %v1742
    %v1863 = vpack.c.b16 %v1755, %v1749
    %v1864 = vpack.c.b16 %v1756, %v1750
    %v1865 = vpack.c.b16 %v1757, %v1751
    %v1866 = vpack.c.b16 %v1758, %v1752
    %v1867 = vpack.c.b16 %v1759, %v1753
    %v1868 = vpack.c.b16 %v1760, %v1754
    %v1869 = vpack.c.b16 %v1767, %v1761
    %v1870 = vpack.c.b16 %v1768, %v1762
    %v1871 = vpack.c.b16 %v1769, %v1763
    %v1872 = vpack.c.b16 %v1770, %v1764
    %v1873 = vpack.c.b16 %v1771, %v1765
    %v1874 = vpack.c.b16 %v1772, %v1766
    %v1875 = vpack.c.b16 %v1779, %v1773
    %v1876 = vpack.c.b16 %v1780, %v1774
    %v1877 = vpack.c.b16 %v1781, %v1775
    %v1878 = vpack.c.b16 %v1782, %v1776
    %v1879 = vpack.c.b16 %v1783, %v1777
    %v1880 = vpack.c.b16 %v1784, %v1778
    %1977 = vmatprep.subr.bf16.mxu0 %v1828
    %1978 = vmatpush1.bf16.msra.mxu0 %v1827
    %1979 = vmatprep.subr.bf16.mxu0 %v1822
    %1980 = vmatpush1.bf16.msra.mxu0 %v1821
    %1981 = vmatprep.subr.bf16.mxu0 %v1816
    %1982 = vmatpush1.bf16.msra.mxu0 %v1815
    %1983 = vmatprep.subr.bf16.mxu0 %v1810
    %1984 = vmatpush1.bf16.msra.mxu0 %v1809
    %1985 = vmatprep.subr.bf16.mxu0 %v1804
    %1986 = vmatpush1.bf16.msra.mxu0 %v1803
    %1987 = vmatprep.subr.bf16.mxu0 %v1798
    %1988 = vmatpush1.bf16.msra.mxu0 %v1797
    %1989 = vmatprep.subr.bf16.mxu0 %v1792
    %1990 = vmatpush1.bf16.msra.mxu0 %v1791
    %1991 = vmatprep.subr.bf16.mxu0 %v1786
    %1992 = vmatpush1.bf16.msra.mxu0 %v1785
    %1993 = vmatprep.subr.bf16.mxu0 %v1876
    %1994 = vmatpush2.bf16.msra.mxu0 %v1875
    %1995 = vmatprep.subr.bf16.mxu0 %v1870
    %1996 = vmatpush2.bf16.msra.mxu0 %v1869
    %1997 = vmatprep.subr.bf16.mxu0 %v1864
    %1998 = vmatpush2.bf16.msra.mxu0 %v1863
    %1999 = vmatprep.subr.bf16.mxu0 %v1858
    %2000 = vmatpush2.bf16.msra.mxu0 %v1857
    %2001 = vmatprep.subr.bf16.mxu0 %v1852
    %2002 = vmatpush2.bf16.msra.mxu0 %v1851
    %2003 = vmatprep.subr.bf16.mxu0 %v1846
    %2004 = vmatpush2.bf16.msra.mxu0 %v1845
    %2005 = vmatprep.subr.bf16.mxu0 %v1840
    %2006 = vmatpush2.bf16.msra.mxu0 %v1839
    %2007 = vmatprep.subr.bf16.mxu0 %v1834
    %2008 = vmatpush2.bf16.msra.mxu0 %v1833
    %2009 = vmatprep.mubr.bf16.mxu0 %v1464
    %2010 = vmatmul.mubr.bf16.gmra.mxu0 %v1463
    %v2011 = vpop.f32.mrf.mxu0
    %v2012 = vadd.f32 %v1470, %v2011
    %v2013 = vpop.f32.mrf.mxu0
    %v2014 = vadd.f32 %v1474, %v2013
    %v2015 = vpop.f32.mrf.mxu0
    %v2016 = vpop.f32.mrf.mxu0
    %2017 = vdwg.mxu0
    %2018 = vmatprep.subr.bf16.mxu0 %v1830
    %2019 = vmatpush1.bf16.msra.mxu0 %v1829
    %2020 = vmatprep.subr.bf16.mxu0 %v1824
    %2021 = vmatpush1.bf16.msra.mxu0 %v1823
    %2022 = vmatprep.subr.bf16.mxu0 %v1818
    %2023 = vmatpush1.bf16.msra.mxu0 %v1817
    %2024 = vmatprep.subr.bf16.mxu0 %v1812
    %2025 = vmatpush1.bf16.msra.mxu0 %v1811
    %2026 = vmatprep.subr.bf16.mxu0 %v1806
    %2027 = vmatpush1.bf16.msra.mxu0 %v1805
    %2028 = vmatprep.subr.bf16.mxu0 %v1800
    %2029 = vmatpush1.bf16.msra.mxu0 %v1799
    %2030 = vmatprep.subr.bf16.mxu0 %v1794
    %2031 = vmatpush1.bf16.msra.mxu0 %v1793
    %2032 = vmatprep.subr.bf16.mxu0 %v1788
    %2033 = vmatpush1.bf16.msra.mxu0 %v1787
    %2034 = vmatprep.subr.bf16.mxu0 %v1878
    %2035 = vmatpush2.bf16.msra.mxu0 %v1877
    %2036 = vmatprep.subr.bf16.mxu0 %v1872
    %2037 = vmatpush2.bf16.msra.mxu0 %v1871
    %2038 = vmatprep.subr.bf16.mxu0 %v1866
    %2039 = vmatpush2.bf16.msra.mxu0 %v1865
    %2040 = vmatprep.subr.bf16.mxu0 %v1860
    %2041 = vmatpush2.bf16.msra.mxu0 %v1859
    %2042 = vmatprep.subr.bf16.mxu0 %v1854
    %2043 = vmatpush2.bf16.msra.mxu0 %v1853
    %2044 = vmatprep.subr.bf16.mxu0 %v1848
    %2045 = vmatpush2.bf16.msra.mxu0 %v1847
    %2046 = vmatprep.subr.bf16.mxu0 %v1842
    %2047 = vmatpush2.bf16.msra.mxu0 %v1841
    %2048 = vmatprep.subr.bf16.mxu0 %v1836
    %2049 = vmatpush2.bf16.msra.mxu0 %v1835
    %2050 = vmatprep.mubr.bf16.mxu0 %v1464
    %2051 = vmatmul.mubr.bf16.gmra.mxu0 %v1463
    %v2052 = vpop.f32.mrf.mxu0
    %v2053 = vadd.f32 %v1478, %v2052
    %v2054 = vpop.f32.mrf.mxu0
    %v2055 = vadd.f32 %v1482, %v2054
    %v2056 = vpop.f32.mrf.mxu0
    %v2057 = vpop.f32.mrf.mxu0
    %2058 = vdwg.mxu0
    %2059 = vmatprep.subr.bf16.mxu0 %v1832
    %2060 = vmatpush1.bf16.msra.mxu0 %v1831
    %2061 = vmatprep.subr.bf16.mxu0 %v1826
    %2062 = vmatpush1.bf16.msra.mxu0 %v1825
    %2063 = vmatprep.subr.bf16.mxu0 %v1820
    %2064 = vmatpush1.bf16.msra.mxu0 %v1819
    %2065 = vmatprep.subr.bf16.mxu0 %v1814
    %2066 = vmatpush1.bf16.msra.mxu0 %v1813
    %2067 = vmatprep.subr.bf16.mxu0 %v1808
    %2068 = vmatpush1.bf16.msra.mxu0 %v1807
    %2069 = vmatprep.subr.bf16.mxu0 %v1802
    %2070 = vmatpush1.bf16.msra.mxu0 %v1801
    %2071 = vmatprep.subr.bf16.mxu0 %v1796
    %2072 = vmatpush1.bf16.msra.mxu0 %v1795
    %2073 = vmatprep.subr.bf16.mxu0 %v1790
    %2074 = vmatpush1.bf16.msra.mxu0 %v1789
    %2075 = vmatprep.subr.bf16.mxu0 %v1880
    %2076 = vmatpush2.bf16.msra.mxu0 %v1879
    %2077 = vmatprep.subr.bf16.mxu0 %v1874
    %2078 = vmatpush2.bf16.msra.mxu0 %v1873
    %2079 = vmatprep.subr.bf16.mxu0 %v1868
    %2080 = vmatpush2.bf16.msra.mxu0 %v1867
    %2081 = vmatprep.subr.bf16.mxu0 %v1862
    %2082 = vmatpush2.bf16.msra.mxu0 %v1861
    %2083 = vmatprep.subr.bf16.mxu0 %v1856
    %2084 = vmatpush2.bf16.msra.mxu0 %v1855
    %2085 = vmatprep.subr.bf16.mxu0 %v1850
    %2086 = vmatpush2.bf16.msra.mxu0 %v1849
    %2087 = vmatprep.subr.bf16.mxu0 %v1844
    %2088 = vmatpush2.bf16.msra.mxu0 %v1843
    %2089 = vmatprep.subr.bf16.mxu0 %v1838
    %2090 = vmatpush2.bf16.msra.mxu0 %v1837
    %2091 = vmatprep.mubr.bf16.mxu0 %v1464
    %2092 = vmatmul.mubr.bf16.gmra.mxu0 %v1463
    %v2093 = vpop.f32.mrf.mxu0
    %v2094 = vadd.f32 %v1486, %v2093
    %v2095 = vpop.f32.mrf.mxu0
    %v2096 = vadd.f32 %v1490, %v2095
    %v2097 = vpop.f32.mrf.mxu0
    %v2098 = vpop.f32.mrf.mxu0
    %2099 = vdwg.mxu0
    %v2100 = vpack.c.bf16 %v2012, %v2012
    %v2101 = vpack.c.bf16 %v2053, %v2053
    %vm2102 = vcmask 523264
    %v2104 = vsel %vm2102, %v2100, 0
    %v2107 = vsel %vm2102, %v2101, 0
    %2109 = vmatprep.subr.bf16.mxu0 0
    %2110 = vmatpush1.bf16.xpose.msra.mxu0 0
    %2111 = vmatprep.subr.bf16.mxu0 0
    %2112 = vmatpush1.bf16.xpose.msra.mxu0 0
    %2113 = vmatprep.subr.bf16.mxu0 0
    %2114 = vmatpush1.bf16.xpose.msra.mxu0 0
    %2115 = vmatprep.subr.bf16.mxu0 0
    %2116 = vmatpush1.bf16.xpose.msra.mxu0 0
    %2117 = vmatprep.subr.bf16.mxu0 0
    %2118 = vmatpush1.bf16.xpose.msra.mxu0 0
    %2119 = vmatprep.subr.bf16.mxu0 0
    %2120 = vmatpush1.bf16.xpose.msra.mxu0 0
    %2121 = vmatprep.subr.bf16.mxu0 0
    %2122 = vmatpush1.bf16.xpose.msra.mxu0 0
    %2123 = vmatprep.subr.bf16.mxu0 0
    %2124 = vmatpush1.bf16.xpose.msra.mxu0 %v2107
    %2125 = vmatprep.subr.bf16.mxu0 0
    %2126 = vmatpush2.bf16.xpose.msra.mxu0 0
    %2127 = vmatprep.subr.bf16.mxu0 0
    %2128 = vmatpush2.bf16.xpose.msra.mxu0 0
    %2129 = vmatprep.subr.bf16.mxu0 0
    %2130 = vmatpush2.bf16.xpose.msra.mxu0 0
    %2131 = vmatprep.subr.bf16.mxu0 0
    %2132 = vmatpush2.bf16.xpose.msra.mxu0 0
    %2133 = vmatprep.subr.bf16.mxu0 0
    %2134 = vmatpush2.bf16.xpose.msra.mxu0 0
    %2135 = vmatprep.subr.bf16.mxu0 0
    %2136 = vmatpush2.bf16.xpose.msra.mxu0 0
    %2137 = vmatprep.subr.bf16.mxu0 0
    %2138 = vmatpush2.bf16.xpose.msra.mxu0 0
    %2139 = vmatprep.subr.bf16.mxu0 0
    %2140 = vmatpush2.bf16.xpose.msra.mxu0 0
    %2141 = vmatprep.mubr.bf16.mxu0 0
    %2142 = vmatmul.mubr.bf16.gmra.mxu0 %v2104
    %v2143 = vpop.f32.mrf.mxu0
    %v2144 = vadd.f32 0.0, %v2143
    %v2145 = vpop.f32.mrf.mxu0
    %v2146 = vpop.f32.mrf.mxu0
    %v2147 = vpop.f32.mrf.mxu0
    %2148 = vdwg.mxu0
    %vm2149 = vcmask 64512
    %v2150 = vsel %vm2149, %v2144, -inf
    %2151 = vmax.xlane.f32.xlu0 %v2150
    %v2152 = vpop.xlane.xlu0 %2151
    %v2153 = vsub.f32 %v2144, %v2152
    %v2154 = vmul.f32 %v2153, 1.442695
    %v2155 = vpow.pop %v2154
    %v2156 = vsel %vm2149, %v2155, 0.0
    %2157 = vadd.xlane.f32.xlu0 %v2156
    %v2158 = vpop.xlane.xlu0 %2157
    %v2159 = vrcp.pop %v2158
    %v2160 = vmul.f32 %v2155, %v2159
    %v2161 = vpack.c.bf16 %v2160, %v2160
    %v2162 = vpack.c.bf16 %v2094, %v2094
    %v2164 = vsel %vm2149, %v2161, 0
    %v2167 = vsel %vm516, %v2162, 0
    %2169 = vmatprep.subr.bf16.mxu0 0
    %2170 = vmatpush1.bf16.msra.mxu0 0
    %2171 = vmatprep.subr.bf16.mxu0 0
    %2172 = vmatpush1.bf16.msra.mxu0 0
    %2173 = vmatprep.subr.bf16.mxu0 0
    %2174 = vmatpush1.bf16.msra.mxu0 0
    %2175 = vmatprep.subr.bf16.mxu0 0
    %2176 = vmatpush1.bf16.msra.mxu0 0
    %2177 = vmatprep.subr.bf16.mxu0 0
    %2178 = vmatpush1.bf16.msra.mxu0 0
    %2179 = vmatprep.subr.bf16.mxu0 0
    %2180 = vmatpush1.bf16.msra.mxu0 0
    %2181 = vmatprep.subr.bf16.mxu0 0
    %2182 = vmatpush1.bf16.msra.mxu0 0
    %2183 = vmatprep.subr.bf16.mxu0 0
    %2184 = vmatpush1.bf16.msra.mxu0 %v2167
    %2185 = vmatprep.subr.bf16.mxu0 0
    %2186 = vmatpush2.bf16.msra.mxu0 0
    %2187 = vmatprep.subr.bf16.mxu0 0
    %2188 = vmatpush2.bf16.msra.mxu0 0
    %2189 = vmatprep.subr.bf16.mxu0 0
    %2190 = vmatpush2.bf16.msra.mxu0 0
    %2191 = vmatprep.subr.bf16.mxu0 0
    %2192 = vmatpush2.bf16.msra.mxu0 0
    %2193 = vmatprep.subr.bf16.mxu0 0
    %2194 = vmatpush2.bf16.msra.mxu0 0
    %2195 = vmatprep.subr.bf16.mxu0 0
    %2196 = vmatpush2.bf16.msra.mxu0 0
    %2197 = vmatprep.subr.bf16.mxu0 0
    %2198 = vmatpush2.bf16.msra.mxu0 0
    %2199 = vmatprep.subr.bf16.mxu0 0
    %2200 = vmatpush2.bf16.msra.mxu0 0
    %2201 = vmatprep.mubr.bf16.mxu0 0
    %2202 = vmatmul.mubr.bf16.gmra.mxu0 %v2164
    %v2203 = vpop.f32.mrf.mxu0
    %v2204 = vadd.f32 0.0, %v2203
    %v2205 = vpop.f32.mrf.mxu0
    %v2206 = vpop.f32.mrf.mxu0
    %v2207 = vpop.f32.mrf.mxu0
    %2208 = vdwg.mxu0
    %2210 = vrot.lane.b32.xlu0 %v2100, 64
    %v2211 = vpop.permute.xlu0 %2210
    %2213 = vrot.lane.b32.xlu0 %v2101, 64
    %v2214 = vpop.permute.xlu0 %2213
    %v2216 = vsel %vm2102, %v2211, 0
    %v2219 = vsel %vm2102, %v2214, 0
    %2221 = vmatprep.subr.bf16.mxu0 0
    %2222 = vmatpush1.bf16.xpose.msra.mxu0 0
    %2223 = vmatprep.subr.bf16.mxu0 0
    %2224 = vmatpush1.bf16.xpose.msra.mxu0 0
    %2225 = vmatprep.subr.bf16.mxu0 0
    %2226 = vmatpush1.bf16.xpose.msra.mxu0 0
    %2227 = vmatprep.subr.bf16.mxu0 0
    %2228 = vmatpush1.bf16.xpose.msra.mxu0 0
    %2229 = vmatprep.subr.bf16.mxu0 0
    %2230 = vmatpush1.bf16.xpose.msra.mxu0 0
    %2231 = vmatprep.subr.bf16.mxu0 0
    %2232 = vmatpush1.bf16.xpose.msra.mxu0 0
    %2233 = vmatprep.subr.bf16.mxu0 0
    %2234 = vmatpush1.bf16.xpose.msra.mxu0 0
    %2235 = vmatprep.subr.bf16.mxu0 0
    %2236 = vmatpush1.bf16.xpose.msra.mxu0 %v2219
    %2237 = vmatprep.subr.bf16.mxu0 0
    %2238 = vmatpush2.bf16.xpose.msra.mxu0 0
    %2239 = vmatprep.subr.bf16.mxu0 0
    %2240 = vmatpush2.bf16.xpose.msra.mxu0 0
    %2241 = vmatprep.subr.bf16.mxu0 0
    %2242 = vmatpush2.bf16.xpose.msra.mxu0 0
    %2243 = vmatprep.subr.bf16.mxu0 0
    %2244 = vmatpush2.bf16.xpose.msra.mxu0 0
    %2245 = vmatprep.subr.bf16.mxu0 0
    %2246 = vmatpush2.bf16.xpose.msra.mxu0 0
    %2247 = vmatprep.subr.bf16.mxu0 0
    %2248 = vmatpush2.bf16.xpose.msra.mxu0 0
    %2249 = vmatprep.subr.bf16.mxu0 0
    %2250 = vmatpush2.bf16.xpose.msra.mxu0 0
    %2251 = vmatprep.subr.bf16.mxu0 0
    %2252 = vmatpush2.bf16.xpose.msra.mxu0 0
    %2253 = vmatprep.mubr.bf16.mxu0 0
    %2254 = vmatmul.mubr.bf16.gmra.mxu0 %v2216
    %v2255 = vpop.f32.mrf.mxu0
    %v2256 = vadd.f32 0.0, %v2255
    %v2257 = vpop.f32.mrf.mxu0
    %v2258 = vpop.f32.mrf.mxu0
    %v2259 = vpop.f32.mrf.mxu0
    %2260 = vdwg.mxu0
    %v2261 = vsel %vm2149, %v2256, -inf
    %2262 = vmax.xlane.f32.xlu0 %v2261
    %v2263 = vpop.xlane.xlu0 %2262
    %v2264 = vsub.f32 %v2256, %v2263
    %v2265 = vmul.f32 %v2264, 1.442695
    %v2266 = vpow.pop %v2265
    %v2267 = vsel %vm2149, %v2266, 0.0
    %2268 = vadd.xlane.f32.xlu0 %v2267
    %v2269 = vpop.xlane.xlu0 %2268
    %v2270 = vrcp.pop %v2269
    %v2271 = vmul.f32 %v2266, %v2270
    %v2272 = vpack.c.bf16 %v2271, %v2271
    %2274 = vrot.lane.b32.xlu0 %v2162, 64
    %v2275 = vpop.permute.xlu0 %2274
    %v2277 = vsel %vm2149, %v2272, 0
    %v2280 = vsel %vm516, %v2275, 0
    %2282 = vmatprep.subr.bf16.mxu0 0
    %2283 = vmatpush1.bf16.msra.mxu0 0
    %2284 = vmatprep.subr.bf16.mxu0 0
    %2285 = vmatpush1.bf16.msra.mxu0 0
    %2286 = vmatprep.subr.bf16.mxu0 0
    %2287 = vmatpush1.bf16.msra.mxu0 0
    %2288 = vmatprep.subr.bf16.mxu0 0
    %2289 = vmatpush1.bf16.msra.mxu0 0
    %2290 = vmatprep.subr.bf16.mxu0 0
    %2291 = vmatpush1.bf16.msra.mxu0 0
    %2292 = vmatprep.subr.bf16.mxu0 0
    %2293 = vmatpush1.bf16.msra.mxu0 0
    %2294 = vmatprep.subr.bf16.mxu0 0
    %2295 = vmatpush1.bf16.msra.mxu0 0
    %2296 = vmatprep.subr.bf16.mxu0 0
    %2297 = vmatpush1.bf16.msra.mxu0 %v2280
    %2298 = vmatprep.subr.bf16.mxu0 0
    %2299 = vmatpush2.bf16.msra.mxu0 0
    %2300 = vmatprep.subr.bf16.mxu0 0
    %2301 = vmatpush2.bf16.msra.mxu0 0
    %2302 = vmatprep.subr.bf16.mxu0 0
    %2303 = vmatpush2.bf16.msra.mxu0 0
    %2304 = vmatprep.subr.bf16.mxu0 0
    %2305 = vmatpush2.bf16.msra.mxu0 0
    %2306 = vmatprep.subr.bf16.mxu0 0
    %2307 = vmatpush2.bf16.msra.mxu0 0
    %2308 = vmatprep.subr.bf16.mxu0 0
    %2309 = vmatpush2.bf16.msra.mxu0 0
    %2310 = vmatprep.subr.bf16.mxu0 0
    %2311 = vmatpush2.bf16.msra.mxu0 0
    %2312 = vmatprep.subr.bf16.mxu0 0
    %2313 = vmatpush2.bf16.msra.mxu0 0
    %2314 = vmatprep.mubr.bf16.mxu0 0
    %2315 = vmatmul.mubr.bf16.gmra.mxu0 %v2277
    %v2316 = vpop.f32.mrf.mxu0
    %v2317 = vadd.f32 0.0, %v2316
    %v2318 = vpop.f32.mrf.mxu0
    %v2319 = vpop.f32.mrf.mxu0
    %v2320 = vpop.f32.mrf.mxu0
    %2321 = vdwg.mxu0
    %v2322 = vpack.c.bf16 %v2014, %v2014
    %v2323 = vpack.c.bf16 %v2055, %v2055
    %v2325 = vsel %vm2102, %v2322, 0
    %v2328 = vsel %vm2102, %v2323, 0
    %2330 = vmatprep.subr.bf16.mxu0 0
    %2331 = vmatpush1.bf16.xpose.msra.mxu0 0
    %2332 = vmatprep.subr.bf16.mxu0 0
    %2333 = vmatpush1.bf16.xpose.msra.mxu0 0
    %2334 = vmatprep.subr.bf16.mxu0 0
    %2335 = vmatpush1.bf16.xpose.msra.mxu0 0
    %2336 = vmatprep.subr.bf16.mxu0 0
    %2337 = vmatpush1.bf16.xpose.msra.mxu0 0
    %2338 = vmatprep.subr.bf16.mxu0 0
    %2339 = vmatpush1.bf16.xpose.msra.mxu0 0
    %2340 = vmatprep.subr.bf16.mxu0 0
    %2341 = vmatpush1.bf16.xpose.msra.mxu0 0
    %2342 = vmatprep.subr.bf16.mxu0 0
    %2343 = vmatpush1.bf16.xpose.msra.mxu0 0
    %2344 = vmatprep.subr.bf16.mxu0 0
    %2345 = vmatpush1.bf16.xpose.msra.mxu0 %v2328
    %2346 = vmatprep.subr.bf16.mxu0 0
    %2347 = vmatpush2.bf16.xpose.msra.mxu0 0
    %2348 = vmatprep.subr.bf16.mxu0 0
    %2349 = vmatpush2.bf16.xpose.msra.mxu0 0
    %2350 = vmatprep.subr.bf16.mxu0 0
    %2351 = vmatpush2.bf16.xpose.msra.mxu0 0
    %2352 = vmatprep.subr.bf16.mxu0 0
    %2353 = vmatpush2.bf16.xpose.msra.mxu0 0
    %2354 = vmatprep.subr.bf16.mxu0 0
    %2355 = vmatpush2.bf16.xpose.msra.mxu0 0
    %2356 = vmatprep.subr.bf16.mxu0 0
    %2357 = vmatpush2.bf16.xpose.msra.mxu0 0
    %2358 = vmatprep.subr.bf16.mxu0 0
    %2359 = vmatpush2.bf16.xpose.msra.mxu0 0
    %2360 = vmatprep.subr.bf16.mxu0 0
    %2361 = vmatpush2.bf16.xpose.msra.mxu0 0
    %2362 = vmatprep.mubr.bf16.mxu0 0
    %2363 = vmatmul.mubr.bf16.gmra.mxu0 %v2325
    %v2364 = vpop.f32.mrf.mxu0
    %v2365 = vadd.f32 0.0, %v2364
    %v2366 = vpop.f32.mrf.mxu0
    %v2367 = vpop.f32.mrf.mxu0
    %v2368 = vpop.f32.mrf.mxu0
    %2369 = vdwg.mxu0
    %v2370 = vsel %vm2149, %v2365, -inf
    %2371 = vmax.xlane.f32.xlu0 %v2370
    %v2372 = vpop.xlane.xlu0 %2371
    %v2373 = vsub.f32 %v2365, %v2372
    %v2374 = vmul.f32 %v2373, 1.442695
    %v2375 = vpow.pop %v2374
    %v2376 = vsel %vm2149, %v2375, 0.0
    %2377 = vadd.xlane.f32.xlu0 %v2376
    %v2378 = vpop.xlane.xlu0 %2377
    %v2379 = vrcp.pop %v2378
    %v2380 = vmul.f32 %v2375, %v2379
    %v2381 = vpack.c.bf16 %v2380, %v2380
    %v2382 = vpack.c.bf16 %v2096, %v2096
    %v2384 = vsel %vm2149, %v2381, 0
    %v2387 = vsel %vm516, %v2382, 0
    %2389 = vmatprep.subr.bf16.mxu0 0
    %2390 = vmatpush1.bf16.msra.mxu0 0
    %2391 = vmatprep.subr.bf16.mxu0 0
    %2392 = vmatpush1.bf16.msra.mxu0 0
    %2393 = vmatprep.subr.bf16.mxu0 0
    %2394 = vmatpush1.bf16.msra.mxu0 0
    %2395 = vmatprep.subr.bf16.mxu0 0
    %2396 = vmatpush1.bf16.msra.mxu0 0
    %2397 = vmatprep.subr.bf16.mxu0 0
    %2398 = vmatpush1.bf16.msra.mxu0 0
    %2399 = vmatprep.subr.bf16.mxu0 0
    %2400 = vmatpush1.bf16.msra.mxu0 0
    %2401 = vmatprep.subr.bf16.mxu0 0
    %2402 = vmatpush1.bf16.msra.mxu0 0
    %2403 = vmatprep.subr.bf16.mxu0 0
    %2404 = vmatpush1.bf16.msra.mxu0 %v2387
    %2405 = vmatprep.subr.bf16.mxu0 0
    %2406 = vmatpush2.bf16.msra.mxu0 0
    %2407 = vmatprep.subr.bf16.mxu0 0
    %2408 = vmatpush2.bf16.msra.mxu0 0
    %2409 = vmatprep.subr.bf16.mxu0 0
    %2410 = vmatpush2.bf16.msra.mxu0 0
    %2411 = vmatprep.subr.bf16.mxu0 0
    %2412 = vmatpush2.bf16.msra.mxu0 0
    %2413 = vmatprep.subr.bf16.mxu0 0
    %2414 = vmatpush2.bf16.msra.mxu0 0
    %2415 = vmatprep.subr.bf16.mxu0 0
    %2416 = vmatpush2.bf16.msra.mxu0 0
    %2417 = vmatprep.subr.bf16.mxu0 0
    %2418 = vmatpush2.bf16.msra.mxu0 0
    %2419 = vmatprep.subr.bf16.mxu0 0
    %2420 = vmatpush2.bf16.msra.mxu0 0
    %2421 = vmatprep.mubr.bf16.mxu0 0
    %2422 = vmatmul.mubr.bf16.gmra.mxu0 %v2384
    %v2423 = vpop.f32.mrf.mxu0
    %v2424 = vadd.f32 0.0, %v2423
    %v2425 = vpop.f32.mrf.mxu0
    %v2426 = vpop.f32.mrf.mxu0
    %v2427 = vpop.f32.mrf.mxu0
    %2428 = vdwg.mxu0
    %2430 = vrot.lane.b32.xlu0 %v2322, 64
    %v2431 = vpop.permute.xlu0 %2430
    %2433 = vrot.lane.b32.xlu0 %v2323, 64
    %v2434 = vpop.permute.xlu0 %2433
    %v2436 = vsel %vm2102, %v2431, 0
    %v2439 = vsel %vm2102, %v2434, 0
    %2441 = vmatprep.subr.bf16.mxu0 0
    %2442 = vmatpush1.bf16.xpose.msra.mxu0 0
    %2443 = vmatprep.subr.bf16.mxu0 0
    %2444 = vmatpush1.bf16.xpose.msra.mxu0 0
    %2445 = vmatprep.subr.bf16.mxu0 0
    %2446 = vmatpush1.bf16.xpose.msra.mxu0 0
    %2447 = vmatprep.subr.bf16.mxu0 0
    %2448 = vmatpush1.bf16.xpose.msra.mxu0 0
    %2449 = vmatprep.subr.bf16.mxu0 0
    %2450 = vmatpush1.bf16.xpose.msra.mxu0 0
    %2451 = vmatprep.subr.bf16.mxu0 0
    %2452 = vmatpush1.bf16.xpose.msra.mxu0 0
    %2453 = vmatprep.subr.bf16.mxu0 0
    %2454 = vmatpush1.bf16.xpose.msra.mxu0 0
    %2455 = vmatprep.subr.bf16.mxu0 0
    %2456 = vmatpush1.bf16.xpose.msra.mxu0 %v2439
    %2457 = vmatprep.subr.bf16.mxu0 0
    %2458 = vmatpush2.bf16.xpose.msra.mxu0 0
    %2459 = vmatprep.subr.bf16.mxu0 0
    %2460 = vmatpush2.bf16.xpose.msra.mxu0 0
    %2461 = vmatprep.subr.bf16.mxu0 0
    %2462 = vmatpush2.bf16.xpose.msra.mxu0 0
    %2463 = vmatprep.subr.bf16.mxu0 0
    %2464 = vmatpush2.bf16.xpose.msra.mxu0 0
    %2465 = vmatprep.subr.bf16.mxu0 0
    %2466 = vmatpush2.bf16.xpose.msra.mxu0 0
    %2467 = vmatprep.subr.bf16.mxu0 0
    %2468 = vmatpush2.bf16.xpose.msra.mxu0 0
    %2469 = vmatprep.subr.bf16.mxu0 0
    %2470 = vmatpush2.bf16.xpose.msra.mxu0 0
    %2471 = vmatprep.subr.bf16.mxu0 0
    %2472 = vmatpush2.bf16.xpose.msra.mxu0 0
    %2473 = vmatprep.mubr.bf16.mxu0 0
    %2474 = vmatmul.mubr.bf16.gmra.mxu0 %v2436
    %v2475 = vpop.f32.mrf.mxu0
    %v2476 = vadd.f32 0.0, %v2475
    %v2477 = vpop.f32.mrf.mxu0
    %v2478 = vpop.f32.mrf.mxu0
    %v2479 = vpop.f32.mrf.mxu0
    %2480 = vdwg.mxu0
    %v2481 = vsel %vm2149, %v2476, -inf
    %2482 = vmax.xlane.f32.xlu0 %v2481
    %v2483 = vpop.xlane.xlu0 %2482
    %v2484 = vsub.f32 %v2476, %v2483
    %v2485 = vmul.f32 %v2484, 1.442695
    %v2486 = vpow.pop %v2485
    %v2487 = vsel %vm2149, %v2486, 0.0
    %2488 = vadd.xlane.f32.xlu0 %v2487
    %v2489 = vpop.xlane.xlu0 %2488
    %v2490 = vrcp.pop %v2489
    %v2491 = vmul.f32 %v2486, %v2490
    %v2492 = vpack.c.bf16 %v2491, %v2491
    %2494 = vrot.lane.b32.xlu0 %v2382, 64
    %v2495 = vpop.permute.xlu0 %2494
    %v2497 = vsel %vm2149, %v2492, 0
    %v2500 = vsel %vm516, %v2495, 0
    %2502 = vmatprep.subr.bf16.mxu0 0
    %2503 = vmatpush1.bf16.msra.mxu0 0
    %2504 = vmatprep.subr.bf16.mxu0 0
    %2505 = vmatpush1.bf16.msra.mxu0 0
    %2506 = vmatprep.subr.bf16.mxu0 0
    %2507 = vmatpush1.bf16.msra.mxu0 0
    %2508 = vmatprep.subr.bf16.mxu0 0
    %2509 = vmatpush1.bf16.msra.mxu0 0
    %2510 = vmatprep.subr.bf16.mxu0 0
    %2511 = vmatpush1.bf16.msra.mxu0 0
    %2512 = vmatprep.subr.bf16.mxu0 0
    %2513 = vmatpush1.bf16.msra.mxu0 0
    %2514 = vmatprep.subr.bf16.mxu0 0
    %2515 = vmatpush1.bf16.msra.mxu0 0
    %2516 = vmatprep.subr.bf16.mxu0 0
    %2517 = vmatpush1.bf16.msra.mxu0 %v2500
    %2518 = vmatprep.subr.bf16.mxu0 0
    %2519 = vmatpush2.bf16.msra.mxu0 0
    %2520 = vmatprep.subr.bf16.mxu0 0
    %2521 = vmatpush2.bf16.msra.mxu0 0
    %2522 = vmatprep.subr.bf16.mxu0 0
    %2523 = vmatpush2.bf16.msra.mxu0 0
    %2524 = vmatprep.subr.bf16.mxu0 0
    %2525 = vmatpush2.bf16.msra.mxu0 0
    %2526 = vmatprep.subr.bf16.mxu0 0
    %2527 = vmatpush2.bf16.msra.mxu0 0
    %2528 = vmatprep.subr.bf16.mxu0 0
    %2529 = vmatpush2.bf16.msra.mxu0 0
    %2530 = vmatprep.subr.bf16.mxu0 0
    %2531 = vmatpush2.bf16.msra.mxu0 0
    %2532 = vmatprep.subr.bf16.mxu0 0
    %2533 = vmatpush2.bf16.msra.mxu0 0
    %2534 = vmatprep.mubr.bf16.mxu0 0
    %2535 = vmatmul.mubr.bf16.gmra.mxu0 %v2497
    %v2536 = vpop.f32.mrf.mxu0
    %v2537 = vadd.f32 0.0, %v2536
    %v2538 = vpop.f32.mrf.mxu0
    %v2539 = vpop.f32.mrf.mxu0
    %v2540 = vpop.f32.mrf.mxu0
    %2541 = vdwg.mxu0
    %2543 = vrot.lane.b32.xlu0 %v2317, 64
    %v2544 = vpop.permute.xlu0 %2543
    %2547 = vrot.lane.b32.xlu0 %v2537, 64
    %v2548 = vpop.permute.xlu0 %2547
    %v2550 = vsel %vm2102, %v2204, %v2544
    %v2551 = vsel %vm2102, %v2424, %v2548
    %v2552 = vld [vmem:[%s27] sm:$0xff]
    %v2553 = vld [vmem:[%s27 + $0x8] sm:$0xff]
    %v2554 = vld [vmem:[%s27 + $0x10] sm:$0xff]
    %v2555 = vld [vmem:[%s27 + $0x18] sm:$0xff]
    %v2556 = vld [vmem:[%s27 + $0x20] sm:$0xff]
    %v2557 = vld [vmem:[%s27 + $0x28] sm:$0xff]
    %v2558 = vld [vmem:[%s27 + $0x30] sm:$0xff]
    %v2559 = vld [vmem:[%s27 + $0x38] sm:$0xff]
    %v2560 = vld [vmem:[%s27 + $0x40] sm:$0xff]
    %v2561 = vld [vmem:[%s27 + $0x48] sm:$0xff]
    %v2562 = vld [vmem:[%s27 + $0x50] sm:$0xff]
    %v2563 = vld [vmem:[%s27 + $0x58] sm:$0xff]
    %v2564 = vld [vmem:[%s27 + $0x60] sm:$0xff]
    %v2565 = vld [vmem:[%s27 + $0x68] sm:$0xff]
    %v2566 = vld [vmem:[%s27 + $0x70] sm:$0xff]
    %v2567 = vld [vmem:[%s27 + $0x78] sm:$0xff]
    %v2568 = vld [vmem:[%s27 + $0x80] sm:$0xff]
    %v2569 = vld [vmem:[%s27 + $0x88] sm:$0xff]
    %v2570 = vld [vmem:[%s27 + $0x90] sm:$0xff]
    %v2571 = vld [vmem:[%s27 + $0x98] sm:$0xff]
    %v2572 = vld [vmem:[%s27 + $0xa0] sm:$0xff]
    %v2573 = vld [vmem:[%s27 + $0xa8] sm:$0xff]
    %v2574 = vld [vmem:[%s27 + $0xb0] sm:$0xff]
    %v2575 = vld [vmem:[%s27 + $0xb8] sm:$0xff]
    %v2576 = vld [vmem:[%s27 + $0xc0] sm:$0xff]
    %v2577 = vld [vmem:[%s27 + $0xc8] sm:$0xff]
    %v2578 = vld [vmem:[%s27 + $0xd0] sm:$0xff]
    %v2579 = vld [vmem:[%s27 + $0xd8] sm:$0xff]
    %v2580 = vld [vmem:[%s27 + $0xe0] sm:$0xff]
    %v2581 = vld [vmem:[%s27 + $0xe8] sm:$0xff]
    %v2582 = vld [vmem:[%s27 + $0xf0] sm:$0xff]
    %v2583 = vld [vmem:[%s27 + $0xf8] sm:$0xff]
    %v2584 = vpack.c.bf16 %v2550, %v2550
    %v2585 = vpack.c.bf16 %v2551, %v2551
    %v2586 = vld [vmem:[#allocation15] sm:$0x3]
    %v2588 = vlaneseq
    %v2589 = vshrl.u32 %v2588, 7
    %v2590 = vsub.s32 0, %v2589
    %v2591 = vrot.slane %v2586, %v2590
    %v2592 = vlaneseq
    %v2593 = vshrl.u32 %v2592, 7
    %v2594 = vsub.s32 1, %v2593
    %v2595 = vrot.slane %v2586, %v2594
    %v2630 = vunpack.c.l.b16 %v2552
    %v2631 = vunpack.c.h.b16 %v2552
    %v2632 = vunpack.c.l.b16 %v2553
    %v2633 = vunpack.c.h.b16 %v2553
    %v2634 = vunpack.c.l.b16 %v2554
    %v2635 = vunpack.c.h.b16 %v2554
    %v2636 = vunpack.c.l.b16 %v2555
    %v2637 = vunpack.c.h.b16 %v2555
    %v2638 = vunpack.c.l.b16 %v2556
    %v2639 = vunpack.c.h.b16 %v2556
    %v2640 = vunpack.c.l.b16 %v2557
    %v2641 = vunpack.c.h.b16 %v2557
    %v2642 = vunpack.c.l.b16 %v2558
    %v2643 = vunpack.c.h.b16 %v2558
    %v2644 = vunpack.c.l.b16 %v2559
    %v2645 = vunpack.c.h.b16 %v2559
    %v2646 = vunpack.c.l.b16 %v2560
    %v2647 = vunpack.c.h.b16 %v2560
    %v2648 = vunpack.c.l.b16 %v2561
    %v2649 = vunpack.c.h.b16 %v2561
    %v2650 = vunpack.c.l.b16 %v2562
    %v2651 = vunpack.c.h.b16 %v2562
    %v2652 = vunpack.c.l.b16 %v2563
    %v2653 = vunpack.c.h.b16 %v2563
    %v2654 = vunpack.c.l.b16 %v2564
    %v2655 = vunpack.c.h.b16 %v2564
    %v2656 = vunpack.c.l.b16 %v2565
    %v2657 = vunpack.c.h.b16 %v2565
    %v2658 = vunpack.c.l.b16 %v2566
    %v2659 = vunpack.c.h.b16 %v2566
    %v2660 = vunpack.c.l.b16 %v2567
    %v2661 = vunpack.c.h.b16 %v2567
    %v2662 = vunpack.c.l.b16 %v2568
    %v2663 = vunpack.c.h.b16 %v2568
    %v2664 = vunpack.c.l.b16 %v2569
    %v2665 = vunpack.c.h.b16 %v2569
    %v2666 = vunpack.c.l.b16 %v2570
    %v2667 = vunpack.c.h.b16 %v2570
    %v2668 = vunpack.c.l.b16 %v2571
    %v2669 = vunpack.c.h.b16 %v2571
    %v2670 = vunpack.c.l.b16 %v2572
    %v2671 = vunpack.c.h.b16 %v2572
    %v2672 = vunpack.c.l.b16 %v2573
    %v2673 = vunpack.c.h.b16 %v2573
    %v2674 = vunpack.c.l.b16 %v2574
    %v2675 = vunpack.c.h.b16 %v2574
    %v2676 = vunpack.c.l.b16 %v2575
    %v2677 = vunpack.c.h.b16 %v2575
    %v2678 = vunpack.c.l.b16 %v2576
    %v2679 = vunpack.c.h.b16 %v2576
    %v2680 = vunpack.c.l.b16 %v2577
    %v2681 = vunpack.c.h.b16 %v2577
    %v2682 = vunpack.c.l.b16 %v2578
    %v2683 = vunpack.c.h.b16 %v2578
    %v2684 = vunpack.c.l.b16 %v2579
    %v2685 = vunpack.c.h.b16 %v2579
    %v2686 = vunpack.c.l.b16 %v2580
    %v2687 = vunpack.c.h.b16 %v2580
    %v2688 = vunpack.c.l.b16 %v2581
    %v2689 = vunpack.c.h.b16 %v2581
    %v2690 = vunpack.c.l.b16 %v2582
    %v2691 = vunpack.c.h.b16 %v2582
    %v2692 = vunpack.c.l.b16 %v2583
    %v2693 = vunpack.c.h.b16 %v2583
    %v2694 = vpack.c.b16 %v2632, %v2630
    %v2695 = vpack.c.b16 %v2633, %v2631
    %v2696 = vpack.c.b16 %v2636, %v2634
    %v2697 = vpack.c.b16 %v2637, %v2635
    %v2698 = vpack.c.b16 %v2640, %v2638
    %v2699 = vpack.c.b16 %v2641, %v2639
    %v2700 = vpack.c.b16 %v2644, %v2642
    %v2701 = vpack.c.b16 %v2645, %v2643
    %v2702 = vpack.c.b16 %v2648, %v2646
    %v2703 = vpack.c.b16 %v2649, %v2647
    %v2704 = vpack.c.b16 %v2652, %v2650
    %v2705 = vpack.c.b16 %v2653, %v2651
    %v2706 = vpack.c.b16 %v2656, %v2654
    %v2707 = vpack.c.b16 %v2657, %v2655
    %v2708 = vpack.c.b16 %v2660, %v2658
    %v2709 = vpack.c.b16 %v2661, %v2659
    %v2710 = vpack.c.b16 %v2664, %v2662
    %v2711 = vpack.c.b16 %v2665, %v2663
    %v2712 = vpack.c.b16 %v2668, %v2666
    %v2713 = vpack.c.b16 %v2669, %v2667
    %v2714 = vpack.c.b16 %v2672, %v2670
    %v2715 = vpack.c.b16 %v2673, %v2671
    %v2716 = vpack.c.b16 %v2676, %v2674
    %v2717 = vpack.c.b16 %v2677, %v2675
    %v2718 = vpack.c.b16 %v2680, %v2678
    %v2719 = vpack.c.b16 %v2681, %v2679
    %v2720 = vpack.c.b16 %v2684, %v2682
    %v2721 = vpack.c.b16 %v2685, %v2683
    %v2722 = vpack.c.b16 %v2688, %v2686
    %v2723 = vpack.c.b16 %v2689, %v2687
    %v2724 = vpack.c.b16 %v2692, %v2690
    %v2725 = vpack.c.b16 %v2693, %v2691
    %2758 = vmatprep.subr.bf16.mxu0 %v2709
    %2759 = vmatpush1.bf16.msra.mxu0 %v2708
    %2760 = vmatprep.subr.bf16.mxu0 %v2707
    %2761 = vmatpush1.bf16.msra.mxu0 %v2706
    %2762 = vmatprep.subr.bf16.mxu0 %v2705
    %2763 = vmatpush1.bf16.msra.mxu0 %v2704
    %2764 = vmatprep.subr.bf16.mxu0 %v2703
    %2765 = vmatpush1.bf16.msra.mxu0 %v2702
    %2766 = vmatprep.subr.bf16.mxu0 %v2701
    %2767 = vmatpush1.bf16.msra.mxu0 %v2700
    %2768 = vmatprep.subr.bf16.mxu0 %v2699
    %2769 = vmatpush1.bf16.msra.mxu0 %v2698
    %2770 = vmatprep.subr.bf16.mxu0 %v2697
    %2771 = vmatpush1.bf16.msra.mxu0 %v2696
    %2772 = vmatprep.subr.bf16.mxu0 %v2695
    %2773 = vmatpush1.bf16.msra.mxu0 %v2694
    %2774 = vmatprep.subr.bf16.mxu0 %v2725
    %2775 = vmatpush2.bf16.msra.mxu0 %v2724
    %2776 = vmatprep.subr.bf16.mxu0 %v2723
    %2777 = vmatpush2.bf16.msra.mxu0 %v2722
    %2778 = vmatprep.subr.bf16.mxu0 %v2721
    %2779 = vmatpush2.bf16.msra.mxu0 %v2720
    %2780 = vmatprep.subr.bf16.mxu0 %v2719
    %2781 = vmatpush2.bf16.msra.mxu0 %v2718
    %2782 = vmatprep.subr.bf16.mxu0 %v2717
    %2783 = vmatpush2.bf16.msra.mxu0 %v2716
    %2784 = vmatprep.subr.bf16.mxu0 %v2715
    %2785 = vmatpush2.bf16.msra.mxu0 %v2714
    %2786 = vmatprep.subr.bf16.mxu0 %v2713
    %2787 = vmatpush2.bf16.msra.mxu0 %v2712
    %2788 = vmatprep.subr.bf16.mxu0 %v2711
    %2789 = vmatpush2.bf16.msra.mxu0 %v2710
    %2790 = vmatprep.mubr.bf16.mxu0 %v2585
    %2791 = vmatmul.mubr.bf16.gmra.mxu0 %v2584
    %v2792 = vpop.f32.mrf.mxu0
    %v2793 = vadd.f32 %v2591, %v2792
    %v2794 = vpop.f32.mrf.mxu0
    %v2795 = vadd.f32 %v2595, %v2794
    %v2796 = vpop.f32.mrf.mxu0
    %v2797 = vpop.f32.mrf.mxu0
    %2798 = vdwg.mxu0
    %v2799 = vadd.f32 %v1361, %v2793
    %v2800 = vadd.f32 %v1363, %v2795
    %v2801 = vld [vmem:[#allocation16] sm:$0x3]
    %v2802 = vld [vmem:[#allocation18] sm:$0x3]
    %v2803 = vadd.f32 %v2799, %v2800
    %2804 = vadd.xlane.f32.xlu0 %v2803
    %v2805 = vpop.xlane.xlu0 %2804
    %v2806 = vrcp.pop 256.0
    %v2807 = vmul.f32 %v2805, %v2806
    %v2808 = vsub.f32 %v2799, %v2807
    %v2809 = vsub.f32 %v2800, %v2807
    %v2810 = vmul.f32 %v2808, %v2808
    %v2811 = vmul.f32 %v2809, %v2809
    %v2812 = vadd.f32 %v2810, %v2811
    %2813 = vadd.xlane.f32.xlu0 %v2812
    %v2814 = vpop.xlane.xlu0 %2813
    %v2815 = vmul.f32 %v2814, %v2806
    %v2816 = vadd.f32 %v2815, 1e-05
    %v2817 = vrsqrt.pop %v2816
    %v2818 = vmul.f32 %v2808, %v2817
    %v2819 = vmul.f32 %v2809, %v2817
    %v2821 = vlaneseq
    %v2822 = vshrl.u32 %v2821, 7
    %v2823 = vsub.s32 0, %v2822
    %v2824 = vrot.slane %v2801, %v2823
    %v2825 = vlaneseq
    %v2826 = vshrl.u32 %v2825, 7
    %v2827 = vsub.s32 1, %v2826
    %v2828 = vrot.slane %v2801, %v2827
    %v2831 = vmul.f32 %v2818, %v2824
    %v2832 = vmul.f32 %v2819, %v2828
    %v2834 = vlaneseq
    %v2835 = vshrl.u32 %v2834, 7
    %v2836 = vsub.s32 0, %v2835
    %v2837 = vrot.slane %v2802, %v2836
    %v2838 = vlaneseq
    %v2839 = vshrl.u32 %v2838, 7
    %v2840 = vsub.s32 1, %v2839
    %v2841 = vrot.slane %v2802, %v2840
    %v2844 = vadd.f32 %v2831, %v2837
    %v2845 = vadd.f32 %v2832, %v2841
    %v2846 = vld [vmem:[%s35] sm:$0xf]
    %v2847 = vld [vmem:[%s35 + $0x4] sm:$0xf]
    %v2848 = vld [vmem:[%s35 + $0x8] sm:$0xf]
    %v2849 = vld [vmem:[%s35 + $0xc] sm:$0xf]
    %v2850 = vld [vmem:[%s35 + $0x10] sm:$0xf]
    %v2851 = vld [vmem:[%s35 + $0x14] sm:$0xf]
    %v2852 = vld [vmem:[%s35 + $0x18] sm:$0xf]
    %v2853 = vld [vmem:[%s35 + $0x1c] sm:$0xf]
    %v2854 = vld [vmem:[%s35 + $0x20] sm:$0xf]
    %v2855 = vld [vmem:[%s35 + $0x24] sm:$0xf]
    %v2856 = vld [vmem:[%s35 + $0x28] sm:$0xf]
    %v2857 = vld [vmem:[%s35 + $0x2c] sm:$0xf]
    %v2858 = vld [vmem:[%s35 + $0x30] sm:$0xf]
    %v2859 = vld [vmem:[%s35 + $0x34] sm:$0xf]
    %v2860 = vld [vmem:[%s35 + $0x38] sm:$0xf]
    %v2861 = vld [vmem:[%s35 + $0x3c] sm:$0xf]
    %v2862 = vld [vmem:[%s35 + $0x40] sm:$0xf]
    %v2863 = vld [vmem:[%s35 + $0x44] sm:$0xf]
    %v2864 = vld [vmem:[%s35 + $0x48] sm:$0xf]
    %v2865 = vld [vmem:[%s35 + $0x4c] sm:$0xf]
    %v2866 = vld [vmem:[%s35 + $0x50] sm:$0xf]
    %v2867 = vld [vmem:[%s35 + $0x54] sm:$0xf]
    %v2868 = vld [vmem:[%s35 + $0x58] sm:$0xf]
    %v2869 = vld [vmem:[%s35 + $0x5c] sm:$0xf]
    %v2870 = vld [vmem:[%s35 + $0x60] sm:$0xf]
    %v2871 = vld [vmem:[%s35 + $0x64] sm:$0xf]
    %v2872 = vld [vmem:[%s35 + $0x68] sm:$0xf]
    %v2873 = vld [vmem:[%s35 + $0x6c] sm:$0xf]
    %v2874 = vld [vmem:[%s35 + $0x70] sm:$0xf]
    %v2875 = vld [vmem:[%s35 + $0x74] sm:$0xf]
    %v2876 = vld [vmem:[%s35 + $0x78] sm:$0xf]
    %v2877 = vld [vmem:[%s35 + $0x7c] sm:$0xf]
    %v2878 = vpack.c.bf16 %v2844, %v2844
    %v2879 = vpack.c.bf16 %v2845, %v2845
    %v2880 = vld [vmem:[#allocation19] sm:$0x1]
    %v2882 = vlaneseq
    %v2883 = vshrl.u32 %v2882, 7
    %v2884 = vsub.s32 0, %v2883
    %v2885 = vrot.slane %v2880, %v2884
    %v2919 = vunpack.c.l.b16 %v2846
    %v2920 = vunpack.c.l.b16 %v2847
    %v2921 = vunpack.c.l.b16 %v2848
    %v2922 = vunpack.c.l.b16 %v2849
    %v2923 = vunpack.c.l.b16 %v2850
    %v2924 = vunpack.c.l.b16 %v2851
    %v2925 = vunpack.c.l.b16 %v2852
    %v2926 = vunpack.c.l.b16 %v2853
    %v2927 = vunpack.c.l.b16 %v2854
    %v2928 = vunpack.c.l.b16 %v2855
    %v2929 = vunpack.c.l.b16 %v2856
    %v2930 = vunpack.c.l.b16 %v2857
    %v2931 = vunpack.c.l.b16 %v2858
    %v2932 = vunpack.c.l.b16 %v2859
    %v2933 = vunpack.c.l.b16 %v2860
    %v2934 = vunpack.c.l.b16 %v2861
    %v2935 = vunpack.c.l.b16 %v2862
    %v2936 = vunpack.c.l.b16 %v2863
    %v2937 = vunpack.c.l.b16 %v2864
    %v2938 = vunpack.c.l.b16 %v2865
    %v2939 = vunpack.c.l.b16 %v2866
    %v2940 = vunpack.c.l.b16 %v2867
    %v2941 = vunpack.c.l.b16 %v2868
    %v2942 = vunpack.c.l.b16 %v2869
    %v2943 = vunpack.c.l.b16 %v2870
    %v2944 = vunpack.c.l.b16 %v2871
    %v2945 = vunpack.c.l.b16 %v2872
    %v2946 = vunpack.c.l.b16 %v2873
    %v2947 = vunpack.c.l.b16 %v2874
    %v2948 = vunpack.c.l.b16 %v2875
    %v2949 = vunpack.c.l.b16 %v2876
    %v2950 = vunpack.c.l.b16 %v2877
    %v2951 = vpack.c.b16 %v2920, %v2919
    %v2952 = vpack.c.b16 %v2922, %v2921
    %v2953 = vpack.c.b16 %v2924, %v2923
    %v2954 = vpack.c.b16 %v2926, %v2925
    %v2955 = vpack.c.b16 %v2928, %v2927
    %v2956 = vpack.c.b16 %v2930, %v2929
    %v2957 = vpack.c.b16 %v2932, %v2931
    %v2958 = vpack.c.b16 %v2934, %v2933
    %v2959 = vpack.c.b16 %v2936, %v2935
    %v2960 = vpack.c.b16 %v2938, %v2937
    %v2961 = vpack.c.b16 %v2940, %v2939
    %v2962 = vpack.c.b16 %v2942, %v2941
    %v2963 = vpack.c.b16 %v2944, %v2943
    %v2964 = vpack.c.b16 %v2946, %v2945
    %v2965 = vpack.c.b16 %v2948, %v2947
    %v2966 = vpack.c.b16 %v2950, %v2949
    %2983 = vmatprep.subr.bf16.mxu0 0
    %2984 = vmatpush1.bf16.msra.mxu0 %v2958
    %2985 = vmatprep.subr.bf16.mxu0 0
    %2986 = vmatpush1.bf16.msra.mxu0 %v2957
    %2987 = vmatprep.subr.bf16.mxu0 0
    %2988 = vmatpush1.bf16.msra.mxu0 %v2956
    %2989 = vmatprep.subr.bf16.mxu0 0
    %2990 = vmatpush1.bf16.msra.mxu0 %v2955
    %2991 = vmatprep.subr.bf16.mxu0 0
    %2992 = vmatpush1.bf16.msra.mxu0 %v2954
    %2993 = vmatprep.subr.bf16.mxu0 0
    %2994 = vmatpush1.bf16.msra.mxu0 %v2953
    %2995 = vmatprep.subr.bf16.mxu0 0
    %2996 = vmatpush1.bf16.msra.mxu0 %v2952
    %2997 = vmatprep.subr.bf16.mxu0 0
    %2998 = vmatpush1.bf16.msra.mxu0 %v2951
    %2999 = vmatprep.subr.bf16.mxu0 0
    %3000 = vmatpush2.bf16.msra.mxu0 %v2966
    %3001 = vmatprep.subr.bf16.mxu0 0
    %3002 = vmatpush2.bf16.msra.mxu0 %v2965
    %3003 = vmatprep.subr.bf16.mxu0 0
    %3004 = vmatpush2.bf16.msra.mxu0 %v2964
    %3005 = vmatprep.subr.bf16.mxu0 0
    %3006 = vmatpush2.bf16.msra.mxu0 %v2963
    %3007 = vmatprep.subr.bf16.mxu0 0
    %3008 = vmatpush2.bf16.msra.mxu0 %v2962
    %3009 = vmatprep.subr.bf16.mxu0 0
    %3010 = vmatpush2.bf16.msra.mxu0 %v2961
    %3011 = vmatprep.subr.bf16.mxu0 0
    %3012 = vmatpush2.bf16.msra.mxu0 %v2960
    %3013 = vmatprep.subr.bf16.mxu0 0
    %3014 = vmatpush2.bf16.msra.mxu0 %v2959
    %3015 = vmatprep.mubr.bf16.mxu0 %v2879
    %3016 = vmatmul.mubr.bf16.gmra.mxu0 %v2878
    %v3017 = vpop.f32.mrf.mxu0
    %v3018 = vadd.f32 %v2885, %v3017
    %v3019 = vpop.f32.mrf.mxu0
    %v3020 = vpop.f32.mrf.mxu0
    %v3021 = vpop.f32.mrf.mxu0
    %3022 = vdwg.mxu0
    %v3023 = vmax.f32 %v3018, 0.0
    %v3024 = vld [vmem:[%s39] sm:$0xff]
    %v3025 = vld [vmem:[%s39 + $0x8] sm:$0xff]
    %v3026 = vld [vmem:[%s39 + $0x10] sm:$0xff]
    %v3027 = vld [vmem:[%s39 + $0x18] sm:$0xff]
    %v3028 = vld [vmem:[%s39 + $0x20] sm:$0xff]
    %v3029 = vld [vmem:[%s39 + $0x28] sm:$0xff]
    %v3030 = vld [vmem:[%s39 + $0x30] sm:$0xff]
    %v3031 = vld [vmem:[%s39 + $0x38] sm:$0xff]
    %v3032 = vpack.c.bf16 %v3023, %v3023
    %v3033 = vld [vmem:[#allocation21] sm:$0x3]
    %v3035 = vlaneseq
    %v3036 = vshrl.u32 %v3035, 7
    %v3037 = vsub.s32 0, %v3036
    %v3038 = vrot.slane %v3033, %v3037
    %v3039 = vlaneseq
    %v3040 = vshrl.u32 %v3039, 7
    %v3041 = vsub.s32 1, %v3040
    %v3042 = vrot.slane %v3033, %v3041
    %v3053 = vunpack.c.l.b16 %v3024
    %v3054 = vunpack.c.h.b16 %v3024
    %v3055 = vunpack.c.l.b16 %v3025
    %v3056 = vunpack.c.h.b16 %v3025
    %v3057 = vunpack.c.l.b16 %v3026
    %v3058 = vunpack.c.h.b16 %v3026
    %v3059 = vunpack.c.l.b16 %v3027
    %v3060 = vunpack.c.h.b16 %v3027
    %v3061 = vunpack.c.l.b16 %v3028
    %v3062 = vunpack.c.h.b16 %v3028
    %v3063 = vunpack.c.l.b16 %v3029
    %v3064 = vunpack.c.h.b16 %v3029
    %v3065 = vunpack.c.l.b16 %v3030
    %v3066 = vunpack.c.h.b16 %v3030
    %v3067 = vunpack.c.l.b16 %v3031
    %v3068 = vunpack.c.h.b16 %v3031
    %v3069 = vpack.c.b16 %v3055, %v3053
    %v3070 = vpack.c.b16 %v3056, %v3054
    %v3071 = vpack.c.b16 %v3059, %v3057
    %v3072 = vpack.c.b16 %v3060, %v3058
    %v3073 = vpack.c.b16 %v3063, %v3061
    %v3074 = vpack.c.b16 %v3064, %v3062
    %v3075 = vpack.c.b16 %v3067, %v3065
    %v3076 = vpack.c.b16 %v3068, %v3066
    %v3086 = vsel %vm2102, %v3032, 0
    %3088 = vmatprep.subr.bf16.mxu0 0
    %3089 = vmatpush1.bf16.msra.mxu0 0
    %3090 = vmatprep.subr.bf16.mxu0 0
    %3091 = vmatpush1.bf16.msra.mxu0 0
    %3092 = vmatprep.subr.bf16.mxu0 0
    %3093 = vmatpush1.bf16.msra.mxu0 0
    %3094 = vmatprep.subr.bf16.mxu0 0
    %3095 = vmatpush1.bf16.msra.mxu0 0
    %3096 = vmatprep.subr.bf16.mxu0 %v3076
    %3097 = vmatpush1.bf16.msra.mxu0 %v3075
    %3098 = vmatprep.subr.bf16.mxu0 %v3074
    %3099 = vmatpush1.bf16.msra.mxu0 %v3073
    %3100 = vmatprep.subr.bf16.mxu0 %v3072
    %3101 = vmatpush1.bf16.msra.mxu0 %v3071
    %3102 = vmatprep.subr.bf16.mxu0 %v3070
    %3103 = vmatpush1.bf16.msra.mxu0 %v3069
    %3104 = vmatprep.subr.bf16.mxu0 0
    %3105 = vmatpush2.bf16.msra.mxu0 0
    %3106 = vmatprep.subr.bf16.mxu0 0
    %3107 = vmatpush2.bf16.msra.mxu0 0
    %3108 = vmatprep.subr.bf16.mxu0 0
    %3109 = vmatpush2.bf16.msra.mxu0 0
    %3110 = vmatprep.subr.bf16.mxu0 0
    %3111 = vmatpush2.bf16.msra.mxu0 0
    %3112 = vmatprep.subr.bf16.mxu0 0
    %3113 = vmatpush2.bf16.msra.mxu0 0
    %3114 = vmatprep.subr.bf16.mxu0 0
    %3115 = vmatpush2.bf16.msra.mxu0 0
    %3116 = vmatprep.subr.bf16.mxu0 0
    %3117 = vmatpush2.bf16.msra.mxu0 0
    %3118 = vmatprep.subr.bf16.mxu0 0
    %3119 = vmatpush2.bf16.msra.mxu0 0
    %3120 = vmatprep.mubr.bf16.mxu0 0
    %3121 = vmatmul.mubr.bf16.gmra.mxu0 %v3086
    %v3122 = vpop.f32.mrf.mxu0
    %v3123 = vadd.f32 %v3038, %v3122
    %v3124 = vpop.f32.mrf.mxu0
    %v3125 = vadd.f32 %v3042, %v3124
    %v3126 = vpop.f32.mrf.mxu0
    %v3127 = vpop.f32.mrf.mxu0
    %3128 = vdwg.mxu0
    %v3129 = vadd.f32 %v2844, %v3123
    %v3130 = vadd.f32 %v2845, %v3125
    %v3131 = vld [vmem:[#allocation22] sm:$0x3]
    %v3132 = vld [vmem:[#allocation24] sm:$0x3]
    %v3133 = vadd.f32 %v3129, %v3130
    %3134 = vadd.xlane.f32.xlu0 %v3133
    %v3135 = vpop.xlane.xlu0 %3134
    %v3136 = vmul.f32 %v3135, %v2806
    %v3137 = vsub.f32 %v3129, %v3136
    %v3138 = vsub.f32 %v3130, %v3136
    %v3139 = vmul.f32 %v3137, %v3137
    %v3140 = vmul.f32 %v3138, %v3138
    %v3141 = vadd.f32 %v3139, %v3140
    %3142 = vadd.xlane.f32.xlu0 %v3141
    %v3143 = vpop.xlane.xlu0 %3142
    %v3144 = vmul.f32 %v3143, %v2806
    %v3145 = vadd.f32 %v3144, 1e-05
    %v3146 = vrsqrt.pop %v3145
    %v3147 = vmul.f32 %v3137, %v3146
    %v3148 = vmul.f32 %v3138, %v3146
    %v3150 = vlaneseq
    %v3151 = vshrl.u32 %v3150, 7
    %v3152 = vsub.s32 0, %v3151
    %v3153 = vrot.slane %v3131, %v3152
    %v3154 = vlaneseq
    %v3155 = vshrl.u32 %v3154, 7
    %v3156 = vsub.s32 1, %v3155
    %v3157 = vrot.slane %v3131, %v3156
    %v3160 = vmul.f32 %v3147, %v3153
    %v3161 = vmul.f32 %v3148, %v3157
    %v3163 = vlaneseq
    %v3164 = vshrl.u32 %v3163, 7
    %v3165 = vsub.s32 0, %v3164
    %v3166 = vrot.slane %v3132, %v3165
    %v3167 = vlaneseq
    %v3168 = vshrl.u32 %v3167, 7
    %v3169 = vsub.s32 1, %v3168
    %v3170 = vrot.slane %v3132, %v3169
    %v3173 = vadd.f32 %v3160, %v3166
    %v3174 = vadd.f32 %v3161, %v3170
    %s3175 = scalar_lea.vmem [#allocation13], 768
    %v3176 = vld [vmem:[%s3175] sm:$0xff]
    %v3177 = vld [vmem:[%s3175 + $0x8] sm:$0xff]
    %v3178 = vld [vmem:[%s3175 + $0x10] sm:$0xff]
    %v3179 = vld [vmem:[%s3175 + $0x18] sm:$0xff]
    %v3180 = vld [vmem:[%s3175 + $0x20] sm:$0xff]
    %v3181 = vld [vmem:[%s3175 + $0x28] sm:$0xff]
    %v3182 = vld [vmem:[%s3175 + $0x30] sm:$0xff]
    %v3183 = vld [vmem:[%s3175 + $0x38] sm:$0xff]
    %v3184 = vld [vmem:[%s3175 + $0x40] sm:$0xff]
    %v3185 = vld [vmem:[%s3175 + $0x48] sm:$0xff]
    %v3186 = vld [vmem:[%s3175 + $0x50] sm:$0xff]
    %v3187 = vld [vmem:[%s3175 + $0x58] sm:$0xff]
    %v3188 = vld [vmem:[%s3175 + $0x60] sm:$0xff]
    %v3189 = vld [vmem:[%s3175 + $0x68] sm:$0xff]
    %v3190 = vld [vmem:[%s3175 + $0x70] sm:$0xff]
    %v3191 = vld [vmem:[%s3175 + $0x78] sm:$0xff]
    %v3192 = vld [vmem:[%s3175 + $0x80] sm:$0xff]
    %v3193 = vld [vmem:[%s3175 + $0x88] sm:$0xff]
    %v3194 = vld [vmem:[%s3175 + $0x90] sm:$0xff]
    %v3195 = vld [vmem:[%s3175 + $0x98] sm:$0xff]
    %v3196 = vld [vmem:[%s3175 + $0xa0] sm:$0xff]
    %v3197 = vld [vmem:[%s3175 + $0xa8] sm:$0xff]
    %v3198 = vld [vmem:[%s3175 + $0xb0] sm:$0xff]
    %v3199 = vld [vmem:[%s3175 + $0xb8] sm:$0xff]
    %v3200 = vld [vmem:[%s3175 + $0xc0] sm:$0xff]
    %v3201 = vld [vmem:[%s3175 + $0xc8] sm:$0xff]
    %v3202 = vld [vmem:[%s3175 + $0xd0] sm:$0xff]
    %v3203 = vld [vmem:[%s3175 + $0xd8] sm:$0xff]
    %v3204 = vld [vmem:[%s3175 + $0xe0] sm:$0xff]
    %v3205 = vld [vmem:[%s3175 + $0xe8] sm:$0xff]
    %v3206 = vld [vmem:[%s3175 + $0xf0] sm:$0xff]
    %v3207 = vld [vmem:[%s3175 + $0xf8] sm:$0xff]
    %v3208 = vld [vmem:[%s3175 + $0x100] sm:$0xff]
    %v3209 = vld [vmem:[%s3175 + $0x108] sm:$0xff]
    %v3210 = vld [vmem:[%s3175 + $0x110] sm:$0xff]
    %v3211 = vld [vmem:[%s3175 + $0x118] sm:$0xff]
    %v3212 = vld [vmem:[%s3175 + $0x120] sm:$0xff]
    %v3213 = vld [vmem:[%s3175 + $0x128] sm:$0xff]
    %v3214 = vld [vmem:[%s3175 + $0x130] sm:$0xff]
    %v3215 = vld [vmem:[%s3175 + $0x138] sm:$0xff]
    %v3216 = vld [vmem:[%s3175 + $0x140] sm:$0xff]
    %v3217 = vld [vmem:[%s3175 + $0x148] sm:$0xff]
    %v3218 = vld [vmem:[%s3175 + $0x150] sm:$0xff]
    %v3219 = vld [vmem:[%s3175 + $0x158] sm:$0xff]
    %v3220 = vld [vmem:[%s3175 + $0x160] sm:$0xff]
    %v3221 = vld [vmem:[%s3175 + $0x168] sm:$0xff]
    %v3222 = vld [vmem:[%s3175 + $0x170] sm:$0xff]
    %v3223 = vld [vmem:[%s3175 + $0x178] sm:$0xff]
    %v3224 = vld [vmem:[%s3175 + $0x180] sm:$0xff]
    %v3225 = vld [vmem:[%s3175 + $0x188] sm:$0xff]
    %v3226 = vld [vmem:[%s3175 + $0x190] sm:$0xff]
    %v3227 = vld [vmem:[%s3175 + $0x198] sm:$0xff]
    %v3228 = vld [vmem:[%s3175 + $0x1a0] sm:$0xff]
    %v3229 = vld [vmem:[%s3175 + $0x1a8] sm:$0xff]
    %v3230 = vld [vmem:[%s3175 + $0x1b0] sm:$0xff]
    %v3231 = vld [vmem:[%s3175 + $0x1b8] sm:$0xff]
    %v3232 = vld [vmem:[%s3175 + $0x1c0] sm:$0xff]
    %v3233 = vld [vmem:[%s3175 + $0x1c8] sm:$0xff]
    %v3234 = vld [vmem:[%s3175 + $0x1d0] sm:$0xff]
    %v3235 = vld [vmem:[%s3175 + $0x1d8] sm:$0xff]
    %v3236 = vld [vmem:[%s3175 + $0x1e0] sm:$0xff]
    %v3237 = vld [vmem:[%s3175 + $0x1e8] sm:$0xff]
    %v3238 = vld [vmem:[%s3175 + $0x1f0] sm:$0xff]
    %v3239 = vld [vmem:[%s3175 + $0x1f8] sm:$0xff]
    %v3240 = vld [vmem:[%s3175 + $0x200] sm:$0xff]
    %v3241 = vld [vmem:[%s3175 + $0x208] sm:$0xff]
    %v3242 = vld [vmem:[%s3175 + $0x210] sm:$0xff]
    %v3243 = vld [vmem:[%s3175 + $0x218] sm:$0xff]
    %v3244 = vld [vmem:[%s3175 + $0x220] sm:$0xff]
    %v3245 = vld [vmem:[%s3175 + $0x228] sm:$0xff]
    %v3246 = vld [vmem:[%s3175 + $0x230] sm:$0xff]
    %v3247 = vld [vmem:[%s3175 + $0x238] sm:$0xff]
    %v3248 = vld [vmem:[%s3175 + $0x240] sm:$0xff]
    %v3249 = vld [vmem:[%s3175 + $0x248] sm:$0xff]
    %v3250 = vld [vmem:[%s3175 + $0x250] sm:$0xff]
    %v3251 = vld [vmem:[%s3175 + $0x258] sm:$0xff]
    %v3252 = vld [vmem:[%s3175 + $0x260] sm:$0xff]
    %v3253 = vld [vmem:[%s3175 + $0x268] sm:$0xff]
    %v3254 = vld [vmem:[%s3175 + $0x270] sm:$0xff]
    %v3255 = vld [vmem:[%s3175 + $0x278] sm:$0xff]
    %v3256 = vld [vmem:[%s3175 + $0x280] sm:$0xff]
    %v3257 = vld [vmem:[%s3175 + $0x288] sm:$0xff]
    %v3258 = vld [vmem:[%s3175 + $0x290] sm:$0xff]
    %v3259 = vld [vmem:[%s3175 + $0x298] sm:$0xff]
    %v3260 = vld [vmem:[%s3175 + $0x2a0] sm:$0xff]
    %v3261 = vld [vmem:[%s3175 + $0x2a8] sm:$0xff]
    %v3262 = vld [vmem:[%s3175 + $0x2b0] sm:$0xff]
    %v3263 = vld [vmem:[%s3175 + $0x2b8] sm:$0xff]
    %v3264 = vld [vmem:[%s3175 + $0x2c0] sm:$0xff]
    %v3265 = vld [vmem:[%s3175 + $0x2c8] sm:$0xff]
    %v3266 = vld [vmem:[%s3175 + $0x2d0] sm:$0xff]
    %v3267 = vld [vmem:[%s3175 + $0x2d8] sm:$0xff]
    %v3268 = vld [vmem:[%s3175 + $0x2e0] sm:$0xff]
    %v3269 = vld [vmem:[%s3175 + $0x2e8] sm:$0xff]
    %v3270 = vld [vmem:[%s3175 + $0x2f0] sm:$0xff]
    %v3271 = vld [vmem:[%s3175 + $0x2f8] sm:$0xff]
    %v3272 = vpack.c.bf16 %v3173, %v3173
    %v3273 = vpack.c.bf16 %v3174, %v3174
    %s3274 = scalar_lea.vmem %s25, 6
    %v3275 = vld [vmem:[%s3274] sm:$0x3f]
    %v3277 = vlaneseq
    %v3278 = vshrl.u32 %v3277, 7
    %v3279 = vsub.s32 0, %v3278
    %v3280 = vrot.slane %v3275, %v3279
    %v3281 = vlaneseq
    %v3282 = vshrl.u32 %v3281, 7
    %v3283 = vsub.s32 1, %v3282
    %v3284 = vrot.slane %v3275, %v3283
    %v3285 = vlaneseq
    %v3286 = vshrl.u32 %v3285, 7
    %v3287 = vsub.s32 2, %v3286
    %v3288 = vrot.slane %v3275, %v3287
    %v3289 = vlaneseq
    %v3290 = vshrl.u32 %v3289, 7
    %v3291 = vsub.s32 3, %v3290
    %v3292 = vrot.slane %v3275, %v3291
    %v3293 = vlaneseq
    %v3294 = vshrl.u32 %v3293, 7
    %v3295 = vsub.s32 4, %v3294
    %v3296 = vrot.slane %v3275, %v3295
    %v3297 = vlaneseq
    %v3298 = vshrl.u32 %v3297, 7
    %v3299 = vsub.s32 5, %v3298
    %v3300 = vrot.slane %v3275, %v3299
    %v3403 = vunpack.c.l.b16 %v3176
    %v3404 = vunpack.c.h.b16 %v3176
    %v3405 = vunpack.c.l.b16 %v3177
    %v3406 = vunpack.c.h.b16 %v3177
    %v3407 = vunpack.c.l.b16 %v3178
    %v3408 = vunpack.c.h.b16 %v3178
    %v3409 = vunpack.c.l.b16 %v3179
    %v3410 = vunpack.c.h.b16 %v3179
    %v3411 = vunpack.c.l.b16 %v3180
    %v3412 = vunpack.c.h.b16 %v3180
    %v3413 = vunpack.c.l.b16 %v3181
    %v3414 = vunpack.c.h.b16 %v3181
    %v3415 = vunpack.c.l.b16 %v3182
    %v3416 = vunpack.c.h.b16 %v3182
    %v3417 = vunpack.c.l.b16 %v3183
    %v3418 = vunpack.c.h.b16 %v3183
    %v3419 = vunpack.c.l.b16 %v3184
    %v3420 = vunpack.c.h.b16 %v3184
    %v3421 = vunpack.c.l.b16 %v3185
    %v3422 = vunpack.c.h.b16 %v3185
    %v3423 = vunpack.c.l.b16 %v3186
    %v3424 = vunpack.c.h.b16 %v3186
    %v3425 = vunpack.c.l.b16 %v3187
    %v3426 = vunpack.c.h.b16 %v3187
    %v3427 = vunpack.c.l.b16 %v3188
    %v3428 = vunpack.c.h.b16 %v3188
    %v3429 = vunpack.c.l.b16 %v3189
    %v3430 = vunpack.c.h.b16 %v3189
    %v3431 = vunpack.c.l.b16 %v3190
    %v3432 = vunpack.c.h.b16 %v3190
    %v3433 = vunpack.c.l.b16 %v3191
    %v3434 = vunpack.c.h.b16 %v3191
    %v3435 = vunpack.c.l.b16 %v3192
    %v3436 = vunpack.c.h.b16 %v3192
    %v3437 = vunpack.c.l.b16 %v3193
    %v3438 = vunpack.c.h.b16 %v3193
    %v3439 = vunpack.c.l.b16 %v3194
    %v3440 = vunpack.c.h.b16 %v3194
    %v3441 = vunpack.c.l.b16 %v3195
    %v3442 = vunpack.c.h.b16 %v3195
    %v3443 = vunpack.c.l.b16 %v3196
    %v3444 = vunpack.c.h.b16 %v3196
    %v3445 = vunpack.c.l.b16 %v3197
    %v3446 = vunpack.c.h.b16 %v3197
    %v3447 = vunpack.c.l.b16 %v3198
    %v3448 = vunpack.c.h.b16 %v3198
    %v3449 = vunpack.c.l.b16 %v3199
    %v3450 = vunpack.c.h.b16 %v3199
    %v3451 = vunpack.c.l.b16 %v3200
    %v3452 = vunpack.c.h.b16 %v3200
    %v3453 = vunpack.c.l.b16 %v3201
    %v3454 = vunpack.c.h.b16 %v3201
    %v3455 = vunpack.c.l.b16 %v3202
    %v3456 = vunpack.c.h.b16 %v3202
    %v3457 = vunpack.c.l.b16 %v3203
    %v3458 = vunpack.c.h.b16 %v3203
    %v3459 = vunpack.c.l.b16 %v3204
    %v3460 = vunpack.c.h.b16 %v3204
    %v3461 = vunpack.c.l.b16 %v3205
    %v3462 = vunpack.c.h.b16 %v3205
    %v3463 = vunpack.c.l.b16 %v3206
    %v3464 = vunpack.c.h.b16 %v3206
    %v3465 = vunpack.c.l.b16 %v3207
    %v3466 = vunpack.c.h.b16 %v3207
    %v3467 = vunpack.c.l.b16 %v3208
    %v3468 = vunpack.c.h.b16 %v3208
    %v3469 = vunpack.c.l.b16 %v3209
    %v3470 = vunpack.c.h.b16 %v3209
    %v3471 = vunpack.c.l.b16 %v3210
    %v3472 = vunpack.c.h.b16 %v3210
    %v3473 = vunpack.c.l.b16 %v3211
    %v3474 = vunpack.c.h.b16 %v3211
    %v3475 = vunpack.c.l.b16 %v3212
    %v3476 = vunpack.c.h.b16 %v3212
    %v3477 = vunpack.c.l.b16 %v3213
    %v3478 = vunpack.c.h.b16 %v3213
    %v3479 = vunpack.c.l.b16 %v3214
    %v3480 = vunpack.c.h.b16 %v3214
    %v3481 = vunpack.c.l.b16 %v3215
    %v3482 = vunpack.c.h.b16 %v3215
    %v3483 = vunpack.c.l.b16 %v3216
    %v3484 = vunpack.c.h.b16 %v3216
    %v3485 = vunpack.c.l.b16 %v3217
    %v3486 = vunpack.c.h.b16 %v3217
    %v3487 = vunpack.c.l.b16 %v3218
    %v3488 = vunpack.c.h.b16 %v3218
    %v3489 = vunpack.c.l.b16 %v3219
    %v3490 = vunpack.c.h.b16 %v3219
    %v3491 = vunpack.c.l.b16 %v3220
    %v3492 = vunpack.c.h.b16 %v3220
    %v3493 = vunpack.c.l.b16 %v3221
    %v3494 = vunpack.c.h.b16 %v3221
    %v3495 = vunpack.c.l.b16 %v3222
    %v3496 = vunpack.c.h.b16 %v3222
    %v3497 = vunpack.c.l.b16 %v3223
    %v3498 = vunpack.c.h.b16 %v3223
    %v3499 = vunpack.c.l.b16 %v3224
    %v3500 = vunpack.c.h.b16 %v3224
    %v3501 = vunpack.c.l.b16 %v3225
    %v3502 = vunpack.c.h.b16 %v3225
    %v3503 = vunpack.c.l.b16 %v3226
    %v3504 = vunpack.c.h.b16 %v3226
    %v3505 = vunpack.c.l.b16 %v3227
    %v3506 = vunpack.c.h.b16 %v3227
    %v3507 = vunpack.c.l.b16 %v3228
    %v3508 = vunpack.c.h.b16 %v3228
    %v3509 = vunpack.c.l.b16 %v3229
    %v3510 = vunpack.c.h.b16 %v3229
    %v3511 = vunpack.c.l.b16 %v3230
    %v3512 = vunpack.c.h.b16 %v3230
    %v3513 = vunpack.c.l.b16 %v3231
    %v3514 = vunpack.c.h.b16 %v3231
    %v3515 = vunpack.c.l.b16 %v3232
    %v3516 = vunpack.c.h.b16 %v3232
    %v3517 = vunpack.c.l.b16 %v3233
    %v3518 = vunpack.c.h.b16 %v3233
    %v3519 = vunpack.c.l.b16 %v3234
    %v3520 = vunpack.c.h.b16 %v3234
    %v3521 = vunpack.c.l.b16 %v3235
    %v3522 = vunpack.c.h.b16 %v3235
    %v3523 = vunpack.c.l.b16 %v3236
    %v3524 = vunpack.c.h.b16 %v3236
    %v3525 = vunpack.c.l.b16 %v3237
    %v3526 = vunpack.c.h.b16 %v3237
    %v3527 = vunpack.c.l.b16 %v3238
    %v3528 = vunpack.c.h.b16 %v3238
    %v3529 = vunpack.c.l.b16 %v3239
    %v3530 = vunpack.c.h.b16 %v3239
    %v3531 = vunpack.c.l.b16 %v3240
    %v3532 = vunpack.c.h.b16 %v3240
    %v3533 = vunpack.c.l.b16 %v3241
    %v3534 = vunpack.c.h.b16 %v3241
    %v3535 = vunpack.c.l.b16 %v3242
    %v3536 = vunpack.c.h.b16 %v3242
    %v3537 = vunpack.c.l.b16 %v3243
    %v3538 = vunpack.c.h.b16 %v3243
    %v3539 = vunpack.c.l.b16 %v3244
    %v3540 = vunpack.c.h.b16 %v3244
    %v3541 = vunpack.c.l.b16 %v3245
    %v3542 = vunpack.c.h.b16 %v3245
    %v3543 = vunpack.c.l.b16 %v3246
    %v3544 = vunpack.c.h.b16 %v3246
    %v3545 = vunpack.c.l.b16 %v3247
    %v3546 = vunpack.c.h.b16 %v3247
    %v3547 = vunpack.c.l.b16 %v3248
    %v3548 = vunpack.c.h.b16 %v3248
    %v3549 = vunpack.c.l.b16 %v3249
    %v3550 = vunpack.c.h.b16 %v3249
    %v3551 = vunpack.c.l.b16 %v3250
    %v3552 = vunpack.c.h.b16 %v3250
    %v3553 = vunpack.c.l.b16 %v3251
    %v3554 = vunpack.c.h.b16 %v3251
    %v3555 = vunpack.c.l.b16 %v3252
    %v3556 = vunpack.c.h.b16 %v3252
    %v3557 = vunpack.c.l.b16 %v3253
    %v3558 = vunpack.c.h.b16 %v3253
    %v3559 = vunpack.c.l.b16 %v3254
    %v3560 = vunpack.c.h.b16 %v3254
    %v3561 = vunpack.c.l.b16 %v3255
    %v3562 = vunpack.c.h.b16 %v3255
    %v3563 = vunpack.c.l.b16 %v3256
    %v3564 = vunpack.c.h.b16 %v3256
    %v3565 = vunpack.c.l.b16 %v3257
    %v3566 = vunpack.c.h.b16 %v3257
    %v3567 = vunpack.c.l.b16 %v3258
    %v3568 = vunpack.c.h.b16 %v3258
    %v3569 = vunpack.c.l.b16 %v3259
    %v3570 = vunpack.c.h.b16 %v3259
    %v3571 = vunpack.c.l.b16 %v3260
    %v3572 = vunpack.c.h.b16 %v3260
    %v3573 = vunpack.c.l.b16 %v3261
    %v3574 = vunpack.c.h.b16 %v3261
    %v3575 = vunpack.c.l.b16 %v3262
    %v3576 = vunpack.c.h.b16 %v3262
    %v3577 = vunpack.c.l.b16 %v3263
    %v3578 = vunpack.c.h.b16 %v3263
    %v3579 = vunpack.c.l.b16 %v3264
    %v3580 = vunpack.c.h.b16 %v3264
    %v3581 = vunpack.c.l.b16 %v3265
    %v3582 = vunpack.c.h.b16 %v3265
    %v3583 = vunpack.c.l.b16 %v3266
    %v3584 = vunpack.c.h.b16 %v3266
    %v3585 = vunpack.c.l.b16 %v3267
    %v3586 = vunpack.c.h.b16 %v3267
    %v3587 = vunpack.c.l.b16 %v3268
    %v3588 = vunpack.c.h.b16 %v3268
    %v3589 = vunpack.c.l.b16 %v3269
    %v3590 = vunpack.c.h.b16 %v3269
    %v3591 = vunpack.c.l.b16 %v3270
    %v3592 = vunpack.c.h.b16 %v3270
    %v3593 = vunpack.c.l.b16 %v3271
    %v3594 = vunpack.c.h.b16 %v3271
    %v3595 = vpack.c.b16 %v3409, %v3403
    %v3596 = vpack.c.b16 %v3410, %v3404
    %v3597 = vpack.c.b16 %v3411, %v3405
    %v3598 = vpack.c.b16 %v3412, %v3406
    %v3599 = vpack.c.b16 %v3413, %v3407
    %v3600 = vpack.c.b16 %v3414, %v3408
    %v3601 = vpack.c.b16 %v3421, %v3415
    %v3602 = vpack.c.b16 %v3422, %v3416
    %v3603 = vpack.c.b16 %v3423, %v3417
    %v3604 = vpack.c.b16 %v3424, %v3418
    %v3605 = vpack.c.b16 %v3425, %v3419
    %v3606 = vpack.c.b16 %v3426, %v3420
    %v3607 = vpack.c.b16 %v3433, %v3427
    %v3608 = vpack.c.b16 %v3434, %v3428
    %v3609 = vpack.c.b16 %v3435, %v3429
    %v3610 = vpack.c.b16 %v3436, %v3430
    %v3611 = vpack.c.b16 %v3437, %v3431
    %v3612 = vpack.c.b16 %v3438, %v3432
    %v3613 = vpack.c.b16 %v3445, %v3439
    %v3614 = vpack.c.b16 %v3446, %v3440
    %v3615 = vpack.c.b16 %v3447, %v3441
    %v3616 = vpack.c.b16 %v3448, %v3442
    %v3617 = vpack.c.b16 %v3449, %v3443
    %v3618 = vpack.c.b16 %v3450, %v3444
    %v3619 = vpack.c.b16 %v3457, %v3451
    %v3620 = vpack.c.b16 %v3458, %v3452
    %v3621 = vpack.c.b16 %v3459, %v3453
    %v3622 = vpack.c.b16 %v3460, %v3454
    %v3623 = vpack.c.b16 %v3461, %v3455
    %v3624 = vpack.c.b16 %v3462, %v3456
    %v3625 = vpack.c.b16 %v3469, %v3463
    %v3626 = vpack.c.b16 %v3470, %v3464
    %v3627 = vpack.c.b16 %v3471, %v3465
    %v3628 = vpack.c.b16 %v3472, %v3466
    %v3629 = vpack.c.b16 %v3473, %v3467
    %v3630 = vpack.c.b16 %v3474, %v3468
    %v3631 = vpack.c.b16 %v3481, %v3475
    %v3632 = vpack.c.b16 %v3482, %v3476
    %v3633 = vpack.c.b16 %v3483, %v3477
    %v3634 = vpack.c.b16 %v3484, %v3478
    %v3635 = vpack.c.b16 %v3485, %v3479
    %v3636 = vpack.c.b16 %v3486, %v3480
    %v3637 = vpack.c.b16 %v3493, %v3487
    %v3638 = vpack.c.b16 %v3494, %v3488
    %v3639 = vpack.c.b16 %v3495, %v3489
    %v3640 = vpack.c.b16 %v3496, %v3490
    %v3641 = vpack.c.b16 %v3497, %v3491
    %v3642 = vpack.c.b16 %v3498, %v3492
    %v3643 = vpack.c.b16 %v3505, %v3499
    %v3644 = vpack.c.b16 %v3506, %v3500
    %v3645 = vpack.c.b16 %v3507, %v3501
    %v3646 = vpack.c.b16 %v3508, %v3502
    %v3647 = vpack.c.b16 %v3509, %v3503
    %v3648 = vpack.c.b16 %v3510, %v3504
    %v3649 = vpack.c.b16 %v3517, %v3511
    %v3650 = vpack.c.b16 %v3518, %v3512
    %v3651 = vpack.c.b16 %v3519, %v3513
    %v3652 = vpack.c.b16 %v3520, %v3514
    %v3653 = vpack.c.b16 %v3521, %v3515
    %v3654 = vpack.c.b16 %v3522, %v3516
    %v3655 = vpack.c.b16 %v3529, %v3523
    %v3656 = vpack.c.b16 %v3530, %v3524
    %v3657 = vpack.c.b16 %v3531, %v3525
    %v3658 = vpack.c.b16 %v3532, %v3526
    %v3659 = vpack.c.b16 %v3533, %v3527
    %v3660 = vpack.c.b16 %v3534, %v3528
    %v3661 = vpack.c.b16 %v3541, %v3535
    %v3662 = vpack.c.b16 %v3542, %v3536
    %v3663 = vpack.c.b16 %v3543, %v3537
    %v3664 = vpack.c.b16 %v3544, %v3538
    %v3665 = vpack.c.b16 %v3545, %v3539
    %v3666 = vpack.c.b16 %v3546, %v3540
    %v3667 = vpack.c.b16 %v3553, %v3547
    %v3668 = vpack.c.b16 %v3554, %v3548
    %v3669 = vpack.c.b16 %v3555, %v3549
    %v3670 = vpack.c.b16 %v3556, %v3550
    %v3671 = vpack.c.b16 %v3557, %v3551
    %v3672 = vpack.c.b16 %v3558, %v3552
    %v3673 = vpack.c.b16 %v3565, %v3559
    %v3674 = vpack.c.b16 %v3566, %v3560
    %v3675 = vpack.c.b16 %v3567, %v3561
    %v3676 = vpack.c.b16 %v3568, %v3562
    %v3677 = vpack.c.b16 %v3569, %v3563
    %v3678 = vpack.c.b16 %v3570, %v3564
    %v3679 = vpack.c.b16 %v3577, %v3571
    %v3680 = vpack.c.b16 %v3578, %v3572
    %v3681 = vpack.c.b16 %v3579, %v3573
    %v3682 = vpack.c.b16 %v3580, %v3574
    %v3683 = vpack.c.b16 %v3581, %v3575
    %v3684 = vpack.c.b16 %v3582, %v3576
    %v3685 = vpack.c.b16 %v3589, %v3583
    %v3686 = vpack.c.b16 %v3590, %v3584
    %v3687 = vpack.c.b16 %v3591, %v3585
    %v3688 = vpack.c.b16 %v3592, %v3586
    %v3689 = vpack.c.b16 %v3593, %v3587
    %v3690 = vpack.c.b16 %v3594, %v3588
    %3787 = vmatprep.subr.bf16.mxu0 %v3638
    %3788 = vmatpush1.bf16.msra.mxu0 %v3637
    %3789 = vmatprep.subr.bf16.mxu0 %v3632
    %3790 = vmatpush1.bf16.msra.mxu0 %v3631
    %3791 = vmatprep.subr.bf16.mxu0 %v3626
    %3792 = vmatpush1.bf16.msra.mxu0 %v3625
    %3793 = vmatprep.subr.bf16.mxu0 %v3620
    %3794 = vmatpush1.bf16.msra.mxu0 %v3619
    %3795 = vmatprep.subr.bf16.mxu0 %v3614
    %3796 = vmatpush1.bf16.msra.mxu0 %v3613
    %3797 = vmatprep.subr.bf16.mxu0 %v3608
    %3798 = vmatpush1.bf16.msra.mxu0 %v3607
    %3799 = vmatprep.subr.bf16.mxu0 %v3602
    %3800 = vmatpush1.bf16.msra.mxu0 %v3601
    %3801 = vmatprep.subr.bf16.mxu0 %v3596
    %3802 = vmatpush1.bf16.msra.mxu0 %v3595
    %3803 = vmatprep.subr.bf16.mxu0 %v3686
    %3804 = vmatpush2.bf16.msra.mxu0 %v3685
    %3805 = vmatprep.subr.bf16.mxu0 %v3680
    %3806 = vmatpush2.bf16.msra.mxu0 %v3679
    %3807 = vmatprep.subr.bf16.mxu0 %v3674
    %3808 = vmatpush2.bf16.msra.mxu0 %v3673
    %3809 = vmatprep.subr.bf16.mxu0 %v3668
    %3810 = vmatpush2.bf16.msra.mxu0 %v3667
    %3811 = vmatprep.subr.bf16.mxu0 %v3662
    %3812 = vmatpush2.bf16.msra.mxu0 %v3661
    %3813 = vmatprep.subr.bf16.mxu0 %v3656
    %3814 = vmatpush2.bf16.msra.mxu0 %v3655
    %3815 = vmatprep.subr.bf16.mxu0 %v3650
    %3816 = vmatpush2.bf16.msra.mxu0 %v3649
    %3817 = vmatprep.subr.bf16.mxu0 %v3644
    %3818 = vmatpush2.bf16.msra.mxu0 %v3643
    %3819 = vmatprep.mubr.bf16.mxu0 %v3273
    %3820 = vmatmul.mubr.bf16.gmra.mxu0 %v3272
    %v3821 = vpop.f32.mrf.mxu0
    %v3822 = vadd.f32 %v3280, %v3821
    %v3823 = vpop.f32.mrf.mxu0
    %v3824 = vadd.f32 %v3284, %v3823
    %v3825 = vpop.f32.mrf.mxu0
    %v3826 = vpop.f32.mrf.mxu0
    %3827 = vdwg.mxu0
    %3828 = vmatprep.subr.bf16.mxu0 %v3640
    %3829 = vmatpush1.bf16.msra.mxu0 %v3639
    %3830 = vmatprep.subr.bf16.mxu0 %v3634
    %3831 = vmatpush1.bf16.msra.mxu0 %v3633
    %3832 = vmatprep.subr.bf16.mxu0 %v3628
    %3833 = vmatpush1.bf16.msra.mxu0 %v3627
    %3834 = vmatprep.subr.bf16.mxu0 %v3622
    %3835 = vmatpush1.bf16.msra.mxu0 %v3621
    %3836 = vmatprep.subr.bf16.mxu0 %v3616
    %3837 = vmatpush1.bf16.msra.mxu0 %v3615
    %3838 = vmatprep.subr.bf16.mxu0 %v3610
    %3839 = vmatpush1.bf16.msra.mxu0 %v3609
    %3840 = vmatprep.subr.bf16.mxu0 %v3604
    %3841 = vmatpush1.bf16.msra.mxu0 %v3603
    %3842 = vmatprep.subr.bf16.mxu0 %v3598
    %3843 = vmatpush1.bf16.msra.mxu0 %v3597
    %3844 = vmatprep.subr.bf16.mxu0 %v3688
    %3845 = vmatpush2.bf16.msra.mxu0 %v3687
    %3846 = vmatprep.subr.bf16.mxu0 %v3682
    %3847 = vmatpush2.bf16.msra.mxu0 %v3681
    %3848 = vmatprep.subr.bf16.mxu0 %v3676
    %3849 = vmatpush2.bf16.msra.mxu0 %v3675
    %3850 = vmatprep.subr.bf16.mxu0 %v3670
    %3851 = vmatpush2.bf16.msra.mxu0 %v3669
    %3852 = vmatprep.subr.bf16.mxu0 %v3664
    %3853 = vmatpush2.bf16.msra.mxu0 %v3663
    %3854 = vmatprep.subr.bf16.mxu0 %v3658
    %3855 = vmatpush2.bf16.msra.mxu0 %v3657
    %3856 = vmatprep.subr.bf16.mxu0 %v3652
    %3857 = vmatpush2.bf16.msra.mxu0 %v3651
    %3858 = vmatprep.subr.bf16.mxu0 %v3646
    %3859 = vmatpush2.bf16.msra.mxu0 %v3645
    %3860 = vmatprep.mubr.bf16.mxu0 %v3273
    %3861 = vmatmul.mubr.bf16.gmra.mxu0 %v3272
    %v3862 = vpop.f32.mrf.mxu0
    %v3863 = vadd.f32 %v3288, %v3862
    %v3864 = vpop.f32.mrf.mxu0
    %v3865 = vadd.f32 %v3292, %v3864
    %v3866 = vpop.f32.mrf.mxu0
    %v3867 = vpop.f32.mrf.mxu0
    %3868 = vdwg.mxu0
    %3869 = vmatprep.subr.bf16.mxu0 %v3642
    %3870 = vmatpush1.bf16.msra.mxu0 %v3641
    %3871 = vmatprep.subr.bf16.mxu0 %v3636
    %3872 = vmatpush1.bf16.msra.mxu0 %v3635
    %3873 = vmatprep.subr.bf16.mxu0 %v3630
    %3874 = vmatpush1.bf16.msra.mxu0 %v3629
    %3875 = vmatprep.subr.bf16.mxu0 %v3624
    %3876 = vmatpush1.bf16.msra.mxu0 %v3623
    %3877 = vmatprep.subr.bf16.mxu0 %v3618
    %3878 = vmatpush1.bf16.msra.mxu0 %v3617
    %3879 = vmatprep.subr.bf16.mxu0 %v3612
    %3880 = vmatpush1.bf16.msra.mxu0 %v3611
    %3881 = vmatprep.subr.bf16.mxu0 %v3606
    %3882 = vmatpush1.bf16.msra.mxu0 %v3605
    %3883 = vmatprep.subr.bf16.mxu0 %v3600
    %3884 = vmatpush1.bf16.msra.mxu0 %v3599
    %3885 = vmatprep.subr.bf16.mxu0 %v3690
    %3886 = vmatpush2.bf16.msra.mxu0 %v3689
    %3887 = vmatprep.subr.bf16.mxu0 %v3684
    %3888 = vmatpush2.bf16.msra.mxu0 %v3683
    %3889 = vmatprep.subr.bf16.mxu0 %v3678
    %3890 = vmatpush2.bf16.msra.mxu0 %v3677
    %3891 = vmatprep.subr.bf16.mxu0 %v3672
    %3892 = vmatpush2.bf16.msra.mxu0 %v3671
    %3893 = vmatprep.subr.bf16.mxu0 %v3666
    %3894 = vmatpush2.bf16.msra.mxu0 %v3665
    %3895 = vmatprep.subr.bf16.mxu0 %v3660
    %3896 = vmatpush2.bf16.msra.mxu0 %v3659
    %3897 = vmatprep.subr.bf16.mxu0 %v3654
    %3898 = vmatpush2.bf16.msra.mxu0 %v3653
    %3899 = vmatprep.subr.bf16.mxu0 %v3648
    %3900 = vmatpush2.bf16.msra.mxu0 %v3647
    %3901 = vmatprep.mubr.bf16.mxu0 %v3273
    %3902 = vmatmul.mubr.bf16.gmra.mxu0 %v3272
    %v3903 = vpop.f32.mrf.mxu0
    %v3904 = vadd.f32 %v3296, %v3903
    %v3905 = vpop.f32.mrf.mxu0
    %v3906 = vadd.f32 %v3300, %v3905
    %v3907 = vpop.f32.mrf.mxu0
    %v3908 = vpop.f32.mrf.mxu0
    %3909 = vdwg.mxu0
    %v3910 = vpack.c.bf16 %v3822, %v3822
    %v3911 = vpack.c.bf16 %v3863, %v3863
    %v3913 = vsel %vm2102, %v3910, 0
    %v3916 = vsel %vm2102, %v3911, 0
    %3918 = vmatprep.subr.bf16.mxu0 0
    %3919 = vmatpush1.bf16.xpose.msra.mxu0 0
    %3920 = vmatprep.subr.bf16.mxu0 0
    %3921 = vmatpush1.bf16.xpose.msra.mxu0 0
    %3922 = vmatprep.subr.bf16.mxu0 0
    %3923 = vmatpush1.bf16.xpose.msra.mxu0 0
    %3924 = vmatprep.subr.bf16.mxu0 0
    %3925 = vmatpush1.bf16.xpose.msra.mxu0 0
    %3926 = vmatprep.subr.bf16.mxu0 0
    %3927 = vmatpush1.bf16.xpose.msra.mxu0 0
    %3928 = vmatprep.subr.bf16.mxu0 0
    %3929 = vmatpush1.bf16.xpose.msra.mxu0 0
    %3930 = vmatprep.subr.bf16.mxu0 0
    %3931 = vmatpush1.bf16.xpose.msra.mxu0 0
    %3932 = vmatprep.subr.bf16.mxu0 0
    %3933 = vmatpush1.bf16.xpose.msra.mxu0 %v3916
    %3934 = vmatprep.subr.bf16.mxu0 0
    %3935 = vmatpush2.bf16.xpose.msra.mxu0 0
    %3936 = vmatprep.subr.bf16.mxu0 0
    %3937 = vmatpush2.bf16.xpose.msra.mxu0 0
    %3938 = vmatprep.subr.bf16.mxu0 0
    %3939 = vmatpush2.bf16.xpose.msra.mxu0 0
    %3940 = vmatprep.subr.bf16.mxu0 0
    %3941 = vmatpush2.bf16.xpose.msra.mxu0 0
    %3942 = vmatprep.subr.bf16.mxu0 0
    %3943 = vmatpush2.bf16.xpose.msra.mxu0 0
    %3944 = vmatprep.subr.bf16.mxu0 0
    %3945 = vmatpush2.bf16.xpose.msra.mxu0 0
    %3946 = vmatprep.subr.bf16.mxu0 0
    %3947 = vmatpush2.bf16.xpose.msra.mxu0 0
    %3948 = vmatprep.subr.bf16.mxu0 0
    %3949 = vmatpush2.bf16.xpose.msra.mxu0 0
    %3950 = vmatprep.mubr.bf16.mxu0 0
    %3951 = vmatmul.mubr.bf16.gmra.mxu0 %v3913
    %v3952 = vpop.f32.mrf.mxu0
    %v3953 = vadd.f32 0.0, %v3952
    %v3954 = vpop.f32.mrf.mxu0
    %v3955 = vpop.f32.mrf.mxu0
    %v3956 = vpop.f32.mrf.mxu0
    %3957 = vdwg.mxu0
    %v3958 = vsel %vm2149, %v3953, -inf
    %3959 = vmax.xlane.f32.xlu0 %v3958
    %v3960 = vpop.xlane.xlu0 %3959
    %v3961 = vsub.f32 %v3953, %v3960
    %v3962 = vmul.f32 %v3961, 1.442695
    %v3963 = vpow.pop %v3962
    %v3964 = vsel %vm2149, %v3963, 0.0
    %3965 = vadd.xlane.f32.xlu0 %v3964
    %v3966 = vpop.xlane.xlu0 %3965
    %v3967 = vrcp.pop %v3966
    %v3968 = vmul.f32 %v3963, %v3967
    %v3969 = vpack.c.bf16 %v3968, %v3968
    %v3970 = vpack.c.bf16 %v3904, %v3904
    %v3972 = vsel %vm2149, %v3969, 0
    %v3975 = vsel %vm516, %v3970, 0
    %3977 = vmatprep.subr.bf16.mxu0 0
    %3978 = vmatpush1.bf16.msra.mxu0 0
    %3979 = vmatprep.subr.bf16.mxu0 0
    %3980 = vmatpush1.bf16.msra.mxu0 0
    %3981 = vmatprep.subr.bf16.mxu0 0
    %3982 = vmatpush1.bf16.msra.mxu0 0
    %3983 = vmatprep.subr.bf16.mxu0 0
    %3984 = vmatpush1.bf16.msra.mxu0 0
    %3985 = vmatprep.subr.bf16.mxu0 0
    %3986 = vmatpush1.bf16.msra.mxu0 0
    %3987 = vmatprep.subr.bf16.mxu0 0
    %3988 = vmatpush1.bf16.msra.mxu0 0
    %3989 = vmatprep.subr.bf16.mxu0 0
    %3990 = vmatpush1.bf16.msra.mxu0 0
    %3991 = vmatprep.subr.bf16.mxu0 0
    %3992 = vmatpush1.bf16.msra.mxu0 %v3975
    %3993 = vmatprep.subr.bf16.mxu0 0
    %3994 = vmatpush2.bf16.msra.mxu0 0
    %3995 = vmatprep.subr.bf16.mxu0 0
    %3996 = vmatpush2.bf16.msra.mxu0 0
    %3997 = vmatprep.subr.bf16.mxu0 0
    %3998 = vmatpush2.bf16.msra.mxu0 0
    %3999 = vmatprep.subr.bf16.mxu0 0
    %4000 = vmatpush2.bf16.msra.mxu0 0
    %4001 = vmatprep.subr.bf16.mxu0 0
    %4002 = vmatpush2.bf16.msra.mxu0 0
    %4003 = vmatprep.subr.bf16.mxu0 0
    %4004 = vmatpush2.bf16.msra.mxu0 0
    %4005 = vmatprep.subr.bf16.mxu0 0
    %4006 = vmatpush2.bf16.msra.mxu0 0
    %4007 = vmatprep.subr.bf16.mxu0 0
    %4008 = vmatpush2.bf16.msra.mxu0 0
    %4009 = vmatprep.mubr.bf16.mxu0 0
    %4010 = vmatmul.mubr.bf16.gmra.mxu0 %v3972
    %v4011 = vpop.f32.mrf.mxu0
    %v4012 = vadd.f32 0.0, %v4011
    %v4013 = vpop.f32.mrf.mxu0
    %v4014 = vpop.f32.mrf.mxu0
    %v4015 = vpop.f32.mrf.mxu0
    %4016 = vdwg.mxu0
    %4018 = vrot.lane.b32.xlu0 %v3910, 64
    %v4019 = vpop.permute.xlu0 %4018
    %4021 = vrot.lane.b32.xlu0 %v3911, 64
    %v4022 = vpop.permute.xlu0 %4021
    %v4024 = vsel %vm2102, %v4019, 0
    %v4027 = vsel %vm2102, %v4022, 0
    %4029 = vmatprep.subr.bf16.mxu0 0
    %4030 = vmatpush1.bf16.xpose.msra.mxu0 0
    %4031 = vmatprep.subr.bf16.mxu0 0
    %4032 = vmatpush1.bf16.xpose.msra.mxu0 0
    %4033 = vmatprep.subr.bf16.mxu0 0
    %4034 = vmatpush1.bf16.xpose.msra.mxu0 0
    %4035 = vmatprep.subr.bf16.mxu0 0
    %4036 = vmatpush1.bf16.xpose.msra.mxu0 0
    %4037 = vmatprep.subr.bf16.mxu0 0
    %4038 = vmatpush1.bf16.xpose.msra.mxu0 0
    %4039 = vmatprep.subr.bf16.mxu0 0
    %4040 = vmatpush1.bf16.xpose.msra.mxu0 0
    %4041 = vmatprep.subr.bf16.mxu0 0
    %4042 = vmatpush1.bf16.xpose.msra.mxu0 0
    %4043 = vmatprep.subr.bf16.mxu0 0
    %4044 = vmatpush1.bf16.xpose.msra.mxu0 %v4027
    %4045 = vmatprep.subr.bf16.mxu0 0
    %4046 = vmatpush2.bf16.xpose.msra.mxu0 0
    %4047 = vmatprep.subr.bf16.mxu0 0
    %4048 = vmatpush2.bf16.xpose.msra.mxu0 0
    %4049 = vmatprep.subr.bf16.mxu0 0
    %4050 = vmatpush2.bf16.xpose.msra.mxu0 0
    %4051 = vmatprep.subr.bf16.mxu0 0
    %4052 = vmatpush2.bf16.xpose.msra.mxu0 0
    %4053 = vmatprep.subr.bf16.mxu0 0
    %4054 = vmatpush2.bf16.xpose.msra.mxu0 0
    %4055 = vmatprep.subr.bf16.mxu0 0
    %4056 = vmatpush2.bf16.xpose.msra.mxu0 0
    %4057 = vmatprep.subr.bf16.mxu0 0
    %4058 = vmatpush2.bf16.xpose.msra.mxu0 0
    %4059 = vmatprep.subr.bf16.mxu0 0
    %4060 = vmatpush2.bf16.xpose.msra.mxu0 0
    %4061 = vmatprep.mubr.bf16.mxu0 0
    %4062 = vmatmul.mubr.bf16.gmra.mxu0 %v4024
    %v4063 = vpop.f32.mrf.mxu0
    %v4064 = vadd.f32 0.0, %v4063
    %v4065 = vpop.f32.mrf.mxu0
    %v4066 = vpop.f32.mrf.mxu0
    %v4067 = vpop.f32.mrf.mxu0
    %4068 = vdwg.mxu0
    %v4069 = vsel %vm2149, %v4064, -inf
    %4070 = vmax.xlane.f32.xlu0 %v4069
    %v4071 = vpop.xlane.xlu0 %4070
    %v4072 = vsub.f32 %v4064, %v4071
    %v4073 = vmul.f32 %v4072, 1.442695
    %v4074 = vpow.pop %v4073
    %v4075 = vsel %vm2149, %v4074, 0.0
    %4076 = vadd.xlane.f32.xlu0 %v4075
    %v4077 = vpop.xlane.xlu0 %4076
    %v4078 = vrcp.pop %v4077
    %v4079 = vmul.f32 %v4074, %v4078
    %v4080 = vpack.c.bf16 %v4079, %v4079
    %4082 = vrot.lane.b32.xlu0 %v3970, 64
    %v4083 = vpop.permute.xlu0 %4082
    %v4085 = vsel %vm2149, %v4080, 0
    %v4088 = vsel %vm516, %v4083, 0
    %4090 = vmatprep.subr.bf16.mxu0 0
    %4091 = vmatpush1.bf16.msra.mxu0 0
    %4092 = vmatprep.subr.bf16.mxu0 0
    %4093 = vmatpush1.bf16.msra.mxu0 0
    %4094 = vmatprep.subr.bf16.mxu0 0
    %4095 = vmatpush1.bf16.msra.mxu0 0
    %4096 = vmatprep.subr.bf16.mxu0 0
    %4097 = vmatpush1.bf16.msra.mxu0 0
    %4098 = vmatprep.subr.bf16.mxu0 0
    %4099 = vmatpush1.bf16.msra.mxu0 0
    %4100 = vmatprep.subr.bf16.mxu0 0
    %4101 = vmatpush1.bf16.msra.mxu0 0
    %4102 = vmatprep.subr.bf16.mxu0 0
    %4103 = vmatpush1.bf16.msra.mxu0 0
    %4104 = vmatprep.subr.bf16.mxu0 0
    %4105 = vmatpush1.bf16.msra.mxu0 %v4088
    %4106 = vmatprep.subr.bf16.mxu0 0
    %4107 = vmatpush2.bf16.msra.mxu0 0
    %4108 = vmatprep.subr.bf16.mxu0 0
    %4109 = vmatpush2.bf16.msra.mxu0 0
    %4110 = vmatprep.subr.bf16.mxu0 0
    %4111 = vmatpush2.bf16.msra.mxu0 0
    %4112 = vmatprep.subr.bf16.mxu0 0
    %4113 = vmatpush2.bf16.msra.mxu0 0
    %4114 = vmatprep.subr.bf16.mxu0 0
    %4115 = vmatpush2.bf16.msra.mxu0 0
    %4116 = vmatprep.subr.bf16.mxu0 0
    %4117 = vmatpush2.bf16.msra.mxu0 0
    %4118 = vmatprep.subr.bf16.mxu0 0
    %4119 = vmatpush2.bf16.msra.mxu0 0
    %4120 = vmatprep.subr.bf16.mxu0 0
    %4121 = vmatpush2.bf16.msra.mxu0 0
    %4122 = vmatprep.mubr.bf16.mxu0 0
    %4123 = vmatmul.mubr.bf16.gmra.mxu0 %v4085
    %v4124 = vpop.f32.mrf.mxu0
    %v4125 = vadd.f32 0.0, %v4124
    %v4126 = vpop.f32.mrf.mxu0
    %v4127 = vpop.f32.mrf.mxu0
    %v4128 = vpop.f32.mrf.mxu0
    %4129 = vdwg.mxu0
    %v4130 = vpack.c.bf16 %v3824, %v3824
    %v4131 = vpack.c.bf16 %v3865, %v3865
    %v4133 = vsel %vm2102, %v4130, 0
    %v4136 = vsel %vm2102, %v4131, 0
    %4138 = vmatprep.subr.bf16.mxu0 0
    %4139 = vmatpush1.bf16.xpose.msra.mxu0 0
    %4140 = vmatprep.subr.bf16.mxu0 0
    %4141 = vmatpush1.bf16.xpose.msra.mxu0 0
    %4142 = vmatprep.subr.bf16.mxu0 0
    %4143 = vmatpush1.bf16.xpose.msra.mxu0 0
    %4144 = vmatprep.subr.bf16.mxu0 0
    %4145 = vmatpush1.bf16.xpose.msra.mxu0 0
    %4146 = vmatprep.subr.bf16.mxu0 0
    %4147 = vmatpush1.bf16.xpose.msra.mxu0 0
    %4148 = vmatprep.subr.bf16.mxu0 0
    %4149 = vmatpush1.bf16.xpose.msra.mxu0 0
    %4150 = vmatprep.subr.bf16.mxu0 0
    %4151 = vmatpush1.bf16.xpose.msra.mxu0 0
    %4152 = vmatprep.subr.bf16.mxu0 0
    %4153 = vmatpush1.bf16.xpose.msra.mxu0 %v4136
    %4154 = vmatprep.subr.bf16.mxu0 0
    %4155 = vmatpush2.bf16.xpose.msra.mxu0 0
    %4156 = vmatprep.subr.bf16.mxu0 0
    %4157 = vmatpush2.bf16.xpose.msra.mxu0 0
    %4158 = vmatprep.subr.bf16.mxu0 0
    %4159 = vmatpush2.bf16.xpose.msra.mxu0 0
    %4160 = vmatprep.subr.bf16.mxu0 0
    %4161 = vmatpush2.bf16.xpose.msra.mxu0 0
    %4162 = vmatprep.subr.bf16.mxu0 0
    %4163 = vmatpush2.bf16.xpose.msra.mxu0 0
    %4164 = vmatprep.subr.bf16.mxu0 0
    %4165 = vmatpush2.bf16.xpose.msra.mxu0 0
    %4166 = vmatprep.subr.bf16.mxu0 0
    %4167 = vmatpush2.bf16.xpose.msra.mxu0 0
    %4168 = vmatprep.subr.bf16.mxu0 0
    %4169 = vmatpush2.bf16.xpose.msra.mxu0 0
    %4170 = vmatprep.mubr.bf16.mxu0 0
    %4171 = vmatmul.mubr.bf16.gmra.mxu0 %v4133
    %v4172 = vpop.f32.mrf.mxu0
    %v4173 = vadd.f32 0.0, %v4172
    %v4174 = vpop.f32.mrf.mxu0
    %v4175 = vpop.f32.mrf.mxu0
    %v4176 = vpop.f32.mrf.mxu0
    %4177 = vdwg.mxu0
    %v4178 = vsel %vm2149, %v4173, -inf
    %4179 = vmax.xlane.f32.xlu0 %v4178
    %v4180 = vpop.xlane.xlu0 %4179
    %v4181 = vsub.f32 %v4173, %v4180
    %v4182 = vmul.f32 %v4181, 1.442695
    %v4183 = vpow.pop %v4182
    %v4184 = vsel %vm2149, %v4183, 0.0
    %4185 = vadd.xlane.f32.xlu0 %v4184
    %v4186 = vpop.xlane.xlu0 %4185
    %v4187 = vrcp.pop %v4186
    %v4188 = vmul.f32 %v4183, %v4187
    %v4189 = vpack.c.bf16 %v4188, %v4188
    %v4190 = vpack.c.bf16 %v3906, %v3906
    %v4192 = vsel %vm2149, %v4189, 0
    %v4195 = vsel %vm516, %v4190, 0
    %4197 = vmatprep.subr.bf16.mxu0 0
    %4198 = vmatpush1.bf16.msra.mxu0 0
    %4199 = vmatprep.subr.bf16.mxu0 0
    %4200 = vmatpush1.bf16.msra.mxu0 0
    %4201 = vmatprep.subr.bf16.mxu0 0
    %4202 = vmatpush1.bf16.msra.mxu0 0
    %4203 = vmatprep.subr.bf16.mxu0 0
    %4204 = vmatpush1.bf16.msra.mxu0 0
    %4205 = vmatprep.subr.bf16.mxu0 0
    %4206 = vmatpush1.bf16.msra.mxu0 0
    %4207 = vmatprep.subr.bf16.mxu0 0
    %4208 = vmatpush1.bf16.msra.mxu0 0
    %4209 = vmatprep.subr.bf16.mxu0 0
    %4210 = vmatpush1.bf16.msra.mxu0 0
    %4211 = vmatprep.subr.bf16.mxu0 0
    %4212 = vmatpush1.bf16.msra.mxu0 %v4195
    %4213 = vmatprep.subr.bf16.mxu0 0
    %4214 = vmatpush2.bf16.msra.mxu0 0
    %4215 = vmatprep.subr.bf16.mxu0 0
    %4216 = vmatpush2.bf16.msra.mxu0 0
    %4217 = vmatprep.subr.bf16.mxu0 0
    %4218 = vmatpush2.bf16.msra.mxu0 0
    %4219 = vmatprep.subr.bf16.mxu0 0
    %4220 = vmatpush2.bf16.msra.mxu0 0
    %4221 = vmatprep.subr.bf16.mxu0 0
    %4222 = vmatpush2.bf16.msra.mxu0 0
    %4223 = vmatprep.subr.bf16.mxu0 0
    %4224 = vmatpush2.bf16.msra.mxu0 0
    %4225 = vmatprep.subr.bf16.mxu0 0
    %4226 = vmatpush2.bf16.msra.mxu0 0
    %4227 = vmatprep.subr.bf16.mxu0 0
    %4228 = vmatpush2.bf16.msra.mxu0 0
    %4229 = vmatprep.mubr.bf16.mxu0 0
    %4230 = vmatmul.mubr.bf16.gmra.mxu0 %v4192
    %v4231 = vpop.f32.mrf.mxu0
    %v4232 = vadd.f32 0.0, %v4231
    %v4233 = vpop.f32.mrf.mxu0
    %v4234 = vpop.f32.mrf.mxu0
    %v4235 = vpop.f32.mrf.mxu0
    %4236 = vdwg.mxu0
    %4238 = vrot.lane.b32.xlu0 %v4130, 64
    %v4239 = vpop.permute.xlu0 %4238
    %4241 = vrot.lane.b32.xlu0 %v4131, 64
    %v4242 = vpop.permute.xlu0 %4241
    %v4244 = vsel %vm2102, %v4239, 0
    %v4247 = vsel %vm2102, %v4242, 0
    %4249 = vmatprep.subr.bf16.mxu0 0
    %4250 = vmatpush1.bf16.xpose.msra.mxu0 0
    %4251 = vmatprep.subr.bf16.mxu0 0
    %4252 = vmatpush1.bf16.xpose.msra.mxu0 0
    %4253 = vmatprep.subr.bf16.mxu0 0
    %4254 = vmatpush1.bf16.xpose.msra.mxu0 0
    %4255 = vmatprep.subr.bf16.mxu0 0
    %4256 = vmatpush1.bf16.xpose.msra.mxu0 0
    %4257 = vmatprep.subr.bf16.mxu0 0
    %4258 = vmatpush1.bf16.xpose.msra.mxu0 0
    %4259 = vmatprep.subr.bf16.mxu0 0
    %4260 = vmatpush1.bf16.xpose.msra.mxu0 0
    %4261 = vmatprep.subr.bf16.mxu0 0
    %4262 = vmatpush1.bf16.xpose.msra.mxu0 0
    %4263 = vmatprep.subr.bf16.mxu0 0
    %4264 = vmatpush1.bf16.xpose.msra.mxu0 %v4247
    %4265 = vmatprep.subr.bf16.mxu0 0
    %4266 = vmatpush2.bf16.xpose.msra.mxu0 0
    %4267 = vmatprep.subr.bf16.mxu0 0
    %4268 = vmatpush2.bf16.xpose.msra.mxu0 0
    %4269 = vmatprep.subr.bf16.mxu0 0
    %4270 = vmatpush2.bf16.xpose.msra.mxu0 0
    %4271 = vmatprep.subr.bf16.mxu0 0
    %4272 = vmatpush2.bf16.xpose.msra.mxu0 0
    %4273 = vmatprep.subr.bf16.mxu0 0
    %4274 = vmatpush2.bf16.xpose.msra.mxu0 0
    %4275 = vmatprep.subr.bf16.mxu0 0
    %4276 = vmatpush2.bf16.xpose.msra.mxu0 0
    %4277 = vmatprep.subr.bf16.mxu0 0
    %4278 = vmatpush2.bf16.xpose.msra.mxu0 0
    %4279 = vmatprep.subr.bf16.mxu0 0
    %4280 = vmatpush2.bf16.xpose.msra.mxu0 0
    %4281 = vmatprep.mubr.bf16.mxu0 0
    %4282 = vmatmul.mubr.bf16.gmra.mxu0 %v4244
    %v4283 = vpop.f32.mrf.mxu0
    %v4284 = vadd.f32 0.0, %v4283
    %v4285 = vpop.f32.mrf.mxu0
    %v4286 = vpop.f32.mrf.mxu0
    %v4287 = vpop.f32.mrf.mxu0
    %4288 = vdwg.mxu0
    %v4289 = vsel %vm2149, %v4284, -inf
    %4290 = vmax.xlane.f32.xlu0 %v4289
    %v4291 = vpop.xlane.xlu0 %4290
    %v4292 = vsub.f32 %v4284, %v4291
    %v4293 = vmul.f32 %v4292, 1.442695
    %v4294 = vpow.pop %v4293
    %v4295 = vsel %vm2149, %v4294, 0.0
    %4296 = vadd.xlane.f32.xlu0 %v4295
    %v4297 = vpop.xlane.xlu0 %4296
    %v4298 = vrcp.pop %v4297
    %v4299 = vmul.f32 %v4294, %v4298
    %v4300 = vpack.c.bf16 %v4299, %v4299
    %4302 = vrot.lane.b32.xlu0 %v4190, 64
    %v4303 = vpop.permute.xlu0 %4302
    %v4305 = vsel %vm2149, %v4300, 0
    %v4308 = vsel %vm516, %v4303, 0
    %4310 = vmatprep.subr.bf16.mxu0 0
    %4311 = vmatpush1.bf16.msra.mxu0 0
    %4312 = vmatprep.subr.bf16.mxu0 0
    %4313 = vmatpush1.bf16.msra.mxu0 0
    %4314 = vmatprep.subr.bf16.mxu0 0
    %4315 = vmatpush1.bf16.msra.mxu0 0
    %4316 = vmatprep.subr.bf16.mxu0 0
    %4317 = vmatpush1.bf16.msra.mxu0 0
    %4318 = vmatprep.subr.bf16.mxu0 0
    %4319 = vmatpush1.bf16.msra.mxu0 0
    %4320 = vmatprep.subr.bf16.mxu0 0
    %4321 = vmatpush1.bf16.msra.mxu0 0
    %4322 = vmatprep.subr.bf16.mxu0 0
    %4323 = vmatpush1.bf16.msra.mxu0 0
    %4324 = vmatprep.subr.bf16.mxu0 0
    %4325 = vmatpush1.bf16.msra.mxu0 %v4308
    %4326 = vmatprep.subr.bf16.mxu0 0
    %4327 = vmatpush2.bf16.msra.mxu0 0
    %4328 = vmatprep.subr.bf16.mxu0 0
    %4329 = vmatpush2.bf16.msra.mxu0 0
    %4330 = vmatprep.subr.bf16.mxu0 0
    %4331 = vmatpush2.bf16.msra.mxu0 0
    %4332 = vmatprep.subr.bf16.mxu0 0
    %4333 = vmatpush2.bf16.msra.mxu0 0
    %4334 = vmatprep.subr.bf16.mxu0 0
    %4335 = vmatpush2.bf16.msra.mxu0 0
    %4336 = vmatprep.subr.bf16.mxu0 0
    %4337 = vmatpush2.bf16.msra.mxu0 0
    %4338 = vmatprep.subr.bf16.mxu0 0
    %4339 = vmatpush2.bf16.msra.mxu0 0
    %4340 = vmatprep.subr.bf16.mxu0 0
    %4341 = vmatpush2.bf16.msra.mxu0 0
    %4342 = vmatprep.mubr.bf16.mxu0 0
    %4343 = vmatmul.mubr.bf16.gmra.mxu0 %v4305
    %v4344 = vpop.f32.mrf.mxu0
    %v4345 = vadd.f32 0.0, %v4344
    %v4346 = vpop.f32.mrf.mxu0
    %v4347 = vpop.f32.mrf.mxu0
    %v4348 = vpop.f32.mrf.mxu0
    %4349 = vdwg.mxu0
    %4351 = vrot.lane.b32.xlu0 %v4125, 64
    %v4352 = vpop.permute.xlu0 %4351
    %4355 = vrot.lane.b32.xlu0 %v4345, 64
    %v4356 = vpop.permute.xlu0 %4355
    %v4358 = vsel %vm2102, %v4012, %v4352
    %v4359 = vsel %vm2102, %v4232, %v4356
    %s4360 = scalar_lea.vmem %s27, 256
    %v4361 = vld [vmem:[%s4360] sm:$0xff]
    %v4362 = vld [vmem:[%s4360 + $0x8] sm:$0xff]
    %v4363 = vld [vmem:[%s4360 + $0x10] sm:$0xff]
    %v4364 = vld [vmem:[%s4360 + $0x18] sm:$0xff]
    %v4365 = vld [vmem:[%s4360 + $0x20] sm:$0xff]
    %v4366 = vld [vmem:[%s4360 + $0x28] sm:$0xff]
    %v4367 = vld [vmem:[%s4360 + $0x30] sm:$0xff]
    %v4368 = vld [vmem:[%s4360 + $0x38] sm:$0xff]
    %v4369 = vld [vmem:[%s4360 + $0x40] sm:$0xff]
    %v4370 = vld [vmem:[%s4360 + $0x48] sm:$0xff]
    %v4371 = vld [vmem:[%s4360 + $0x50] sm:$0xff]
    %v4372 = vld [vmem:[%s4360 + $0x58] sm:$0xff]
    %v4373 = vld [vmem:[%s4360 + $0x60] sm:$0xff]
    %v4374 = vld [vmem:[%s4360 + $0x68] sm:$0xff]
    %v4375 = vld [vmem:[%s4360 + $0x70] sm:$0xff]
    %v4376 = vld [vmem:[%s4360 + $0x78] sm:$0xff]
    %v4377 = vld [vmem:[%s4360 + $0x80] sm:$0xff]
    %v4378 = vld [vmem:[%s4360 + $0x88] sm:$0xff]
    %v4379 = vld [vmem:[%s4360 + $0x90] sm:$0xff]
    %v4380 = vld [vmem:[%s4360 + $0x98] sm:$0xff]
    %v4381 = vld [vmem:[%s4360 + $0xa0] sm:$0xff]
    %v4382 = vld [vmem:[%s4360 + $0xa8] sm:$0xff]
    %v4383 = vld [vmem:[%s4360 + $0xb0] sm:$0xff]
    %v4384 = vld [vmem:[%s4360 + $0xb8] sm:$0xff]
    %v4385 = vld [vmem:[%s4360 + $0xc0] sm:$0xff]
    %v4386 = vld [vmem:[%s4360 + $0xc8] sm:$0xff]
    %v4387 = vld [vmem:[%s4360 + $0xd0] sm:$0xff]
    %v4388 = vld [vmem:[%s4360 + $0xd8] sm:$0xff]
    %v4389 = vld [vmem:[%s4360 + $0xe0] sm:$0xff]
    %v4390 = vld [vmem:[%s4360 + $0xe8] sm:$0xff]
    %v4391 = vld [vmem:[%s4360 + $0xf0] sm:$0xff]
    %v4392 = vld [vmem:[%s4360 + $0xf8] sm:$0xff]
    %v4393 = vpack.c.bf16 %v4358, %v4358
    %v4394 = vpack.c.bf16 %v4359, %v4359
    %s4395 = scalar_lea.vmem [#allocation15], 2
    %v4396 = vld [vmem:[%s4395] sm:$0x3]
    %v4398 = vlaneseq
    %v4399 = vshrl.u32 %v4398, 7
    %v4400 = vsub.s32 0, %v4399
    %v4401 = vrot.slane %v4396, %v4400
    %v4402 = vlaneseq
    %v4403 = vshrl.u32 %v4402, 7
    %v4404 = vsub.s32 1, %v4403
    %v4405 = vrot.slane %v4396, %v4404
    %v4440 = vunpack.c.l.b16 %v4361
    %v4441 = vunpack.c.h.b16 %v4361
    %v4442 = vunpack.c.l.b16 %v4362
    %v4443 = vunpack.c.h.b16 %v4362
    %v4444 = vunpack.c.l.b16 %v4363
    %v4445 = vunpack.c.h.b16 %v4363
    %v4446 = vunpack.c.l.b16 %v4364
    %v4447 = vunpack.c.h.b16 %v4364
    %v4448 = vunpack.c.l.b16 %v4365
    %v4449 = vunpack.c.h.b16 %v4365
    %v4450 = vunpack.c.l.b16 %v4366
    %v4451 = vunpack.c.h.b16 %v4366
    %v4452 = vunpack.c.l.b16 %v4367
    %v4453 = vunpack.c.h.b16 %v4367
    %v4454 = vunpack.c.l.b16 %v4368
    %v4455 = vunpack.c.h.b16 %v4368
    %v4456 = vunpack.c.l.b16 %v4369
    %v4457 = vunpack.c.h.b16 %v4369
    %v4458 = vunpack.c.l.b16 %v4370
    %v4459 = vunpack.c.h.b16 %v4370
    %v4460 = vunpack.c.l.b16 %v4371
    %v4461 = vunpack.c.h.b16 %v4371
    %v4462 = vunpack.c.l.b16 %v4372
    %v4463 = vunpack.c.h.b16 %v4372
    %v4464 = vunpack.c.l.b16 %v4373
    %v4465 = vunpack.c.h.b16 %v4373
    %v4466 = vunpack.c.l.b16 %v4374
    %v4467 = vunpack.c.h.b16 %v4374
    %v4468 = vunpack.c.l.b16 %v4375
    %v4469 = vunpack.c.h.b16 %v4375
    %v4470 = vunpack.c.l.b16 %v4376
    %v4471 = vunpack.c.h.b16 %v4376
    %v4472 = vunpack.c.l.b16 %v4377
    %v4473 = vunpack.c.h.b16 %v4377
    %v4474 = vunpack.c.l.b16 %v4378
    %v4475 = vunpack.c.h.b16 %v4378
    %v4476 = vunpack.c.l.b16 %v4379
    %v4477 = vunpack.c.h.b16 %v4379
    %v4478 = vunpack.c.l.b16 %v4380
    %v4479 = vunpack.c.h.b16 %v4380
    %v4480 = vunpack.c.l.b16 %v4381
    %v4481 = vunpack.c.h.b16 %v4381
    %v4482 = vunpack.c.l.b16 %v4382
    %v4483 = vunpack.c.h.b16 %v4382
    %v4484 = vunpack.c.l.b16 %v4383
    %v4485 = vunpack.c.h.b16 %v4383
    %v4486 = vunpack.c.l.b16 %v4384
    %v4487 = vunpack.c.h.b16 %v4384
    %v4488 = vunpack.c.l.b16 %v4385
    %v4489 = vunpack.c.h.b16 %v4385
    %v4490 = vunpack.c.l.b16 %v4386
    %v4491 = vunpack.c.h.b16 %v4386
    %v4492 = vunpack.c.l.b16 %v4387
    %v4493 = vunpack.c.h.b16 %v4387
    %v4494 = vunpack.c.l.b16 %v4388
    %v4495 = vunpack.c.h.b16 %v4388
    %v4496 = vunpack.c.l.b16 %v4389
    %v4497 = vunpack.c.h.b16 %v4389
    %v4498 = vunpack.c.l.b16 %v4390
    %v4499 = vunpack.c.h.b16 %v4390
    %v4500 = vunpack.c.l.b16 %v4391
    %v4501 = vunpack.c.h.b16 %v4391
    %v4502 = vunpack.c.l.b16 %v4392
    %v4503 = vunpack.c.h.b16 %v4392
    %v4504 = vpack.c.b16 %v4442, %v4440
    %v4505 = vpack.c.b16 %v4443, %v4441
    %v4506 = vpack.c.b16 %v4446, %v4444
    %v4507 = vpack.c.b16 %v4447, %v4445
    %v4508 = vpack.c.b16 %v4450, %v4448
    %v4509 = vpack.c.b16 %v4451, %v4449
    %v4510 = vpack.c.b16 %v4454, %v4452
    %v4511 = vpack.c.b16 %v4455, %v4453
    %v4512 = vpack.c.b16 %v4458, %v4456
    %v4513 = vpack.c.b16 %v4459, %v4457
    %v4514 = vpack.c.b16 %v4462, %v4460
    %v4515 = vpack.c.b16 %v4463, %v4461
    %v4516 = vpack.c.b16 %v4466, %v4464
    %v4517 = vpack.c.b16 %v4467, %v4465
    %v4518 = vpack.c.b16 %v4470, %v4468
    %v4519 = vpack.c.b16 %v4471, %v4469
    %v4520 = vpack.c.b16 %v4474, %v4472
    %v4521 = vpack.c.b16 %v4475, %v4473
    %v4522 = vpack.c.b16 %v4478, %v4476
    %v4523 = vpack.c.b16 %v4479, %v4477
    %v4524 = vpack.c.b16 %v4482, %v4480
    %v4525 = vpack.c.b16 %v4483, %v4481
    %v4526 = vpack.c.b16 %v4486, %v4484
    %v4527 = vpack.c.b16 %v4487, %v4485
    %v4528 = vpack.c.b16 %v4490, %v4488
    %v4529 = vpack.c.b16 %v4491, %v4489
    %v4530 = vpack.c.b16 %v4494, %v4492
    %v4531 = vpack.c.b16 %v4495, %v4493
    %v4532 = vpack.c.b16 %v4498, %v4496
    %v4533 = vpack.c.b16 %v4499, %v4497
    %v4534 = vpack.c.b16 %v4502, %v4500
    %v4535 = vpack.c.b16 %v4503, %v4501
    %4568 = vmatprep.subr.bf16.mxu0 %v4519
    %4569 = vmatpush1.bf16.msra.mxu0 %v4518
    %4570 = vmatprep.subr.bf16.mxu0 %v4517
    %4571 = vmatpush1.bf16.msra.mxu0 %v4516
    %4572 = vmatprep.subr.bf16.mxu0 %v4515
    %4573 = vmatpush1.bf16.msra.mxu0 %v4514
    %4574 = vmatprep.subr.bf16.mxu0 %v4513
    %4575 = vmatpush1.bf16.msra.mxu0 %v4512
    %4576 = vmatprep.subr.bf16.mxu0 %v4511
    %4577 = vmatpush1.bf16.msra.mxu0 %v4510
    %4578 = vmatprep.subr.bf16.mxu0 %v4509
    %4579 = vmatpush1.bf16.msra.mxu0 %v4508
    %4580 = vmatprep.subr.bf16.mxu0 %v4507
    %4581 = vmatpush1.bf16.msra.mxu0 %v4506
    %4582 = vmatprep.subr.bf16.mxu0 %v4505
    %4583 = vmatpush1.bf16.msra.mxu0 %v4504
    %4584 = vmatprep.subr.bf16.mxu0 %v4535
    %4585 = vmatpush2.bf16.msra.mxu0 %v4534
    %4586 = vmatprep.subr.bf16.mxu0 %v4533
    %4587 = vmatpush2.bf16.msra.mxu0 %v4532
    %4588 = vmatprep.subr.bf16.mxu0 %v4531
    %4589 = vmatpush2.bf16.msra.mxu0 %v4530
    %4590 = vmatprep.subr.bf16.mxu0 %v4529
    %4591 = vmatpush2.bf16.msra.mxu0 %v4528
    %4592 = vmatprep.subr.bf16.mxu0 %v4527
    %4593 = vmatpush2.bf16.msra.mxu0 %v4526
    %4594 = vmatprep.subr.bf16.mxu0 %v4525
    %4595 = vmatpush2.bf16.msra.mxu0 %v4524
    %4596 = vmatprep.subr.bf16.mxu0 %v4523
    %4597 = vmatpush2.bf16.msra.mxu0 %v4522
    %4598 = vmatprep.subr.bf16.mxu0 %v4521
    %4599 = vmatpush2.bf16.msra.mxu0 %v4520
    %4600 = vmatprep.mubr.bf16.mxu0 %v4394
    %4601 = vmatmul.mubr.bf16.gmra.mxu0 %v4393
    %v4602 = vpop.f32.mrf.mxu0
    %v4603 = vadd.f32 %v4401, %v4602
    %v4604 = vpop.f32.mrf.mxu0
    %v4605 = vadd.f32 %v4405, %v4604
    %v4606 = vpop.f32.mrf.mxu0
    %v4607 = vpop.f32.mrf.mxu0
    %4608 = vdwg.mxu0
    %v4609 = vadd.f32 %v3173, %v4603
    %v4610 = vadd.f32 %v3174, %v4605
    %s4611 = scalar_lea.vmem [#allocation16], 2
    %v4612 = vld [vmem:[%s4611] sm:$0x3]
    %s4613 = scalar_lea.vmem [#allocation18], 2
    %v4614 = vld [vmem:[%s4613] sm:$0x3]
    %v4615 = vadd.f32 %v4609, %v4610
    %4616 = vadd.xlane.f32.xlu0 %v4615
    %v4617 = vpop.xlane.xlu0 %4616
    %v4618 = vmul.f32 %v4617, %v2806
    %v4619 = vsub.f32 %v4609, %v4618
    %v4620 = vsub.f32 %v4610, %v4618
    %v4621 = vmul.f32 %v4619, %v4619
    %v4622 = vmul.f32 %v4620, %v4620
    %v4623 = vadd.f32 %v4621, %v4622
    %4624 = vadd.xlane.f32.xlu0 %v4623
    %v4625 = vpop.xlane.xlu0 %4624
    %v4626 = vmul.f32 %v4625, %v2806
    %v4627 = vadd.f32 %v4626, 1e-05
    %v4628 = vrsqrt.pop %v4627
    %v4629 = vmul.f32 %v4619, %v4628
    %v4630 = vmul.f32 %v4620, %v4628
    %v4632 = vlaneseq
    %v4633 = vshrl.u32 %v4632, 7
    %v4634 = vsub.s32 0, %v4633
    %v4635 = vrot.slane %v4612, %v4634
    %v4636 = vlaneseq
    %v4637 = vshrl.u32 %v4636, 7
    %v4638 = vsub.s32 1, %v4637
    %v4639 = vrot.slane %v4612, %v4638
    %v4642 = vmul.f32 %v4629, %v4635
    %v4643 = vmul.f32 %v4630, %v4639
    %v4645 = vlaneseq
    %v4646 = vshrl.u32 %v4645, 7
    %v4647 = vsub.s32 0, %v4646
    %v4648 = vrot.slane %v4614, %v4647
    %v4649 = vlaneseq
    %v4650 = vshrl.u32 %v4649, 7
    %v4651 = vsub.s32 1, %v4650
    %v4652 = vrot.slane %v4614, %v4651
    %v4655 = vadd.f32 %v4642, %v4648
    %v4656 = vadd.f32 %v4643, %v4652
    %s4657 = scalar_lea.vmem %s35, 128
    %v4658 = vld [vmem:[%s4657] sm:$0xf]
    %v4659 = vld [vmem:[%s4657 + $0x4] sm:$0xf]
    %v4660 = vld [vmem:[%s4657 + $0x8] sm:$0xf]
    %v4661 = vld [vmem:[%s4657 + $0xc] sm:$0xf]
    %v4662 = vld [vmem:[%s4657 + $0x10] sm:$0xf]
    %v4663 = vld [vmem:[%s4657 + $0x14] sm:$0xf]
    %v4664 = vld [vmem:[%s4657 + $0x18] sm:$0xf]
    %v4665 = vld [vmem:[%s4657 + $0x1c] sm:$0xf]
    %v4666 = vld [vmem:[%s4657 + $0x20] sm:$0xf]
    %v4667 = vld [vmem:[%s4657 + $0x24] sm:$0xf]
    %v4668 = vld [vmem:[%s4657 + $0x28] sm:$0xf]
    %v4669 = vld [vmem:[%s4657 + $0x2c] sm:$0xf]
    %v4670 = vld [vmem:[%s4657 + $0x30] sm:$0xf]
    %v4671 = vld [vmem:[%s4657 + $0x34] sm:$0xf]
    %v4672 = vld [vmem:[%s4657 + $0x38] sm:$0xf]
    %v4673 = vld [vmem:[%s4657 + $0x3c] sm:$0xf]
    %v4674 = vld [vmem:[%s4657 + $0x40] sm:$0xf]
    %v4675 = vld [vmem:[%s4657 + $0x44] sm:$0xf]
    %v4676 = vld [vmem:[%s4657 + $0x48] sm:$0xf]
    %v4677 = vld [vmem:[%s4657 + $0x4c] sm:$0xf]
    %v4678 = vld [vmem:[%s4657 + $0x50] sm:$0xf]
    %v4679 = vld [vmem:[%s4657 + $0x54] sm:$0xf]
    %v4680 = vld [vmem:[%s4657 + $0x58] sm:$0xf]
    %v4681 = vld [vmem:[%s4657 + $0x5c] sm:$0xf]
    %v4682 = vld [vmem:[%s4657 + $0x60] sm:$0xf]
    %v4683 = vld [vmem:[%s4657 + $0x64] sm:$0xf]
    %v4684 = vld [vmem:[%s4657 + $0x68] sm:$0xf]
    %v4685 = vld [vmem:[%s4657 + $0x6c] sm:$0xf]
    %v4686 = vld [vmem:[%s4657 + $0x70] sm:$0xf]
    %v4687 = vld [vmem:[%s4657 + $0x74] sm:$0xf]
    %v4688 = vld [vmem:[%s4657 + $0x78] sm:$0xf]
    %v4689 = vld [vmem:[%s4657 + $0x7c] sm:$0xf]
    %v4690 = vpack.c.bf16 %v4655, %v4655
    %v4691 = vpack.c.bf16 %v4656, %v4656
    %s4692 = scalar_lea.vmem [#allocation19], 1
    %v4693 = vld [vmem:[%s4692] sm:$0x1]
    %v4695 = vlaneseq
    %v4696 = vshrl.u32 %v4695, 7
    %v4697 = vsub.s32 0, %v4696
    %v4698 = vrot.slane %v4693, %v4697
    %v4732 = vunpack.c.l.b16 %v4658
    %v4733 = vunpack.c.l.b16 %v4659
    %v4734 = vunpack.c.l.b16 %v4660
    %v4735 = vunpack.c.l.b16 %v4661
    %v4736 = vunpack.c.l.b16 %v4662
    %v4737 = vunpack.c.l.b16 %v4663
    %v4738 = vunpack.c.l.b16 %v4664
    %v4739 = vunpack.c.l.b16 %v4665
    %v4740 = vunpack.c.l.b16 %v4666
    %v4741 = vunpack.c.l.b16 %v4667
    %v4742 = vunpack.c.l.b16 %v4668
    %v4743 = vunpack.c.l.b16 %v4669
    %v4744 = vunpack.c.l.b16 %v4670
    %v4745 = vunpack.c.l.b16 %v4671
    %v4746 = vunpack.c.l.b16 %v4672
    %v4747 = vunpack.c.l.b16 %v4673
    %v4748 = vunpack.c.l.b16 %v4674
    %v4749 = vunpack.c.l.b16 %v4675
    %v4750 = vunpack.c.l.b16 %v4676
    %v4751 = vunpack.c.l.b16 %v4677
    %v4752 = vunpack.c.l.b16 %v4678
    %v4753 = vunpack.c.l.b16 %v4679
    %v4754 = vunpack.c.l.b16 %v4680
    %v4755 = vunpack.c.l.b16 %v4681
    %v4756 = vunpack.c.l.b16 %v4682
    %v4757 = vunpack.c.l.b16 %v4683
    %v4758 = vunpack.c.l.b16 %v4684
    %v4759 = vunpack.c.l.b16 %v4685
    %v4760 = vunpack.c.l.b16 %v4686
    %v4761 = vunpack.c.l.b16 %v4687
    %v4762 = vunpack.c.l.b16 %v4688
    %v4763 = vunpack.c.l.b16 %v4689
    %v4764 = vpack.c.b16 %v4733, %v4732
    %v4765 = vpack.c.b16 %v4735, %v4734
    %v4766 = vpack.c.b16 %v4737, %v4736
    %v4767 = vpack.c.b16 %v4739, %v4738
    %v4768 = vpack.c.b16 %v4741, %v4740
    %v4769 = vpack.c.b16 %v4743, %v4742
    %v4770 = vpack.c.b16 %v4745, %v4744
    %v4771 = vpack.c.b16 %v4747, %v4746
    %v4772 = vpack.c.b16 %v4749, %v4748
    %v4773 = vpack.c.b16 %v4751, %v4750
    %v4774 = vpack.c.b16 %v4753, %v4752
    %v4775 = vpack.c.b16 %v4755, %v4754
    %v4776 = vpack.c.b16 %v4757, %v4756
    %v4777 = vpack.c.b16 %v4759, %v4758
    %v4778 = vpack.c.b16 %v4761, %v4760
    %v4779 = vpack.c.b16 %v4763, %v4762
    %4796 = vmatprep.subr.bf16.mxu0 0
    %4797 = vmatpush1.bf16.msra.mxu0 %v4771
    %4798 = vmatprep.subr.bf16.mxu0 0
    %4799 = vmatpush1.bf16.msra.mxu0 %v4770
    %4800 = vmatprep.subr.bf16.mxu0 0
    %4801 = vmatpush1.bf16.msra.mxu0 %v4769
    %4802 = vmatprep.subr.bf16.mxu0 0
    %4803 = vmatpush1.bf16.msra.mxu0 %v4768
    %4804 = vmatprep.subr.bf16.mxu0 0
    %4805 = vmatpush1.bf16.msra.mxu0 %v4767
    %4806 = vmatprep.subr.bf16.mxu0 0
    %4807 = vmatpush1.bf16.msra.mxu0 %v4766
    %4808 = vmatprep.subr.bf16.mxu0 0
    %4809 = vmatpush1.bf16.msra.mxu0 %v4765
    %4810 = vmatprep.subr.bf16.mxu0 0
    %4811 = vmatpush1.bf16.msra.mxu0 %v4764
    %4812 = vmatprep.subr.bf16.mxu0 0
    %4813 = vmatpush2.bf16.msra.mxu0 %v4779
    %4814 = vmatprep.subr.bf16.mxu0 0
    %4815 = vmatpush2.bf16.msra.mxu0 %v4778
    %4816 = vmatprep.subr.bf16.mxu0 0
    %4817 = vmatpush2.bf16.msra.mxu0 %v4777
    %4818 = vmatprep.subr.bf16.mxu0 0
    %4819 = vmatpush2.bf16.msra.mxu0 %v4776
    %4820 = vmatprep.subr.bf16.mxu0 0
    %4821 = vmatpush2.bf16.msra.mxu0 %v4775
    %4822 = vmatprep.subr.bf16.mxu0 0
    %4823 = vmatpush2.bf16.msra.mxu0 %v4774
    %4824 = vmatprep.subr.bf16.mxu0 0
    %4825 = vmatpush2.bf16.msra.mxu0 %v4773
    %4826 = vmatprep.subr.bf16.mxu0 0
    %4827 = vmatpush2.bf16.msra.mxu0 %v4772
    %4828 = vmatprep.mubr.bf16.mxu0 %v4691
    %4829 = vmatmul.mubr.bf16.gmra.mxu0 %v4690
    %v4830 = vpop.f32.mrf.mxu0
    %v4831 = vadd.f32 %v4698, %v4830
    %v4832 = vpop.f32.mrf.mxu0
    %v4833 = vpop.f32.mrf.mxu0
    %v4834 = vpop.f32.mrf.mxu0
    %4835 = vdwg.mxu0
    %v4836 = vmax.f32 %v4831, 0.0
    %s4837 = scalar_lea.vmem %s39, 64
    %v4838 = vld [vmem:[%s4837] sm:$0xff]
    %v4839 = vld [vmem:[%s4837 + $0x8] sm:$0xff]
    %v4840 = vld [vmem:[%s4837 + $0x10] sm:$0xff]
    %v4841 = vld [vmem:[%s4837 + $0x18] sm:$0xff]
    %v4842 = vld [vmem:[%s4837 + $0x20] sm:$0xff]
    %v4843 = vld [vmem:[%s4837 + $0x28] sm:$0xff]
    %v4844 = vld [vmem:[%s4837 + $0x30] sm:$0xff]
    %v4845 = vld [vmem:[%s4837 + $0x38] sm:$0xff]
    %v4846 = vpack.c.bf16 %v4836, %v4836
    %s4847 = scalar_lea.vmem [#allocation21], 2
    %v4848 = vld [vmem:[%s4847] sm:$0x3]
    %v4850 = vlaneseq
    %v4851 = vshrl.u32 %v4850, 7
    %v4852 = vsub.s32 0, %v4851
    %v4853 = vrot.slane %v4848, %v4852
    %v4854 = vlaneseq
    %v4855 = vshrl.u32 %v4854, 7
    %v4856 = vsub.s32 1, %v4855
    %v4857 = vrot.slane %v4848, %v4856
    %v4868 = vunpack.c.l.b16 %v4838
    %v4869 = vunpack.c.h.b16 %v4838
    %v4870 = vunpack.c.l.b16 %v4839
    %v4871 = vunpack.c.h.b16 %v4839
    %v4872 = vunpack.c.l.b16 %v4840
    %v4873 = vunpack.c.h.b16 %v4840
    %v4874 = vunpack.c.l.b16 %v4841
    %v4875 = vunpack.c.h.b16 %v4841
    %v4876 = vunpack.c.l.b16 %v4842
    %v4877 = vunpack.c.h.b16 %v4842
    %v4878 = vunpack.c.l.b16 %v4843
    %v4879 = vunpack.c.h.b16 %v4843
    %v4880 = vunpack.c.l.b16 %v4844
    %v4881 = vunpack.c.h.b16 %v4844
    %v4882 = vunpack.c.l.b16 %v4845
    %v4883 = vunpack.c.h.b16 %v4845
    %v4884 = vpack.c.b16 %v4870, %v4868
    %v4885 = vpack.c.b16 %v4871, %v4869
    %v4886 = vpack.c.b16 %v4874, %v4872
    %v4887 = vpack.c.b16 %v4875, %v4873
    %v4888 = vpack.c.b16 %v4878, %v4876
    %v4889 = vpack.c.b16 %v4879, %v4877
    %v4890 = vpack.c.b16 %v4882, %v4880
    %v4891 = vpack.c.b16 %v4883, %v4881
    %v4901 = vsel %vm2102, %v4846, 0
    %4903 = vmatprep.subr.bf16.mxu0 0
    %4904 = vmatpush1.bf16.msra.mxu0 0
    %4905 = vmatprep.subr.bf16.mxu0 0
    %4906 = vmatpush1.bf16.msra.mxu0 0
    %4907 = vmatprep.subr.bf16.mxu0 0
    %4908 = vmatpush1.bf16.msra.mxu0 0
    %4909 = vmatprep.subr.bf16.mxu0 0
    %4910 = vmatpush1.bf16.msra.mxu0 0
    %4911 = vmatprep.subr.bf16.mxu0 %v4891
    %4912 = vmatpush1.bf16.msra.mxu0 %v4890
    %4913 = vmatprep.subr.bf16.mxu0 %v4889
    %4914 = vmatpush1.bf16.msra.mxu0 %v4888
    %4915 = vmatprep.subr.bf16.mxu0 %v4887
    %4916 = vmatpush1.bf16.msra.mxu0 %v4886
    %4917 = vmatprep.subr.bf16.mxu0 %v4885
    %4918 = vmatpush1.bf16.msra.mxu0 %v4884
    %4919 = vmatprep.subr.bf16.mxu0 0
    %4920 = vmatpush2.bf16.msra.mxu0 0
    %4921 = vmatprep.subr.bf16.mxu0 0
    %4922 = vmatpush2.bf16.msra.mxu0 0
    %4923 = vmatprep.subr.bf16.mxu0 0
    %4924 = vmatpush2.bf16.msra.mxu0 0
    %4925 = vmatprep.subr.bf16.mxu0 0
    %4926 = vmatpush2.bf16.msra.mxu0 0
    %4927 = vmatprep.subr.bf16.mxu0 0
    %4928 = vmatpush2.bf16.msra.mxu0 0
    %4929 = vmatprep.subr.bf16.mxu0 0
    %4930 = vmatpush2.bf16.msra.mxu0 0
    %4931 = vmatprep.subr.bf16.mxu0 0
    %4932 = vmatpush2.bf16.msra.mxu0 0
    %4933 = vmatprep.subr.bf16.mxu0 0
    %4934 = vmatpush2.bf16.msra.mxu0 0
    %4935 = vmatprep.mubr.bf16.mxu0 0
    %4936 = vmatmul.mubr.bf16.gmra.mxu0 %v4901
    %v4937 = vpop.f32.mrf.mxu0
    %v4938 = vadd.f32 %v4853, %v4937
    %v4939 = vpop.f32.mrf.mxu0
    %v4940 = vadd.f32 %v4857, %v4939
    %v4941 = vpop.f32.mrf.mxu0
    %v4942 = vpop.f32.mrf.mxu0
    %4943 = vdwg.mxu0
    %v4944 = vadd.f32 %v4655, %v4938
    %v4945 = vadd.f32 %v4656, %v4940
    %s4946 = scalar_lea.vmem [#allocation22], 2
    %v4947 = vld [vmem:[%s4946] sm:$0x3]
    %s4948 = scalar_lea.vmem [#allocation24], 2
    %v4949 = vld [vmem:[%s4948] sm:$0x3]
    %v4950 = vadd.f32 %v4944, %v4945
    %4951 = vadd.xlane.f32.xlu0 %v4950
    %v4952 = vpop.xlane.xlu0 %4951
    %v4953 = vmul.f32 %v4952, %v2806
    %v4954 = vsub.f32 %v4944, %v4953
    %v4955 = vsub.f32 %v4945, %v4953
    %v4956 = vmul.f32 %v4954, %v4954
    %v4957 = vmul.f32 %v4955, %v4955
    %v4958 = vadd.f32 %v4956, %v4957
    %4959 = vadd.xlane.f32.xlu0 %v4958
    %v4960 = vpop.xlane.xlu0 %4959
    %v4961 = vmul.f32 %v4960, %v2806
    %v4962 = vadd.f32 %v4961, 1e-05
    %v4963 = vrsqrt.pop %v4962
    %v4964 = vmul.f32 %v4954, %v4963
    %v4965 = vmul.f32 %v4955, %v4963
    %v4967 = vlaneseq
    %v4968 = vshrl.u32 %v4967, 7
    %v4969 = vsub.s32 0, %v4968
    %v4970 = vrot.slane %v4947, %v4969
    %v4971 = vlaneseq
    %v4972 = vshrl.u32 %v4971, 7
    %v4973 = vsub.s32 1, %v4972
    %v4974 = vrot.slane %v4947, %v4973
    %v4977 = vmul.f32 %v4964, %v4970
    %v4978 = vmul.f32 %v4965, %v4974
    %v4980 = vlaneseq
    %v4981 = vshrl.u32 %v4980, 7
    %v4982 = vsub.s32 0, %v4981
    %v4983 = vrot.slane %v4949, %v4982
    %v4984 = vlaneseq
    %v4985 = vshrl.u32 %v4984, 7
    %v4986 = vsub.s32 1, %v4985
    %v4987 = vrot.slane %v4949, %v4986
    %v4990 = vadd.f32 %v4977, %v4983
    %v4991 = vadd.f32 %v4978, %v4987
    %v4992 = vld [vmem:[#allocation25] sm:$0xf]
    %v4993 = vld [vmem:[#allocation25 + $0x4] sm:$0xf]
    %v4994 = vld [vmem:[#allocation25 + $0x8] sm:$0xf]
    %v4995 = vld [vmem:[#allocation25 + $0xc] sm:$0xf]
    %v4996 = vld [vmem:[#allocation25 + $0x10] sm:$0xf]
    %v4997 = vld [vmem:[#allocation25 + $0x14] sm:$0xf]
    %v4998 = vld [vmem:[#allocation25 + $0x18] sm:$0xf]
    %v4999 = vld [vmem:[#allocation25 + $0x1c] sm:$0xf]
    %v5000 = vld [vmem:[#allocation25 + $0x20] sm:$0xf]
    %v5001 = vld [vmem:[#allocation25 + $0x24] sm:$0xf]
    %v5002 = vld [vmem:[#allocation25 + $0x28] sm:$0xf]
    %v5003 = vld [vmem:[#allocation25 + $0x2c] sm:$0xf]
    %v5004 = vld [vmem:[#allocation25 + $0x30] sm:$0xf]
    %v5005 = vld [vmem:[#allocation25 + $0x34] sm:$0xf]
    %v5006 = vld [vmem:[#allocation25 + $0x38] sm:$0xf]
    %v5007 = vld [vmem:[#allocation25 + $0x3c] sm:$0xf]
    %v5008 = vld [vmem:[#allocation25 + $0x40] sm:$0xf]
    %v5009 = vld [vmem:[#allocation25 + $0x44] sm:$0xf]
    %v5010 = vld [vmem:[#allocation25 + $0x48] sm:$0xf]
    %v5011 = vld [vmem:[#allocation25 + $0x4c] sm:$0xf]
    %v5012 = vld [vmem:[#allocation25 + $0x50] sm:$0xf]
    %v5013 = vld [vmem:[#allocation25 + $0x54] sm:$0xf]
    %v5014 = vld [vmem:[#allocation25 + $0x58] sm:$0xf]
    %v5015 = vld [vmem:[#allocation25 + $0x5c] sm:$0xf]
    %v5016 = vld [vmem:[#allocation25 + $0x60] sm:$0xf]
    %v5017 = vld [vmem:[#allocation25 + $0x64] sm:$0xf]
    %v5018 = vld [vmem:[#allocation25 + $0x68] sm:$0xf]
    %v5019 = vld [vmem:[#allocation25 + $0x6c] sm:$0xf]
    %v5020 = vld [vmem:[#allocation25 + $0x70] sm:$0xf]
    %v5021 = vld [vmem:[#allocation25 + $0x74] sm:$0xf]
    %v5022 = vld [vmem:[#allocation25 + $0x78] sm:$0xf]
    %v5023 = vld [vmem:[#allocation25 + $0x7c] sm:$0xf]
    %v5024 = vld [vmem:[#allocation27] sm:$0x1]
    %v5025 = vpack.c.bf16 %v4990, %v4990
    %v5026 = vpack.c.bf16 %v4991, %v4991
    %v5028 = vlaneseq
    %v5029 = vshrl.u32 %v5028, 7
    %v5030 = vsub.s32 0, %v5029
    %v5031 = vrot.slane %v5024, %v5030
    %v5065 = vunpack.c.l.b16 %v4992
    %v5066 = vunpack.c.l.b16 %v4993
    %v5067 = vunpack.c.l.b16 %v4994
    %v5068 = vunpack.c.l.b16 %v4995
    %v5069 = vunpack.c.l.b16 %v4996
    %v5070 = vunpack.c.l.b16 %v4997
    %v5071 = vunpack.c.l.b16 %v4998
    %v5072 = vunpack.c.l.b16 %v4999
    %v5073 = vunpack.c.l.b16 %v5000
    %v5074 = vunpack.c.l.b16 %v5001
    %v5075 = vunpack.c.l.b16 %v5002
    %v5076 = vunpack.c.l.b16 %v5003
    %v5077 = vunpack.c.l.b16 %v5004
    %v5078 = vunpack.c.l.b16 %v5005
    %v5079 = vunpack.c.l.b16 %v5006
    %v5080 = vunpack.c.l.b16 %v5007
    %v5081 = vunpack.c.l.b16 %v5008
    %v5082 = vunpack.c.l.b16 %v5009
    %v5083 = vunpack.c.l.b16 %v5010
    %v5084 = vunpack.c.l.b16 %v5011
    %v5085 = vunpack.c.l.b16 %v5012
    %v5086 = vunpack.c.l.b16 %v5013
    %v5087 = vunpack.c.l.b16 %v5014
    %v5088 = vunpack.c.l.b16 %v5015
    %v5089 = vunpack.c.l.b16 %v5016
    %v5090 = vunpack.c.l.b16 %v5017
    %v5091 = vunpack.c.l.b16 %v5018
    %v5092 = vunpack.c.l.b16 %v5019
    %v5093 = vunpack.c.l.b16 %v5020
    %v5094 = vunpack.c.l.b16 %v5021
    %v5095 = vunpack.c.l.b16 %v5022
    %v5096 = vunpack.c.l.b16 %v5023
    %v5097 = vpack.c.b16 %v5066, %v5065
    %v5098 = vpack.c.b16 %v5068, %v5067
    %v5099 = vpack.c.b16 %v5070, %v5069
    %v5100 = vpack.c.b16 %v5072, %v5071
    %v5101 = vpack.c.b16 %v5074, %v5073
    %v5102 = vpack.c.b16 %v5076, %v5075
    %v5103 = vpack.c.b16 %v5078, %v5077
    %v5104 = vpack.c.b16 %v5080, %v5079
    %v5105 = vpack.c.b16 %v5082, %v5081
    %v5106 = vpack.c.b16 %v5084, %v5083
    %v5107 = vpack.c.b16 %v5086, %v5085
    %v5108 = vpack.c.b16 %v5088, %v5087
    %v5109 = vpack.c.b16 %v5090, %v5089
    %v5110 = vpack.c.b16 %v5092, %v5091
    %v5111 = vpack.c.b16 %v5094, %v5093
    %v5112 = vpack.c.b16 %v5096, %v5095
    %5129 = vmatprep.subr.bf16.mxu0 0
    %5130 = vmatpush1.bf16.msra.mxu0 %v5104
    %5131 = vmatprep.subr.bf16.mxu0 0
    %5132 = vmatpush1.bf16.msra.mxu0 %v5103
    %5133 = vmatprep.subr.bf16.mxu0 0
    %5134 = vmatpush1.bf16.msra.mxu0 %v5102
    %5135 = vmatprep.subr.bf16.mxu0 0
    %5136 = vmatpush1.bf16.msra.mxu0 %v5101
    %5137 = vmatprep.subr.bf16.mxu0 0
    %5138 = vmatpush1.bf16.msra.mxu0 %v5100
    %5139 = vmatprep.subr.bf16.mxu0 0
    %5140 = vmatpush1.bf16.msra.mxu0 %v5099
    %5141 = vmatprep.subr.bf16.mxu0 0
    %5142 = vmatpush1.bf16.msra.mxu0 %v5098
    %5143 = vmatprep.subr.bf16.mxu0 0
    %5144 = vmatpush1.bf16.msra.mxu0 %v5097
    %5145 = vmatprep.subr.bf16.mxu0 0
    %5146 = vmatpush2.bf16.msra.mxu0 %v5112
    %5147 = vmatprep.subr.bf16.mxu0 0
    %5148 = vmatpush2.bf16.msra.mxu0 %v5111
    %5149 = vmatprep.subr.bf16.mxu0 0
    %5150 = vmatpush2.bf16.msra.mxu0 %v5110
    %5151 = vmatprep.subr.bf16.mxu0 0
    %5152 = vmatpush2.bf16.msra.mxu0 %v5109
    %5153 = vmatprep.subr.bf16.mxu0 0
    %5154 = vmatpush2.bf16.msra.mxu0 %v5108
    %5155 = vmatprep.subr.bf16.mxu0 0
    %5156 = vmatpush2.bf16.msra.mxu0 %v5107
    %5157 = vmatprep.subr.bf16.mxu0 0
    %5158 = vmatpush2.bf16.msra.mxu0 %v5106
    %5159 = vmatprep.subr.bf16.mxu0 0
    %5160 = vmatpush2.bf16.msra.mxu0 %v5105
    %5161 = vmatprep.mubr.bf16.mxu0 %v5026
    %5162 = vmatmul.mubr.bf16.gmra.mxu0 %v5025
    %v5163 = vpop.f32.mrf.mxu0
    %v5164 = vadd.f32 %v5031, %v5163
    %v5165 = vpop.f32.mrf.mxu0
    %v5166 = vpop.f32.mrf.mxu0
    %v5167 = vpop.f32.mrf.mxu0
    %5168 = vdwg.mxu0
    %v5169 = vmul.f32 %v5164, %v777
    %v5170 = vadd.f32 %v5169, %v707
    %v5171 = vld [vmem:[%s51] sm:$0xf]
    %v5172 = vld [vmem:[%s51 + $0x4] sm:$0xf]
    %v5173 = vld [vmem:[%s51 + $0x8] sm:$0xf]
    %v5174 = vld [vmem:[%s51 + $0xc] sm:$0xf]
    %v5175 = vld [vmem:[%s51 + $0x10] sm:$0xf]
    %v5176 = vld [vmem:[%s51 + $0x14] sm:$0xf]
    %v5177 = vld [vmem:[%s51 + $0x18] sm:$0xf]
    %v5178 = vld [vmem:[%s51 + $0x1c] sm:$0xf]
    %v5179 = vld [vmem:[%s51 + $0x20] sm:$0xf]
    %v5180 = vld [vmem:[%s51 + $0x24] sm:$0xf]
    %v5181 = vld [vmem:[%s51 + $0x28] sm:$0xf]
    %v5182 = vld [vmem:[%s51 + $0x2c] sm:$0xf]
    %v5183 = vld [vmem:[%s51 + $0x30] sm:$0xf]
    %v5184 = vld [vmem:[%s51 + $0x34] sm:$0xf]
    %v5185 = vld [vmem:[%s51 + $0x38] sm:$0xf]
    %v5186 = vld [vmem:[%s51 + $0x3c] sm:$0xf]
    %v5187 = vld [vmem:[#allocation28] sm:$0x1]
    %v5188 = vpack.c.bf16 %v5170, %v5170
    %v5190 = vlaneseq
    %v5191 = vshrl.u32 %v5190, 7
    %v5192 = vsub.s32 0, %v5191
    %v5193 = vrot.slane %v5187, %v5192
    %v5211 = vunpack.c.l.b16 %v5171
    %v5212 = vunpack.c.l.b16 %v5172
    %v5213 = vunpack.c.l.b16 %v5173
    %v5214 = vunpack.c.l.b16 %v5174
    %v5215 = vunpack.c.l.b16 %v5175
    %v5216 = vunpack.c.l.b16 %v5176
    %v5217 = vunpack.c.l.b16 %v5177
    %v5218 = vunpack.c.l.b16 %v5178
    %v5219 = vunpack.c.l.b16 %v5179
    %v5220 = vunpack.c.l.b16 %v5180
    %v5221 = vunpack.c.l.b16 %v5181
    %v5222 = vunpack.c.l.b16 %v5182
    %v5223 = vunpack.c.l.b16 %v5183
    %v5224 = vunpack.c.l.b16 %v5184
    %v5225 = vunpack.c.l.b16 %v5185
    %v5226 = vunpack.c.l.b16 %v5186
    %v5227 = vpack.c.b16 %v5212, %v5211
    %v5228 = vpack.c.b16 %v5214, %v5213
    %v5229 = vpack.c.b16 %v5216, %v5215
    %v5230 = vpack.c.b16 %v5218, %v5217
    %v5231 = vpack.c.b16 %v5220, %v5219
    %v5232 = vpack.c.b16 %v5222, %v5221
    %v5233 = vpack.c.b16 %v5224, %v5223
    %v5234 = vpack.c.b16 %v5226, %v5225
    %5243 = vmatprep.subr.bf16.mxu0 0
    %5244 = vmatpush1.bf16.msra.mxu0 %v5234
    %5245 = vmatprep.subr.bf16.mxu0 0
    %5246 = vmatpush1.bf16.msra.mxu0 %v5233
    %5247 = vmatprep.subr.bf16.mxu0 0
    %5248 = vmatpush1.bf16.msra.mxu0 %v5232
    %5249 = vmatprep.subr.bf16.mxu0 0
    %5250 = vmatpush1.bf16.msra.mxu0 %v5231
    %5251 = vmatprep.subr.bf16.mxu0 0
    %5252 = vmatpush1.bf16.msra.mxu0 %v5230
    %5253 = vmatprep.subr.bf16.mxu0 0
    %5254 = vmatpush1.bf16.msra.mxu0 %v5229
    %5255 = vmatprep.subr.bf16.mxu0 0
    %5256 = vmatpush1.bf16.msra.mxu0 %v5228
    %5257 = vmatprep.subr.bf16.mxu0 0
    %5258 = vmatpush1.bf16.msra.mxu0 %v5227
    %5259 = vmatprep.subr.bf16.mxu0 0
    %5260 = vmatpush2.bf16.msra.mxu0 0
    %5261 = vmatprep.subr.bf16.mxu0 0
    %5262 = vmatpush2.bf16.msra.mxu0 0
    %5263 = vmatprep.subr.bf16.mxu0 0
    %5264 = vmatpush2.bf16.msra.mxu0 0
    %5265 = vmatprep.subr.bf16.mxu0 0
    %5266 = vmatpush2.bf16.msra.mxu0 0
    %5267 = vmatprep.subr.bf16.mxu0 0
    %5268 = vmatpush2.bf16.msra.mxu0 0
    %5269 = vmatprep.subr.bf16.mxu0 0
    %5270 = vmatpush2.bf16.msra.mxu0 0
    %5271 = vmatprep.subr.bf16.mxu0 0
    %5272 = vmatpush2.bf16.msra.mxu0 0
    %5273 = vmatprep.subr.bf16.mxu0 0
    %5274 = vmatpush2.bf16.msra.mxu0 0
    %5275 = vmatprep.mubr.bf16.mxu0 0
    %5276 = vmatmul.mubr.bf16.gmra.mxu0 %v5188
    %v5277 = vpop.f32.mrf.mxu0
    %v5278 = vadd.f32 %v5193, %v5277
    %v5279 = vpop.f32.mrf.mxu0
    %v5280 = vpop.f32.mrf.mxu0
    %v5281 = vpop.f32.mrf.mxu0
    %5282 = vdwg.mxu0
    %v5283 = vmul.f32 %v5278, %v779
    %v5284 = vadd.f32 %v5283, %v746
    %v5285 = vld [vmem:[%s55] sm:$0xf]
    %v5286 = vld [vmem:[%s55 + $0x4] sm:$0xf]
    %v5287 = vld [vmem:[%s55 + $0x8] sm:$0xf]
    %v5288 = vld [vmem:[%s55 + $0xc] sm:$0xf]
    %v5289 = vld [vmem:[%s55 + $0x10] sm:$0xf]
    %v5290 = vld [vmem:[%s55 + $0x14] sm:$0xf]
    %v5291 = vld [vmem:[%s55 + $0x18] sm:$0xf]
    %v5292 = vld [vmem:[%s55 + $0x1c] sm:$0xf]
    %v5293 = vld [vmem:[#allocation30] sm:$0x1]
    %v5294 = vpack.c.bf16 %v5284, %v5284
    %v5296 = vlaneseq
    %v5297 = vshrl.u32 %v5296, 7
    %v5298 = vsub.s32 0, %v5297
    %v5299 = vrot.slane %v5293, %v5298
    %v5309 = vunpack.c.l.b16 %v5285
    %v5310 = vunpack.c.l.b16 %v5286
    %v5311 = vunpack.c.l.b16 %v5287
    %v5312 = vunpack.c.l.b16 %v5288
    %v5313 = vunpack.c.l.b16 %v5289
    %v5314 = vunpack.c.l.b16 %v5290
    %v5315 = vunpack.c.l.b16 %v5291
    %v5316 = vunpack.c.l.b16 %v5292
    %v5317 = vpack.c.b16 %v5310, %v5309
    %v5318 = vpack.c.b16 %v5312, %v5311
    %v5319 = vpack.c.b16 %v5314, %v5313
    %v5320 = vpack.c.b16 %v5316, %v5315
    %v5326 = vsel %vm2102, %v5294, 0
    %5328 = vmatprep.subr.bf16.mxu0 0
    %5329 = vmatpush1.bf16.msra.mxu0 0
    %5330 = vmatprep.subr.bf16.mxu0 0
    %5331 = vmatpush1.bf16.msra.mxu0 0
    %5332 = vmatprep.subr.bf16.mxu0 0
    %5333 = vmatpush1.bf16.msra.mxu0 0
    %5334 = vmatprep.subr.bf16.mxu0 0
    %5335 = vmatpush1.bf16.msra.mxu0 0
    %5336 = vmatprep.subr.bf16.mxu0 0
    %5337 = vmatpush1.bf16.msra.mxu0 %v5320
    %5338 = vmatprep.subr.bf16.mxu0 0
    %5339 = vmatpush1.bf16.msra.mxu0 %v5319
    %5340 = vmatprep.subr.bf16.mxu0 0
    %5341 = vmatpush1.bf16.msra.mxu0 %v5318
    %5342 = vmatprep.subr.bf16.mxu0 0
    %5343 = vmatpush1.bf16.msra.mxu0 %v5317
    %5344 = vmatprep.subr.bf16.mxu0 0
    %5345 = vmatpush2.bf16.msra.mxu0 0
    %5346 = vmatprep.subr.bf16.mxu0 0
    %5347 = vmatpush2.bf16.msra.mxu0 0
    %5348 = vmatprep.subr.bf16.mxu0 0
    %5349 = vmatpush2.bf16.msra.mxu0 0
    %5350 = vmatprep.subr.bf16.mxu0 0
    %5351 = vmatpush2.bf16.msra.mxu0 0
    %5352 = vmatprep.subr.bf16.mxu0 0
    %5353 = vmatpush2.bf16.msra.mxu0 0
    %5354 = vmatprep.subr.bf16.mxu0 0
    %5355 = vmatpush2.bf16.msra.mxu0 0
    %5356 = vmatprep.subr.bf16.mxu0 0
    %5357 = vmatpush2.bf16.msra.mxu0 0
    %5358 = vmatprep.subr.bf16.mxu0 0
    %5359 = vmatpush2.bf16.msra.mxu0 0
    %5360 = vmatprep.mubr.bf16.mxu0 0
    %5361 = vmatmul.mubr.bf16.gmra.mxu0 %v5326
    %v5362 = vpop.f32.mrf.mxu0
    %v5363 = vadd.f32 %v5299, %v5362
    %v5364 = vpop.f32.mrf.mxu0
    %v5365 = vpop.f32.mrf.mxu0
    %v5366 = vpop.f32.mrf.mxu0
    %5367 = vdwg.mxu0
    %v5368 = vmul.f32 %v5363, %v781
    %v5369 = vadd.f32 %v5368, %v748
    %5370 = vst.msk [vmem:[%s59] sm:$0xff] %vm808, %v5369
    // Predicated region
    $region194: #{forward.1} parent=1 // pred_check
      _
    $region195: #{forward.1} parent=1 // pred_check_branch
      %5372 = sbr.rel (0) target = $region197
    $region196: #{forward.1} parent=1 // pred_region
      _
    $region197: #{forward.1} parent=1 // pred_fallthru
      _
    // Predicated region
    $region198: #{forward.1} parent=1 // pred_check
      _
    $region199: #{forward.1} parent=1 // pred_check_branch
      %5374 = sbr.rel (0) target = $region201
    $region200: #{forward.1} parent=1 // pred_region
      _
    $region201: #{forward.1} parent=1 // pred_fallthru
      _
    %5375 = vsyncpa [#allocation3], 1
    %5376 = vsyncpa [#allocation5], 1
    %5377 = vsyncpa [#allocation8], 1
    %5378 = vsyncpa [#allocation11], 1
    %5379 = vsyncpa [#allocation14], 1
    %5380 = vsyncpa [#allocation17], 1
    %5381 = vsyncpa [#allocation20], 1
    %5382 = vsyncpa [#allocation23], 1
    %5383 = vsyncpa [#allocation26], 1
    %5384 = vsyncpa [#allocation29], 1

</llo_original>
